<compile_context>
chip_gen: v6e
topology: v6e:2x2x1
jax: 0.10.0
libtpu: 0.0.40
codegen_flags: <defaults>
</compile_context>

<pallas_src>
import math

import jax
import jax.numpy as jnp
from jax.experimental import pallas as pl
from jax.experimental.pallas import tpu as pltpu


# ----------------------------------------------------------------------------
# Model configuration (small stand-ins; width = 128 for lane-dense vregs)
# ----------------------------------------------------------------------------
B = 2            # batch (number of text prompts)
S = 16           # max_length (stands in for 77)
VOCAB = 256
N_TOK = B * S    # 32 rows -> sublane aligned (multiple of 8)

CLIP_D = 128
CLIP_H = 4
CLIP_DH = CLIP_D // CLIP_H
CLIP_MLP = 256
CLIP_LAYERS = 2

T5_D = 128
T5_H = 4
T5_DKV = 32
T5_INNER = T5_H * T5_DKV
T5_FF = 256
T5_LAYERS = 2
T5_REL_BUCKETS = 32
T5_REL_MAXDIST = 128


# ----------------------------------------------------------------------------
# In-kernel helpers
# ----------------------------------------------------------------------------
def _layernorm(x, w, b, eps):
    mu = jnp.mean(x, axis=-1, keepdims=True)
    var = jnp.mean((x - mu) ** 2, axis=-1, keepdims=True)
    return (x - mu) * jax.lax.rsqrt(var + eps) * w + b


def _rmsnorm(x, w, eps):
    var = jnp.mean(x * x, axis=-1, keepdims=True)
    return x * jax.lax.rsqrt(var + eps) * w


def _softmax(s):
    s = s - jnp.max(s, axis=-1, keepdims=True)
    p = jnp.exp(s)
    return p / jnp.sum(p, axis=-1, keepdims=True)   # exact divide (parity)


def _mha(qkv, bias, wo, n_heads, head_dim, batch, seq):
    """Multi-head attention + merged output projection.

    qkv  : (batch*seq, 3*D_inner) bf16  (fused QKV, already biased/scaled)
    bias : (n_heads, seq, seq) or (1, seq, seq) additive bias, f32
    wo   : (D_inner, D) bf16 output projection (no bias)
    ->   : (batch*seq, D) f32
    """
    d_inner = n_heads * head_dim
    q = qkv[:, 0 * d_inner:1 * d_inner].reshape(batch, seq, d_inner)
    k = qkv[:, 1 * d_inner:2 * d_inner].reshape(batch, seq, d_inner)
    v = qkv[:, 2 * d_inner:3 * d_inner].reshape(batch, seq, d_inner)

    ctxs = []
    for h in range(n_heads):
        lo = h * head_dim
        hi = lo + head_dim
        sc = jnp.einsum("bqd,bkd->bqk", q[:, :, lo:hi], k[:, :, lo:hi],
                        preferred_element_type=jnp.float32)
        sc = sc + bias[h % bias.shape[0]][None]          # broadcast over batch
        p = _softmax(sc).astype(jnp.bfloat16)
        ctxs.append(jnp.einsum("bqk,bkd->bqd", p, v[:, :, lo:hi],
                               preferred_element_type=jnp.float32))
    # Merge heads once, then ONE output projection (K = D_inner = 128).
    ctx = jnp.concatenate(ctxs, axis=-1).reshape(batch * seq, d_inner)
    return jnp.dot(ctx.astype(jnp.bfloat16), wo,
                   preferred_element_type=jnp.float32)


# ----------------------------------------------------------------------------
# Fused, layer-streamed encoder kernels (grid = (num_layers,))
# ----------------------------------------------------------------------------
def _clip_encoder_kernel(x_ref,
                         ln1_w_ref, ln1_b_ref, wqkv_ref, bqkv_ref,
                         wo_ref, bo_ref,
                         ln2_w_ref, ln2_b_ref, fc1_ref, b1_ref,
                         fc2_ref, b2_ref,
                         lnf_w_ref, lnf_b_ref,
                         o_ref, x_acc):
    eps = 1e-5
    li = pl.program_id(0)

    @pl.when(li == 0)
    def _():
        x_acc[...] = x_ref[...].astype(jnp.float32)

    x = x_acc[...]                                          # (N_TOK, D) f32

    # Additive causal mask generated in-kernel (zero HBM traffic).
    row = jax.lax.broadcasted_iota(jnp.int32, (S, S), 0)
    col = jax.lax.broadcasted_iota(jnp.int32, (S, S), 1)
    causal = jnp.where(col <= row, 0.0, -1e9).astype(jnp.float32)[None]  # (1,S,S)

    # ---- pre-LN self-attention (1/sqrt(Dh) folded into wq/bq at init) ----
    h = _layernorm(x, ln1_w_ref[0], ln1_b_ref[0], eps)
    qkv = jnp.dot(h.astype(jnp.bfloat16), wqkv_ref[0],
                  preferred_element_type=jnp.float32) + bqkv_ref[0]
    attn = _mha(qkv.astype(jnp.bfloat16), causal, wo_ref[0],
                CLIP_H, CLIP_DH, B, S)
    x = x + attn + bo_ref[0]

    # ---- pre-LN quick-GELU MLP ----
    h = _layernorm(x, ln2_w_ref[0], ln2_b_ref[0], eps)
    h = jnp.dot(h.astype(jnp.bfloat16), fc1_ref[0],
                preferred_element_type=jnp.float32) + b1_ref[0]
    h = h * jax.nn.sigmoid(1.702 * h)                       # quick-GELU
    x = x + jnp.dot(h.astype(jnp.bfloat16), fc2_ref[0],
                    preferred_element_type=jnp.float32) + b2_ref[0]

    x_acc[...] = x

    @pl.when(li == pl.num_programs(0) - 1)
    def _():
        o_ref[...] = _layernorm(x, lnf_w_ref[...], lnf_b_ref[...],
                                eps).astype(o_ref.dtype)


def _t5_encoder_kernel(x_ref, bias_ref,
                       ln1_w_ref, wqkv_ref, wo_ref,
                       ln2_w_ref, wi_ref, wout_ref,
                       lnf_w_ref, o_ref, x_acc):
    eps = 1e-6
    li = pl.program_id(0)

    @pl.when(li == 0)
    def _():
        x_acc[...] = x_ref[...].astype(jnp.float32)

    x = x_acc[...]                                          # (N_TOK, D) f32
    bias = bias_ref[...].astype(jnp.float32)                # (H, S, S)

    # ---- pre-RMSNorm self-attention (unscaled scores + rel-pos bias) ----
    h = _rmsnorm(x, ln1_w_ref[0], eps)
    qkv = jnp.dot(h.astype(jnp.bfloat16), wqkv_ref[0],
                  preferred_element_type=jnp.float32)
    x = x + _mha(qkv.astype(jnp.bfloat16), bias, wo_ref[0],
                 T5_H, T5_DKV, B, S)

    # ---- pre-RMSNorm gated-GELU feed-forward (wi = [wi0 | wi1]) ----
    h = _rmsnorm(x, ln2_w_ref[0], eps)
    hh = jnp.dot(h.astype(jnp.bfloat16), wi_ref[0],
                 preferred_element_type=jnp.float32)
    hg = jax.nn.gelu(hh[:, :T5_FF], approximate=True) * hh[:, T5_FF:]
    x = x + jnp.dot(hg.astype(jnp.bfloat16), wout_ref[0],
                    preferred_element_type=jnp.float32)

    x_acc[...] = x

    @pl.when(li == pl.num_programs(0) - 1)
    def _():
        o_ref[...] = _rmsnorm(x, lnf_w_ref[...], eps).astype(o_ref.dtype)


# ----------------------------------------------------------------------------
# BlockSpec / VMEM-budget helpers
# ----------------------------------------------------------------------------
def _per_layer_spec(arr):
    """Stream one layer's slice per grid step (leading dim = num_layers)."""
    blk = (1,) + arr.shape[1:]
    zeros = (0,) * (arr.ndim - 1)
    return pl.BlockSpec(blk, lambda li: (li,) + zeros,
                        memory_space=pltpu.MemorySpace.VMEM)


def _resident_spec(arr):
    """Same block for all grid steps (VMEM resident across layers)."""
    zeros = (0,) * arr.ndim
    return pl.BlockSpec(arr.shape, lambda li: zeros,
                        memory_space=pltpu.MemorySpace.VMEM)


def _vmem_limit_bytes(per_layer_arrays, resident_arrays, act_bytes):
    stream = sum(a.nbytes // a.shape[0] for a in per_layer_arrays)
    resident = sum(a.nbytes for a in resident_arrays)
    # double-buffered layer-weight stream + (double-buffered) resident blocks
    # + activations/scratch + headroom for in-kernel temporaries.
    return int(2 * stream + 2 * resident + 4 * act_bytes + (16 << 20))


# ----------------------------------------------------------------------------
# Thin wrappers (one pallas_call per encoder, grid over layers)
# ----------------------------------------------------------------------------
_CLIP_PER_LAYER = ("ln1_w", "ln1_b", "wqkv", "bqkv", "wo", "bo",
                   "ln2_w", "ln2_b", "fc1", "b1", "fc2", "b2")
_CLIP_FIXED = ("lnf_w", "lnf_b")

_T5_PER_LAYER = ("ln1_w", "wqkv", "wo", "ln2_w", "wi", "wout")
_T5_FIXED = ("lnf_w",)


def clip_encoder(x, p):
    per_layer = [p[k] for k in _CLIP_PER_LAYER]
    fixed = [p[k] for k in _CLIP_FIXED]
    in_specs = ([_resident_spec(x)]
                + [_per_layer_spec(a) for a in per_layer]
                + [_resident_spec(a) for a in fixed])
    out_spec = pl.BlockSpec((N_TOK, CLIP_D), lambda li: (0, 0),
                            memory_space=pltpu.MemorySpace.VMEM)
    return pl.pallas_call(
        _clip_encoder_kernel,
        grid=(CLIP_LAYERS,),
        in_specs=in_specs,
        out_specs=out_spec,
        out_shape=jax.ShapeDtypeStruct((N_TOK, CLIP_D), jnp.float32),
        scratch_shapes=[pltpu.VMEM((N_TOK, CLIP_D), jnp.float32)],
        compiler_params=pltpu.CompilerParams(
            dimension_semantics=("arbitrary",),
            vmem_limit_bytes=_vmem_limit_bytes(per_layer, [x] + fixed,
                                               x.nbytes)),
    )(x, *per_layer, *fixed)


def t5_encoder(x, p):
    per_layer = [p[k] for k in _T5_PER_LAYER]
    fixed = [p[k] for k in _T5_FIXED]
    pos_bias = p["pos_bias"]
    in_specs = ([_resident_spec(x), _resident_spec(pos_bias)]
                + [_per_layer_spec(a) for a in per_layer]
                + [_resident_spec(a) for a in fixed])
    out_spec = pl.BlockSpec((N_TOK, T5_D), lambda li: (0, 0),
                            memory_space=pltpu.MemorySpace.VMEM)
    return pl.pallas_call(
        _t5_encoder_kernel,
        grid=(T5_LAYERS,),
        in_specs=in_specs,
        out_specs=out_spec,
        out_shape=jax.ShapeDtypeStruct((N_TOK, T5_D), jnp.float32),
        scratch_shapes=[pltpu.VMEM((N_TOK, T5_D), jnp.float32)],
        compiler_params=pltpu.CompilerParams(
            dimension_semantics=("arbitrary",),
            vmem_limit_bytes=_vmem_limit_bytes(per_layer,
                                               [x, pos_bias] + fixed,
                                               x.nbytes)),
    )(x, pos_bias, *per_layer, *fixed)


# ----------------------------------------------------------------------------
# T5 bidirectional relative-position buckets (computed ONCE at init)
# ----------------------------------------------------------------------------
def _t5_relative_bucket(rel_pos, num_buckets=T5_REL_BUCKETS,
                        max_distance=T5_REL_MAXDIST):
    num_buckets = num_buckets // 2                      # bidirectional
    ret = (rel_pos > 0).astype(jnp.int32) * num_buckets
    n = jnp.abs(rel_pos)
    max_exact = num_buckets // 2
    is_small = n < max_exact
    n_clamped = jnp.maximum(n, max_exact).astype(jnp.float32)
    val_if_large = max_exact + (
        jnp.log(n_clamped / max_exact)
        / math.log(max_distance / max_exact)
        * (num_buckets - max_exact)
    ).astype(jnp.int32)
    val_if_large = jnp.minimum(val_if_large, num_buckets - 1)
    return ret + jnp.where(is_small, n, val_if_large)


# ----------------------------------------------------------------------------
# Parameter init (deterministic synthetic weights, pre-packed for the kernels)
# ----------------------------------------------------------------------------
def _w(key, shape, std=0.02):
    return jax.random.normal(key, shape, jnp.float32) * std


def init_clip_params(key):
    k_tok, k_pos, k_lyr = jax.random.split(key, 3)
    lk = jax.random.split(k_lyr, CLIP_LAYERS)
    wqkv, bqkv, wo, bo, fc1, b1, fc2, b2 = ([] for _ in range(8))
    for li in range(CLIP_LAYERS):
        kk = jax.random.split(lk[li], 12)
        wqkv.append(jnp.concatenate(
            [_w(kk[0], (CLIP_D, CLIP_D)), _w(kk[1], (CLIP_D, CLIP_D)),
             _w(kk[2], (CLIP_D, CLIP_D))], axis=1))
        bqkv.append(jnp.concatenate(
            [_w(kk[3], (CLIP_D,)), _w(kk[4], (CLIP_D,)), _w(kk[5], (CLIP_D,))]))
        wo.append(_w(kk[6], (CLIP_D, CLIP_D)))
        bo.append(_w(kk[7], (CLIP_D,)))
        fc1.append(_w(kk[8], (CLIP_D, CLIP_MLP)))
        b1.append(_w(kk[9], (CLIP_MLP,)))
        fc2.append(_w(kk[10], (CLIP_MLP, CLIP_D)))
        b2.append(_w(kk[11], (CLIP_D,)))
    L = CLIP_LAYERS

    # Fold the frozen attention scale 1/sqrt(Dh) into wq / bq (q = x@wq + bq).
    scale = 1.0 / math.sqrt(CLIP_DH)
    wqkv_a = jnp.stack(wqkv)
    wqkv_a = wqkv_a.at[:, :, :CLIP_D].multiply(scale)
    bqkv_a = jnp.stack(bqkv)
    bqkv_a = bqkv_a.at[:, :CLIP_D].multiply(scale)

    return {
        "tok_emb": _w(k_tok, (VOCAB, CLIP_D)),
        "pos_emb": _w(k_pos, (S, CLIP_D)),
        "ln1_w": jnp.ones((L, 1, CLIP_D), jnp.float32),
        "ln1_b": jnp.zeros((L, 1, CLIP_D), jnp.float32),
        "ln2_w": jnp.ones((L, 1, CLIP_D), jnp.float32),
        "ln2_b": jnp.zeros((L, 1, CLIP_D), jnp.float32),
        # MXU operands stored in bf16; accumulation stays f32 inside kernel.
        "wqkv": wqkv_a.astype(jnp.bfloat16),
        "bqkv": bqkv_a.reshape(L, 1, 3 * CLIP_D),
        "wo": jnp.stack(wo).astype(jnp.bfloat16),
        "bo": jnp.stack(bo).reshape(L, 1, CLIP_D),
        "fc1": jnp.stack(fc1).astype(jnp.bfloat16),
        "b1": jnp.stack(b1).reshape(L, 1, CLIP_MLP),
        "fc2": jnp.stack(fc2).astype(jnp.bfloat16),
        "b2": jnp.stack(b2).reshape(L, 1, CLIP_D),
        "lnf_w": jnp.ones((1, CLIP_D), jnp.float32),
        "lnf_b": jnp.zeros((1, CLIP_D), jnp.float32),
    }


def init_t5_params(key):
    k_tok, k_rel, k_lyr = jax.random.split(key, 3)
    lk = jax.random.split(k_lyr, T5_LAYERS)
    wqkv, wo, wi, wout = [], [], [], []
    for li in range(T5_LAYERS):
        kk = jax.random.split(lk[li], 7)
        wqkv.append(jnp.concatenate(
            [_w(kk[0], (T5_D, T5_INNER)), _w(kk[1], (T5_D, T5_INNER)),
             _w(kk[2], (T5_D, T5_INNER))], axis=1))
        wo.append(_w(kk[3], (T5_INNER, T5_D)))
        wi.append(jnp.concatenate(
            [_w(kk[4], (T5_D, T5_FF)), _w(kk[5], (T5_D, T5_FF))], axis=1))
        wout.append(_w(kk[6], (T5_FF, T5_D)))
    L = T5_LAYERS

    # Relative-position bias depends only on S and frozen rel_bias -> precompute.
    rel_bias = _w(k_rel, (T5_REL_BUCKETS, T5_H))
    ctx = jnp.arange(S)[:, None]
    mem = jnp.arange(S)[None, :]
    buckets = _t5_relative_bucket(mem - ctx)                   # (S, S)
    pos_bias = jnp.take(rel_bias, buckets, axis=0)             # (S, S, H)
    pos_bias = pos_bias.transpose(2, 0, 1)                     # (H, S, S)

    return {
        "tok_emb": _w(k_tok, (VOCAB, T5_D)),
        "pos_bias": pos_bias,
        "ln1_w": jnp.ones((L, 1, T5_D), jnp.float32),
        "ln2_w": jnp.ones((L, 1, T5_D), jnp.float32),
        "wqkv": jnp.stack(wqkv).astype(jnp.bfloat16),
        "wo": jnp.stack(wo).astype(jnp.bfloat16),
        "wi": jnp.stack(wi).astype(jnp.bfloat16),
        "wout": jnp.stack(wout).astype(jnp.bfloat16),
        "lnf_w": jnp.ones((1, T5_D), jnp.float32),
    }


# ----------------------------------------------------------------------------
# FrozenCLIPT5Encoder.forward  (jitted: 2 layer-streamed kernels + tiny glue)
# ----------------------------------------------------------------------------
@jax.jit
def frozen_clip_t5_forward(clip_params, t5_params, clip_tokens, t5_tokens):
    # ---- CLIP branch (layer='last') ----
    x_clip = (jnp.take(clip_params["tok_emb"], clip_tokens, axis=0)
              + clip_params["pos_emb"][None, :, :]).reshape(N_TOK, CLIP_D)
    clip_z = clip_encoder(x_clip, clip_params).reshape(B, S, CLIP_D)

    # ---- T5 v1.1 branch ----
    x_t5 = jnp.take(t5_params["tok_emb"], t5_tokens, axis=0).reshape(N_TOK, T5_D)
    t5_z = t5_encoder(x_t5, t5_params).reshape(B, S, T5_D)

    return [clip_z, t5_z]


if __name__ == "__main__":
    key = jax.random.PRNGKey(0)
    k_clip, k_t5, k_tok = jax.random.split(key, 3)

    clip_params = init_clip_params(k_clip)
    t5_params = init_t5_params(k_t5)

    # Synthetic "tokenized text" (both encoders see the same prompts; the real
    # tokenizers produce different id spaces, so draw two id tensors).
    k_tok1, k_tok2 = jax.random.split(k_tok)
    clip_tokens = jax.random.randint(k_tok1, (B, S), 0, VOCAB, dtype=jnp.int32)
    t5_tokens = jax.random.randint(k_tok2, (B, S), 0, VOCAB, dtype=jnp.int32)

    clip_z, t5_z = frozen_clip_t5_forward(
        clip_params, t5_params, clip_tokens, t5_tokens)
    jax.block_until_ready((clip_z, t5_z))

    assert clip_z.shape == (B, S, CLIP_D) and clip_z.dtype == jnp.float32
    assert t5_z.shape == (B, S, T5_D) and t5_z.dtype == jnp.float32
    assert bool(jnp.all(jnp.isfinite(clip_z))) and bool(jnp.all(jnp.isfinite(t5_z)))

    print("KERNEL_OK")
</pallas_src>

<mosaic_0001>
module attributes {stable_mosaic.version = 11 : i64} {
  func.func @_clip_encoder_kernel(%arg0: i32, %arg1: memref<32x128xf32, #tpu.memory_space<vmem>>, %arg2: memref<1x1x128xf32, #tpu.memory_space<vmem>>, %arg3: memref<1x1x128xf32, #tpu.memory_space<vmem>>, %arg4: memref<1x128x384xbf16, #tpu.memory_space<vmem>>, %arg5: memref<1x1x384xf32, #tpu.memory_space<vmem>>, %arg6: memref<1x128x128xbf16, #tpu.memory_space<vmem>>, %arg7: memref<1x1x128xf32, #tpu.memory_space<vmem>>, %arg8: memref<1x1x128xf32, #tpu.memory_space<vmem>>, %arg9: memref<1x1x128xf32, #tpu.memory_space<vmem>>, %arg10: memref<1x128x256xbf16, #tpu.memory_space<vmem>>, %arg11: memref<1x1x256xf32, #tpu.memory_space<vmem>>, %arg12: memref<1x256x128xbf16, #tpu.memory_space<vmem>>, %arg13: memref<1x1x128xf32, #tpu.memory_space<vmem>>, %arg14: memref<1x128xf32, #tpu.memory_space<vmem>>, %arg15: memref<1x128xf32, #tpu.memory_space<vmem>>, %arg16: memref<32x128xf32, #tpu.memory_space<vmem>>, %arg17: memref<32x128xf32, #tpu.memory_space<vmem>>) attributes {dimension_semantics = [#tpu.dimension_semantics<arbitrary>], iteration_bounds = array<i64: 2>, scalar_prefetch = 0 : i64, scratch_operands = 1 : i64, tpu.core_type = #tpu.core_type<tc>, window_params = [{pipeline_mode = #tpu.pipeline_mode<synchronous>, transform_indices = @transform_0, window_bounds = array<i64: 32, 128>}, {transform_indices = @transform_1, window_bounds = array<i64: 1, 1, 128>}, {transform_indices = @transform_2, window_bounds = array<i64: 1, 1, 128>}, {transform_indices = @transform_3, window_bounds = array<i64: 1, 128, 384>}, {transform_indices = @transform_4, window_bounds = array<i64: 1, 1, 384>}, {transform_indices = @transform_5, window_bounds = array<i64: 1, 128, 128>}, {transform_indices = @transform_6, window_bounds = array<i64: 1, 1, 128>}, {transform_indices = @transform_7, window_bounds = array<i64: 1, 1, 128>}, {transform_indices = @transform_8, window_bounds = array<i64: 1, 1, 128>}, {transform_indices = @transform_9, window_bounds = array<i64: 1, 128, 256>}, {transform_indices = @transform_10, window_bounds = array<i64: 1, 1, 256>}, {transform_indices = @transform_11, window_bounds = array<i64: 1, 256, 128>}, {transform_indices = @transform_12, window_bounds = array<i64: 1, 1, 128>}, {pipeline_mode = #tpu.pipeline_mode<synchronous>, transform_indices = @transform_13, window_bounds = array<i64: 1, 128>}, {pipeline_mode = #tpu.pipeline_mode<synchronous>, transform_indices = @transform_14, window_bounds = array<i64: 1, 128>}, {pipeline_mode = #tpu.pipeline_mode<synchronous>, transform_indices = @transform_15, window_bounds = array<i64: 32, 128>}]} {
    %c0_i32 = arith.constant 0 : i32
    %0 = arith.cmpi eq, %arg0, %c0_i32 : i32
    %1 = arith.extui %0 : i1 to i32
    %c0_i32_0 = arith.constant 0 : i32
    %2 = arith.cmpi ne, %1, %c0_i32_0 : i32
    scf.if %2 {
      %c0_74 = arith.constant 0 : index
      %c0_75 = arith.constant 0 : index
      %194 = vector.load %arg1[%c0_74, %c0_75] : memref<32x128xf32, #tpu.memory_space<vmem>>, vector<32x128xf32>
      %c0_76 = arith.constant 0 : index
      %c0_77 = arith.constant 0 : index
      %195 = vector.load %arg17[%c0_76, %c0_77] : memref<32x128xf32, #tpu.memory_space<vmem>>, vector<32x128xf32>
      tpu.vector_store %arg17[%c0_76, %c0_77], %194 {strides = array<i32>} : memref<32x128xf32, #tpu.memory_space<vmem>>, vector<32x128xf32>,
    } else {
    }
    %c0 = arith.constant 0 : index
    %c0_1 = arith.constant 0 : index
    %3 = vector.load %arg17[%c0, %c0_1] : memref<32x128xf32, #tpu.memory_space<vmem>>, vector<32x128xf32>
    %4 = tpu.iota {dimensions = array<i32: 0>} : vector<16x16xi32>
    %5 = tpu.iota {dimensions = array<i32: 1>} : vector<16x16xi32>
    %6 = arith.cmpi sle, %5, %4 : vector<16x16xi32>
    %cst = arith.constant 0.000000e+00 : f32
    %cst_2 = arith.constant -1.000000e+09 : f32
    %7 = vector.broadcast %cst : f32 to vector<16x16xf32>
    %8 = vector.broadcast %cst_2 : f32 to vector<16x16xf32>
    %9 = arith.select %6, %7, %8 : vector<16x16xi1>, vector<16x16xf32>
    %10 = vector.shape_cast %9 : vector<16x16xf32> to vector<1x16x16xf32>
    %c0_3 = arith.constant 0 : index
    %c0_4 = arith.constant 0 : index
    %c0_5 = arith.constant 0 : index
    %11 = vector.load %arg2[%c0_3, %c0_4, %c0_5] : memref<1x1x128xf32, #tpu.memory_space<vmem>>, vector<1x1x128xf32>
    %12 = vector.shape_cast %11 : vector<1x1x128xf32> to vector<1x128xf32>
    %c0_6 = arith.constant 0 : index
    %c0_7 = arith.constant 0 : index
    %c0_8 = arith.constant 0 : index
    %13 = vector.load %arg3[%c0_6, %c0_7, %c0_8] : memref<1x1x128xf32, #tpu.memory_space<vmem>>, vector<1x1x128xf32>
    %14 = vector.shape_cast %13 : vector<1x1x128xf32> to vector<1x128xf32>
    %cst_9 = arith.constant dense<0.000000e+00> : vector<32xf32>
    %15 = vector.multi_reduction <add>, %3, %cst_9 [1] : vector<32x128xf32> to vector<32xf32>
    %16 = vector.shape_cast %15 : vector<32xf32> to vector<32x1xf32>
    %cst_10 = arith.constant 1.280000e+02 : f32
    %17 = vector.broadcast %cst_10 : f32 to vector<32x1xf32>
    %18 = arith.divf %16, %17 : vector<32x1xf32>
    %19 = vector.broadcast %18 : vector<32x1xf32> to vector<32x128xf32>
    %20 = arith.subf %3, %19 : vector<32x128xf32>
    %21 = arith.mulf %20, %20 : vector<32x128xf32>
    %cst_11 = arith.constant dense<0.000000e+00> : vector<32xf32>
    %22 = vector.multi_reduction <add>, %21, %cst_11 [1] : vector<32x128xf32> to vector<32xf32>
    %23 = vector.shape_cast %22 : vector<32xf32> to vector<32x1xf32>
    %cst_12 = arith.constant 1.280000e+02 : f32
    %24 = vector.broadcast %cst_12 : f32 to vector<32x1xf32>
    %25 = arith.divf %23, %24 : vector<32x1xf32>
    %26 = vector.broadcast %18 : vector<32x1xf32> to vector<32x128xf32>
    %27 = arith.subf %3, %26 : vector<32x128xf32>
    %cst_13 = arith.constant 9.99999974E-6 : f32
    %28 = vector.broadcast %cst_13 : f32 to vector<32x1xf32>
    %29 = arith.addf %25, %28 : vector<32x1xf32>
    %30 = math.rsqrt %29 : vector<32x1xf32>
    %31 = vector.broadcast %30 : vector<32x1xf32> to vector<32x128xf32>
    %32 = arith.mulf %27, %31 : vector<32x128xf32>
    %33 = vector.broadcast %12 : vector<1x128xf32> to vector<32x128xf32>
    %34 = arith.mulf %32, %33 : vector<32x128xf32>
    %35 = vector.broadcast %14 : vector<1x128xf32> to vector<32x128xf32>
    %36 = arith.addf %34, %35 : vector<32x128xf32>
    %37 = arith.truncf %36 : vector<32x128xf32> to vector<32x128xbf16>
    %c0_14 = arith.constant 0 : index
    %c0_15 = arith.constant 0 : index
    %c0_16 = arith.constant 0 : index
    %38 = vector.load %arg4[%c0_14, %c0_15, %c0_16] : memref<1x128x384xbf16, #tpu.memory_space<vmem>>, vector<1x128x384xbf16>
    %39 = vector.shape_cast %38 : vector<1x128x384xbf16> to vector<128x384xbf16>
    %cst_17 = arith.constant dense<0.000000e+00> : vector<32x384xf32>
    %40 = tpu.matmul %37, %39, %cst_17 {dimension_numbers = #tpu.dot_dimension_numbers<[1], [0], [0], [1], [0, 0, 1, 1], [], []>} : vector<32x128xbf16>, vector<128x384xbf16>, vector<32x384xf32> -> vector<32x384xf32>
    %c0_18 = arith.constant 0 : index
    %c0_19 = arith.constant 0 : index
    %c0_20 = arith.constant 0 : index
    %41 = vector.load %arg5[%c0_18, %c0_19, %c0_20] : memref<1x1x384xf32, #tpu.memory_space<vmem>>, vector<1x1x384xf32>
    %42 = vector.shape_cast %41 : vector<1x1x384xf32> to vector<1x384xf32>
    %43 = vector.broadcast %42 : vector<1x384xf32> to vector<32x384xf32>
    %44 = arith.addf %40, %43 : vector<32x384xf32>
    %45 = arith.truncf %44 : vector<32x384xf32> to vector<32x384xbf16>
    %c0_21 = arith.constant 0 : index
    %c0_22 = arith.constant 0 : index
    %c0_23 = arith.constant 0 : index
    %46 = vector.load %arg6[%c0_21, %c0_22, %c0_23] : memref<1x128x128xbf16, #tpu.memory_space<vmem>>, vector<1x128x128xbf16>
    %47 = vector.shape_cast %46 : vector<1x128x128xbf16> to vector<128x128xbf16>
    %48 = vector.extract_strided_slice %45 {offsets = [0, 0], sizes = [32, 128], strides = [1, 1]} : vector<32x384xbf16> to vector<32x128xbf16>
    %49 = vector.shape_cast %48 : vector<32x128xbf16> to vector<2x16x128xbf16>
    %50 = vector.extract_strided_slice %45 {offsets = [0, 128], sizes = [32, 128], strides = [1, 1]} : vector<32x384xbf16> to vector<32x128xbf16>
    %51 = vector.shape_cast %50 : vector<32x128xbf16> to vector<2x16x128xbf16>
    %52 = vector.extract_strided_slice %45 {offsets = [0, 256], sizes = [32, 128], strides = [1, 1]} : vector<32x384xbf16> to vector<32x128xbf16>
    %53 = vector.shape_cast %52 : vector<32x128xbf16> to vector<2x16x128xbf16>
    %54 = vector.extract_strided_slice %49 {offsets = [0, 0, 0], sizes = [2, 16, 32], strides = [1, 1, 1]} : vector<2x16x128xbf16> to vector<2x16x32xbf16>
    %55 = vector.extract_strided_slice %51 {offsets = [0, 0, 0], sizes = [2, 16, 32], strides = [1, 1, 1]} : vector<2x16x128xbf16> to vector<2x16x32xbf16>
    "tpu.trace_start"() <{level = 10 : i32, message = "bqd,bkd->bqk"}> : () -> ()
    %cst_24 = arith.constant dense<0.000000e+00> : vector<2x16x16xf32>
    %56 = tpu.matmul %54, %55, %cst_24 {dimension_numbers = #tpu.dot_dimension_numbers<[2], [2], [1], [1], [0, 0, 0, 1, 1, 1], [0], [0]>} : vector<2x16x32xbf16>, vector<2x16x32xbf16>, vector<2x16x16xf32> -> vector<2x16x16xf32>
    "tpu.trace_stop"() : () -> ()
    %57 = vector.shape_cast %10 : vector<1x16x16xf32> to vector<16x16xf32>
    %58 = vector.shape_cast %57 : vector<16x16xf32> to vector<1x16x16xf32>
    %59 = vector.broadcast %58 : vector<1x16x16xf32> to vector<2x16x16xf32>
    %60 = arith.addf %56, %59 : vector<2x16x16xf32>
    %cst_25 = arith.constant dense<0xFF800000> : vector<2x16xf32>
    %61 = vector.multi_reduction <maximumf>, %60, %cst_25 [2] : vector<2x16x16xf32> to vector<2x16xf32>
    %62 = vector.shape_cast %61 : vector<2x16xf32> to vector<2x16x1xf32>
    %63 = vector.broadcast %62 : vector<2x16x1xf32> to vector<2x16x16xf32>
    %64 = arith.subf %60, %63 : vector<2x16x16xf32>
    %65 = math.exp %64 : vector<2x16x16xf32>
    %cst_26 = arith.constant dense<0.000000e+00> : vector<2x16xf32>
    %66 = vector.multi_reduction <add>, %65, %cst_26 [2] : vector<2x16x16xf32> to vector<2x16xf32>
    %67 = vector.shape_cast %66 : vector<2x16xf32> to vector<2x16x1xf32>
    %68 = vector.broadcast %67 : vector<2x16x1xf32> to vector<2x16x16xf32>
    %69 = arith.divf %65, %68 : vector<2x16x16xf32>
    %70 = arith.truncf %69 : vector<2x16x16xf32> to vector<2x16x16xbf16>
    %71 = vector.extract_strided_slice %53 {offsets = [0, 0, 0], sizes = [2, 16, 32], strides = [1, 1, 1]} : vector<2x16x128xbf16> to vector<2x16x32xbf16>
    "tpu.trace_start"() <{level = 10 : i32, message = "bqk,bkd->bqd"}> : () -> ()
    %cst_27 = arith.constant dense<0.000000e+00> : vector<2x16x32xf32>
    %72 = tpu.matmul %70, %71, %cst_27 {dimension_numbers = #tpu.dot_dimension_numbers<[2], [1], [1], [2], [0, 0, 0, 1, 1, 2], [0], [0]>} : vector<2x16x16xbf16>, vector<2x16x32xbf16>, vector<2x16x32xf32> -> vector<2x16x32xf32>
    "tpu.trace_stop"() : () -> ()
    %73 = vector.extract_strided_slice %49 {offsets = [0, 0, 32], sizes = [2, 16, 32], strides = [1, 1, 1]} : vector<2x16x128xbf16> to vector<2x16x32xbf16>
    %74 = vector.extract_strided_slice %51 {offsets = [0, 0, 32], sizes = [2, 16, 32], strides = [1, 1, 1]} : vector<2x16x128xbf16> to vector<2x16x32xbf16>
    "tpu.trace_start"() <{level = 10 : i32, message = "bqd,bkd->bqk"}> : () -> ()
    %cst_28 = arith.constant dense<0.000000e+00> : vector<2x16x16xf32>
    %75 = tpu.matmul %73, %74, %cst_28 {dimension_numbers = #tpu.dot_dimension_numbers<[2], [2], [1], [1], [0, 0, 0, 1, 1, 1], [0], [0]>} : vector<2x16x32xbf16>, vector<2x16x32xbf16>, vector<2x16x16xf32> -> vector<2x16x16xf32>
    "tpu.trace_stop"() : () -> ()
    %76 = vector.shape_cast %10 : vector<1x16x16xf32> to vector<16x16xf32>
    %77 = vector.shape_cast %76 : vector<16x16xf32> to vector<1x16x16xf32>
    %78 = vector.broadcast %77 : vector<1x16x16xf32> to vector<2x16x16xf32>
    %79 = arith.addf %75, %78 : vector<2x16x16xf32>
    %cst_29 = arith.constant dense<0xFF800000> : vector<2x16xf32>
    %80 = vector.multi_reduction <maximumf>, %79, %cst_29 [2] : vector<2x16x16xf32> to vector<2x16xf32>
    %81 = vector.shape_cast %80 : vector<2x16xf32> to vector<2x16x1xf32>
    %82 = vector.broadcast %81 : vector<2x16x1xf32> to vector<2x16x16xf32>
    %83 = arith.subf %79, %82 : vector<2x16x16xf32>
    %84 = math.exp %83 : vector<2x16x16xf32>
    %cst_30 = arith.constant dense<0.000000e+00> : vector<2x16xf32>
    %85 = vector.multi_reduction <add>, %84, %cst_30 [2] : vector<2x16x16xf32> to vector<2x16xf32>
    %86 = vector.shape_cast %85 : vector<2x16xf32> to vector<2x16x1xf32>
    %87 = vector.broadcast %86 : vector<2x16x1xf32> to vector<2x16x16xf32>
    %88 = arith.divf %84, %87 : vector<2x16x16xf32>
    %89 = arith.truncf %88 : vector<2x16x16xf32> to vector<2x16x16xbf16>
    %90 = vector.extract_strided_slice %53 {offsets = [0, 0, 32], sizes = [2, 16, 32], strides = [1, 1, 1]} : vector<2x16x128xbf16> to vector<2x16x32xbf16>
    "tpu.trace_start"() <{level = 10 : i32, message = "bqk,bkd->bqd"}> : () -> ()
    %cst_31 = arith.constant dense<0.000000e+00> : vector<2x16x32xf32>
    %91 = tpu.matmul %89, %90, %cst_31 {dimension_numbers = #tpu.dot_dimension_numbers<[2], [1], [1], [2], [0, 0, 0, 1, 1, 2], [0], [0]>} : vector<2x16x16xbf16>, vector<2x16x32xbf16>, vector<2x16x32xf32> -> vector<2x16x32xf32>
    "tpu.trace_stop"() : () -> ()
    %92 = vector.extract_strided_slice %49 {offsets = [0, 0, 64], sizes = [2, 16, 32], strides = [1, 1, 1]} : vector<2x16x128xbf16> to vector<2x16x32xbf16>
    %93 = vector.extract_strided_slice %51 {offsets = [0, 0, 64], sizes = [2, 16, 32], strides = [1, 1, 1]} : vector<2x16x128xbf16> to vector<2x16x32xbf16>
    "tpu.trace_start"() <{level = 10 : i32, message = "bqd,bkd->bqk"}> : () -> ()
    %cst_32 = arith.constant dense<0.000000e+00> : vector<2x16x16xf32>
    %94 = tpu.matmul %92, %93, %cst_32 {dimension_numbers = #tpu.dot_dimension_numbers<[2], [2], [1], [1], [0, 0, 0, 1, 1, 1], [0], [0]>} : vector<2x16x32xbf16>, vector<2x16x32xbf16>, vector<2x16x16xf32> -> vector<2x16x16xf32>
    "tpu.trace_stop"() : () -> ()
    %95 = vector.shape_cast %10 : vector<1x16x16xf32> to vector<16x16xf32>
    %96 = vector.shape_cast %95 : vector<16x16xf32> to vector<1x16x16xf32>
    %97 = vector.broadcast %96 : vector<1x16x16xf32> to vector<2x16x16xf32>
    %98 = arith.addf %94, %97 : vector<2x16x16xf32>
    %cst_33 = arith.constant dense<0xFF800000> : vector<2x16xf32>
    %99 = vector.multi_reduction <maximumf>, %98, %cst_33 [2] : vector<2x16x16xf32> to vector<2x16xf32>
    %100 = vector.shape_cast %99 : vector<2x16xf32> to vector<2x16x1xf32>
    %101 = vector.broadcast %100 : vector<2x16x1xf32> to vector<2x16x16xf32>
    %102 = arith.subf %98, %101 : vector<2x16x16xf32>
    %103 = math.exp %102 : vector<2x16x16xf32>
    %cst_34 = arith.constant dense<0.000000e+00> : vector<2x16xf32>
    %104 = vector.multi_reduction <add>, %103, %cst_34 [2] : vector<2x16x16xf32> to vector<2x16xf32>
    %105 = vector.shape_cast %104 : vector<2x16xf32> to vector<2x16x1xf32>
    %106 = vector.broadcast %105 : vector<2x16x1xf32> to vector<2x16x16xf32>
    %107 = arith.divf %103, %106 : vector<2x16x16xf32>
    %108 = arith.truncf %107 : vector<2x16x16xf32> to vector<2x16x16xbf16>
    %109 = vector.extract_strided_slice %53 {offsets = [0, 0, 64], sizes = [2, 16, 32], strides = [1, 1, 1]} : vector<2x16x128xbf16> to vector<2x16x32xbf16>
    "tpu.trace_start"() <{level = 10 : i32, message = "bqk,bkd->bqd"}> : () -> ()
    %cst_35 = arith.constant dense<0.000000e+00> : vector<2x16x32xf32>
    %110 = tpu.matmul %108, %109, %cst_35 {dimension_numbers = #tpu.dot_dimension_numbers<[2], [1], [1], [2], [0, 0, 0, 1, 1, 2], [0], [0]>} : vector<2x16x16xbf16>, vector<2x16x32xbf16>, vector<2x16x32xf32> -> vector<2x16x32xf32>
    "tpu.trace_stop"() : () -> ()
    %111 = vector.extract_strided_slice %49 {offsets = [0, 0, 96], sizes = [2, 16, 32], strides = [1, 1, 1]} : vector<2x16x128xbf16> to vector<2x16x32xbf16>
    %112 = vector.extract_strided_slice %51 {offsets = [0, 0, 96], sizes = [2, 16, 32], strides = [1, 1, 1]} : vector<2x16x128xbf16> to vector<2x16x32xbf16>
    "tpu.trace_start"() <{level = 10 : i32, message = "bqd,bkd->bqk"}> : () -> ()
    %cst_36 = arith.constant dense<0.000000e+00> : vector<2x16x16xf32>
    %113 = tpu.matmul %111, %112, %cst_36 {dimension_numbers = #tpu.dot_dimension_numbers<[2], [2], [1], [1], [0, 0, 0, 1, 1, 1], [0], [0]>} : vector<2x16x32xbf16>, vector<2x16x32xbf16>, vector<2x16x16xf32> -> vector<2x16x16xf32>
    "tpu.trace_stop"() : () -> ()
    %114 = vector.shape_cast %10 : vector<1x16x16xf32> to vector<16x16xf32>
    %115 = vector.shape_cast %114 : vector<16x16xf32> to vector<1x16x16xf32>
    %116 = vector.broadcast %115 : vector<1x16x16xf32> to vector<2x16x16xf32>
    %117 = arith.addf %113, %116 : vector<2x16x16xf32>
    %cst_37 = arith.constant dense<0xFF800000> : vector<2x16xf32>
    %118 = vector.multi_reduction <maximumf>, %117, %cst_37 [2] : vector<2x16x16xf32> to vector<2x16xf32>
    %119 = vector.shape_cast %118 : vector<2x16xf32> to vector<2x16x1xf32>
    %120 = vector.broadcast %119 : vector<2x16x1xf32> to vector<2x16x16xf32>
    %121 = arith.subf %117, %120 : vector<2x16x16xf32>
    %122 = math.exp %121 : vector<2x16x16xf32>
    %cst_38 = arith.constant dense<0.000000e+00> : vector<2x16xf32>
    %123 = vector.multi_reduction <add>, %122, %cst_38 [2] : vector<2x16x16xf32> to vector<2x16xf32>
    %124 = vector.shape_cast %123 : vector<2x16xf32> to vector<2x16x1xf32>
    %125 = vector.broadcast %124 : vector<2x16x1xf32> to vector<2x16x16xf32>
    %126 = arith.divf %122, %125 : vector<2x16x16xf32>
    %127 = arith.truncf %126 : vector<2x16x16xf32> to vector<2x16x16xbf16>
    %128 = vector.extract_strided_slice %53 {offsets = [0, 0, 96], sizes = [2, 16, 32], strides = [1, 1, 1]} : vector<2x16x128xbf16> to vector<2x16x32xbf16>
    "tpu.trace_start"() <{level = 10 : i32, message = "bqk,bkd->bqd"}> : () -> ()
    %cst_39 = arith.constant dense<0.000000e+00> : vector<2x16x32xf32>
    %129 = tpu.matmul %127, %128, %cst_39 {dimension_numbers = #tpu.dot_dimension_numbers<[2], [1], [1], [2], [0, 0, 0, 1, 1, 2], [0], [0]>} : vector<2x16x16xbf16>, vector<2x16x32xbf16>, vector<2x16x32xf32> -> vector<2x16x32xf32>
    "tpu.trace_stop"() : () -> ()
    %130 = tpu.concatenate %72, %91, %110, %129 in 2 : vector<2x16x32xf32>, vector<2x16x32xf32>, vector<2x16x32xf32>, vector<2x16x32xf32> -> vector<2x16x128xf32>
    %131 = vector.shape_cast %130 : vector<2x16x128xf32> to vector<32x128xf32>
    %132 = arith.truncf %131 : vector<32x128xf32> to vector<32x128xbf16>
    %cst_40 = arith.constant dense<0.000000e+00> : vector<32x128xf32>
    %133 = tpu.matmul %132, %47, %cst_40 {dimension_numbers = #tpu.dot_dimension_numbers<[1], [0], [0], [1], [0, 0, 1, 1], [], []>} : vector<32x128xbf16>, vector<128x128xbf16>, vector<32x128xf32> -> vector<32x128xf32>
    %134 = arith.addf %3, %133 : vector<32x128xf32>
    %c0_41 = arith.constant 0 : index
    %c0_42 = arith.constant 0 : index
    %c0_43 = arith.constant 0 : index
    %135 = vector.load %arg7[%c0_41, %c0_42, %c0_43] : memref<1x1x128xf32, #tpu.memory_space<vmem>>, vector<1x1x128xf32>
    %136 = vector.shape_cast %135 : vector<1x1x128xf32> to vector<1x128xf32>
    %137 = vector.broadcast %136 : vector<1x128xf32> to vector<32x128xf32>
    %138 = arith.addf %134, %137 : vector<32x128xf32>
    %c0_44 = arith.constant 0 : index
    %c0_45 = arith.constant 0 : index
    %c0_46 = arith.constant 0 : index
    %139 = vector.load %arg8[%c0_44, %c0_45, %c0_46] : memref<1x1x128xf32, #tpu.memory_space<vmem>>, vector<1x1x128xf32>
    %140 = vector.shape_cast %139 : vector<1x1x128xf32> to vector<1x128xf32>
    %c0_47 = arith.constant 0 : index
    %c0_48 = arith.constant 0 : index
    %c0_49 = arith.constant 0 : index
    %141 = vector.load %arg9[%c0_47, %c0_48, %c0_49] : memref<1x1x128xf32, #tpu.memory_space<vmem>>, vector<1x1x128xf32>
    %142 = vector.shape_cast %141 : vector<1x1x128xf32> to vector<1x128xf32>
    %cst_50 = arith.constant dense<0.000000e+00> : vector<32xf32>
    %143 = vector.multi_reduction <add>, %138, %cst_50 [1] : vector<32x128xf32> to vector<32xf32>
    %144 = vector.shape_cast %143 : vector<32xf32> to vector<32x1xf32>
    %cst_51 = arith.constant 1.280000e+02 : f32
    %145 = vector.broadcast %cst_51 : f32 to vector<32x1xf32>
    %146 = arith.divf %144, %145 : vector<32x1xf32>
    %147 = vector.broadcast %146 : vector<32x1xf32> to vector<32x128xf32>
    %148 = arith.subf %138, %147 : vector<32x128xf32>
    %149 = arith.mulf %148, %148 : vector<32x128xf32>
    %cst_52 = arith.constant dense<0.000000e+00> : vector<32xf32>
    %150 = vector.multi_reduction <add>, %149, %cst_52 [1] : vector<32x128xf32> to vector<32xf32>
    %151 = vector.shape_cast %150 : vector<32xf32> to vector<32x1xf32>
    %cst_53 = arith.constant 1.280000e+02 : f32
    %152 = vector.broadcast %cst_53 : f32 to vector<32x1xf32>
    %153 = arith.divf %151, %152 : vector<32x1xf32>
    %154 = vector.broadcast %146 : vector<32x1xf32> to vector<32x128xf32>
    %155 = arith.subf %138, %154 : vector<32x128xf32>
    %cst_54 = arith.constant 9.99999974E-6 : f32
    %156 = vector.broadcast %cst_54 : f32 to vector<32x1xf32>
    %157 = arith.addf %153, %156 : vector<32x1xf32>
    %158 = math.rsqrt %157 : vector<32x1xf32>
    %159 = vector.broadcast %158 : vector<32x1xf32> to vector<32x128xf32>
    %160 = arith.mulf %155, %159 : vector<32x128xf32>
    %161 = vector.broadcast %140 : vector<1x128xf32> to vector<32x128xf32>
    %162 = arith.mulf %160, %161 : vector<32x128xf32>
    %163 = vector.broadcast %142 : vector<1x128xf32> to vector<32x128xf32>
    %164 = arith.addf %162, %163 : vector<32x128xf32>
    %165 = arith.truncf %164 : vector<32x128xf32> to vector<32x128xbf16>
    %c0_55 = arith.constant 0 : index
    %c0_56 = arith.constant 0 : index
    %c0_57 = arith.constant 0 : index
    %166 = vector.load %arg10[%c0_55, %c0_56, %c0_57] : memref<1x128x256xbf16, #tpu.memory_space<vmem>>, vector<1x128x256xbf16>
    %167 = vector.shape_cast %166 : vector<1x128x256xbf16> to vector<128x256xbf16>
    %cst_58 = arith.constant dense<0.000000e+00> : vector<32x256xf32>
    %168 = tpu.matmul %165, %167, %cst_58 {dimension_numbers = #tpu.dot_dimension_numbers<[1], [0], [0], [1], [0, 0, 1, 1], [], []>} : vector<32x128xbf16>, vector<128x256xbf16>, vector<32x256xf32> -> vector<32x256xf32>
    %c0_59 = arith.constant 0 : index
    %c0_60 = arith.constant 0 : index
    %c0_61 = arith.constant 0 : index
    %169 = vector.load %arg11[%c0_59, %c0_60, %c0_61] : memref<1x1x256xf32, #tpu.memory_space<vmem>>, vector<1x1x256xf32>
    %170 = vector.shape_cast %169 : vector<1x1x256xf32> to vector<1x256xf32>
    %171 = vector.broadcast %170 : vector<1x256xf32> to vector<32x256xf32>
    %172 = arith.addf %168, %171 : vector<32x256xf32>
    %cst_62 = arith.constant 1.702000e+00 : f32
    %173 = vector.broadcast %cst_62 : f32 to vector<32x256xf32>
    %174 = arith.mulf %173, %172 : vector<32x256xf32>
    %175 = arith.negf %174 : vector<32x256xf32>
    %176 = math.exp %175 : vector<32x256xf32>
    %cst_63 = arith.constant 1.000000e+00 : f32
    %177 = vector.broadcast %cst_63 : f32 to vector<32x256xf32>
    %178 = arith.addf %177, %176 : vector<32x256xf32>
    %179 = arith.divf %177, %178 : vector<32x256xf32>
    %180 = arith.mulf %172, %179 : vector<32x256xf32>
    %181 = arith.truncf %180 : vector<32x256xf32> to vector<32x256xbf16>
    %c0_64 = arith.constant 0 : index
    %c0_65 = arith.constant 0 : index
    %c0_66 = arith.constant 0 : index
    %182 = vector.load %arg12[%c0_64, %c0_65, %c0_66] : memref<1x256x128xbf16, #tpu.memory_space<vmem>>, vector<1x256x128xbf16>
    %183 = vector.shape_cast %182 : vector<1x256x128xbf16> to vector<256x128xbf16>
    %cst_67 = arith.constant dense<0.000000e+00> : vector<32x128xf32>
    %184 = tpu.matmul %181, %183, %cst_67 {dimension_numbers = #tpu.dot_dimension_numbers<[1], [0], [0], [1], [0, 0, 1, 1], [], []>} : vector<32x256xbf16>, vector<256x128xbf16>, vector<32x128xf32> -> vector<32x128xf32>
    %185 = arith.addf %138, %184 : vector<32x128xf32>
    %c0_68 = arith.constant 0 : index
    %c0_69 = arith.constant 0 : index
    %c0_70 = arith.constant 0 : index
    %186 = vector.load %arg13[%c0_68, %c0_69, %c0_70] : memref<1x1x128xf32, #tpu.memory_space<vmem>>, vector<1x1x128xf32>
    %187 = vector.shape_cast %186 : vector<1x1x128xf32> to vector<1x128xf32>
    %188 = vector.broadcast %187 : vector<1x128xf32> to vector<32x128xf32>
    %189 = arith.addf %185, %188 : vector<32x128xf32>
    %c0_71 = arith.constant 0 : index
    %c0_72 = arith.constant 0 : index
    %190 = vector.load %arg17[%c0_71, %c0_72] : memref<32x128xf32, #tpu.memory_space<vmem>>, vector<32x128xf32>
    tpu.vector_store %arg17[%c0_71, %c0_72], %189 {strides = array<i32>} : memref<32x128xf32, #tpu.memory_space<vmem>>, vector<32x128xf32>,
    %c1_i32 = arith.constant 1 : i32
    %191 = arith.cmpi eq, %arg0, %c1_i32 : i32
    %192 = arith.extui %191 : i1 to i32
    %c0_i32_73 = arith.constant 0 : i32
    %193 = arith.cmpi ne, %192, %c0_i32_73 : i32
    scf.if %193 {
      %c0_74 = arith.constant 0 : index
      %c0_75 = arith.constant 0 : index
      %194 = vector.load %arg14[%c0_74, %c0_75] : memref<1x128xf32, #tpu.memory_space<vmem>>, vector<1x128xf32>
      %c0_76 = arith.constant 0 : index
      %c0_77 = arith.constant 0 : index
      %195 = vector.load %arg15[%c0_76, %c0_77] : memref<1x128xf32, #tpu.memory_space<vmem>>, vector<1x128xf32>
      %cst_78 = arith.constant dense<0.000000e+00> : vector<32xf32>
      %196 = vector.multi_reduction <add>, %189, %cst_78 [1] : vector<32x128xf32> to vector<32xf32>
      %197 = vector.shape_cast %196 : vector<32xf32> to vector<32x1xf32>
      %cst_79 = arith.constant 1.280000e+02 : f32
      %198 = vector.broadcast %cst_79 : f32 to vector<32x1xf32>
      %199 = arith.divf %197, %198 : vector<32x1xf32>
      %200 = vector.broadcast %199 : vector<32x1xf32> to vector<32x128xf32>
      %201 = arith.subf %189, %200 : vector<32x128xf32>
      %202 = arith.mulf %201, %201 : vector<32x128xf32>
      %cst_80 = arith.constant dense<0.000000e+00> : vector<32xf32>
      %203 = vector.multi_reduction <add>, %202, %cst_80 [1] : vector<32x128xf32> to vector<32xf32>
      %204 = vector.shape_cast %203 : vector<32xf32> to vector<32x1xf32>
      %cst_81 = arith.constant 1.280000e+02 : f32
      %205 = vector.broadcast %cst_81 : f32 to vector<32x1xf32>
      %206 = arith.divf %204, %205 : vector<32x1xf32>
      %207 = vector.broadcast %199 : vector<32x1xf32> to vector<32x128xf32>
      %208 = arith.subf %189, %207 : vector<32x128xf32>
      %cst_82 = arith.constant 9.99999974E-6 : f32
      %209 = vector.broadcast %cst_82 : f32 to vector<32x1xf32>
      %210 = arith.addf %206, %209 : vector<32x1xf32>
      %211 = math.rsqrt %210 : vector<32x1xf32>
      %212 = vector.broadcast %211 : vector<32x1xf32> to vector<32x128xf32>
      %213 = arith.mulf %208, %212 : vector<32x128xf32>
      %214 = vector.broadcast %194 : vector<1x128xf32> to vector<32x128xf32>
      %215 = arith.mulf %213, %214 : vector<32x128xf32>
      %216 = vector.broadcast %195 : vector<1x128xf32> to vector<32x128xf32>
      %217 = arith.addf %215, %216 : vector<32x128xf32>
      %c0_83 = arith.constant 0 : index
      %c0_84 = arith.constant 0 : index
      %218 = vector.load %arg16[%c0_83, %c0_84] : memref<32x128xf32, #tpu.memory_space<vmem>>, vector<32x128xf32>
      tpu.vector_store %arg16[%c0_83, %c0_84], %217 {strides = array<i32>} : memref<32x128xf32, #tpu.memory_space<vmem>>, vector<32x128xf32>,
    } else {
    }
    return
  }
  func.func @transform_0(%arg0: i32) -> (i32, i32) {
    %c0_i32 = arith.constant 0 : i32
    %c0_i32_0 = arith.constant 0 : i32
    %c0_i32_1 = arith.constant 0 : i32
    return %c0_i32, %c0_i32_0 : i32, i32
  }
  func.func @transform_1(%arg0: i32) -> (i32, i32, i32) {
    %c0_i32 = arith.constant 0 : i32
    %c0_i32_0 = arith.constant 0 : i32
    %c0_i32_1 = arith.constant 0 : i32
    return %arg0, %c0_i32, %c0_i32_0 : i32, i32, i32
  }
  func.func @transform_2(%arg0: i32) -> (i32, i32, i32) {
    %c0_i32 = arith.constant 0 : i32
    %c0_i32_0 = arith.constant 0 : i32
    %c0_i32_1 = arith.constant 0 : i32
    return %arg0, %c0_i32, %c0_i32_0 : i32, i32, i32
  }
  func.func @transform_3(%arg0: i32) -> (i32, i32, i32) {
    %c0_i32 = arith.constant 0 : i32
    %c0_i32_0 = arith.constant 0 : i32
    %c0_i32_1 = arith.constant 0 : i32
    return %arg0, %c0_i32, %c0_i32_0 : i32, i32, i32
  }
  func.func @transform_4(%arg0: i32) -> (i32, i32, i32) {
    %c0_i32 = arith.constant 0 : i32
    %c0_i32_0 = arith.constant 0 : i32
    %c0_i32_1 = arith.constant 0 : i32
    return %arg0, %c0_i32, %c0_i32_0 : i32, i32, i32
  }
  func.func @transform_5(%arg0: i32) -> (i32, i32, i32) {
    %c0_i32 = arith.constant 0 : i32
    %c0_i32_0 = arith.constant 0 : i32
    %c0_i32_1 = arith.constant 0 : i32
    return %arg0, %c0_i32, %c0_i32_0 : i32, i32, i32
  }
  func.func @transform_6(%arg0: i32) -> (i32, i32, i32) {
    %c0_i32 = arith.constant 0 : i32
    %c0_i32_0 = arith.constant 0 : i32
    %c0_i32_1 = arith.constant 0 : i32
    return %arg0, %c0_i32, %c0_i32_0 : i32, i32, i32
  }
  func.func @transform_7(%arg0: i32) -> (i32, i32, i32) {
    %c0_i32 = arith.constant 0 : i32
    %c0_i32_0 = arith.constant 0 : i32
    %c0_i32_1 = arith.constant 0 : i32
    return %arg0, %c0_i32, %c0_i32_0 : i32, i32, i32
  }
  func.func @transform_8(%arg0: i32) -> (i32, i32, i32) {
    %c0_i32 = arith.constant 0 : i32
    %c0_i32_0 = arith.constant 0 : i32
    %c0_i32_1 = arith.constant 0 : i32
    return %arg0, %c0_i32, %c0_i32_0 : i32, i32, i32
  }
  func.func @transform_9(%arg0: i32) -> (i32, i32, i32) {
    %c0_i32 = arith.constant 0 : i32
    %c0_i32_0 = arith.constant 0 : i32
    %c0_i32_1 = arith.constant 0 : i32
    return %arg0, %c0_i32, %c0_i32_0 : i32, i32, i32
  }
  func.func @transform_10(%arg0: i32) -> (i32, i32, i32) {
    %c0_i32 = arith.constant 0 : i32
    %c0_i32_0 = arith.constant 0 : i32
    %c0_i32_1 = arith.constant 0 : i32
    return %arg0, %c0_i32, %c0_i32_0 : i32, i32, i32
  }
  func.func @transform_11(%arg0: i32) -> (i32, i32, i32) {
    %c0_i32 = arith.constant 0 : i32
    %c0_i32_0 = arith.constant 0 : i32
    %c0_i32_1 = arith.constant 0 : i32
    return %arg0, %c0_i32, %c0_i32_0 : i32, i32, i32
  }
  func.func @transform_12(%arg0: i32) -> (i32, i32, i32) {
    %c0_i32 = arith.constant 0 : i32
    %c0_i32_0 = arith.constant 0 : i32
    %c0_i32_1 = arith.constant 0 : i32
    return %arg0, %c0_i32, %c0_i32_0 : i32, i32, i32
  }
  func.func @transform_13(%arg0: i32) -> (i32, i32) {
    %c0_i32 = arith.constant 0 : i32
    %c0_i32_0 = arith.constant 0 : i32
    %c0_i32_1 = arith.constant 0 : i32
    return %c0_i32, %c0_i32_0 : i32, i32
  }
  func.func @transform_14(%arg0: i32) -> (i32, i32) {
    %c0_i32 = arith.constant 0 : i32
    %c0_i32_0 = arith.constant 0 : i32
    %c0_i32_1 = arith.constant 0 : i32
    return %c0_i32, %c0_i32_0 : i32, i32
  }
  func.func @transform_15(%arg0: i32) -> (i32, i32) {
    %c0_i32 = arith.constant 0 : i32
    %c0_i32_0 = arith.constant 0 : i32
    %c0_i32_1 = arith.constant 0 : i32
    return %c0_i32, %c0_i32_0 : i32, i32
  }
}

module attributes {stable_mosaic.version = 11 : i64} {
  func.func @_t5_encoder_kernel(%arg0: i32, %arg1: memref<32x128xf32, #tpu.memory_space<vmem>>, %arg2: memref<4x16x16xf32, #tpu.memory_space<vmem>>, %arg3: memref<1x1x128xf32, #tpu.memory_space<vmem>>, %arg4: memref<1x128x384xbf16, #tpu.memory_space<vmem>>, %arg5: memref<1x128x128xbf16, #tpu.memory_space<vmem>>, %arg6: memref<1x1x128xf32, #tpu.memory_space<vmem>>, %arg7: memref<1x128x512xbf16, #tpu.memory_space<vmem>>, %arg8: memref<1x256x128xbf16, #tpu.memory_space<vmem>>, %arg9: memref<1x128xf32, #tpu.memory_space<vmem>>, %arg10: memref<32x128xf32, #tpu.memory_space<vmem>>, %arg11: memref<32x128xf32, #tpu.memory_space<vmem>>) attributes {dimension_semantics = [#tpu.dimension_semantics<arbitrary>], iteration_bounds = array<i64: 2>, scalar_prefetch = 0 : i64, scratch_operands = 1 : i64, tpu.core_type = #tpu.core_type<tc>, window_params = [{pipeline_mode = #tpu.pipeline_mode<synchronous>, transform_indices = @transform_0, window_bounds = array<i64: 32, 128>}, {pipeline_mode = #tpu.pipeline_mode<synchronous>, transform_indices = @transform_1, window_bounds = array<i64: 4, 16, 16>}, {transform_indices = @transform_2, window_bounds = array<i64: 1, 1, 128>}, {transform_indices = @transform_3, window_bounds = array<i64: 1, 128, 384>}, {transform_indices = @transform_4, window_bounds = array<i64: 1, 128, 128>}, {transform_indices = @transform_5, window_bounds = array<i64: 1, 1, 128>}, {transform_indices = @transform_6, window_bounds = array<i64: 1, 128, 512>}, {transform_indices = @transform_7, window_bounds = array<i64: 1, 256, 128>}, {pipeline_mode = #tpu.pipeline_mode<synchronous>, transform_indices = @transform_8, window_bounds = array<i64: 1, 128>}, {pipeline_mode = #tpu.pipeline_mode<synchronous>, transform_indices = @transform_9, window_bounds = array<i64: 32, 128>}]} {
    %c0_i32 = arith.constant 0 : i32
    %0 = arith.cmpi eq, %arg0, %c0_i32 : i32
    %1 = arith.extui %0 : i1 to i32
    %c0_i32_0 = arith.constant 0 : i32
    %2 = arith.cmpi ne, %1, %c0_i32_0 : i32
    scf.if %2 {
      %c0_55 = arith.constant 0 : index
      %c0_56 = arith.constant 0 : index
      %160 = vector.load %arg1[%c0_55, %c0_56] : memref<32x128xf32, #tpu.memory_space<vmem>>, vector<32x128xf32>
      %c0_57 = arith.constant 0 : index
      %c0_58 = arith.constant 0 : index
      %161 = vector.load %arg11[%c0_57, %c0_58] : memref<32x128xf32, #tpu.memory_space<vmem>>, vector<32x128xf32>
      tpu.vector_store %arg11[%c0_57, %c0_58], %160 {strides = array<i32>} : memref<32x128xf32, #tpu.memory_space<vmem>>, vector<32x128xf32>,
    } else {
    }
    %c0 = arith.constant 0 : index
    %c0_1 = arith.constant 0 : index
    %3 = vector.load %arg11[%c0, %c0_1] : memref<32x128xf32, #tpu.memory_space<vmem>>, vector<32x128xf32>
    %c0_2 = arith.constant 0 : index
    %c0_3 = arith.constant 0 : index
    %c0_4 = arith.constant 0 : index
    %4 = vector.load %arg2[%c0_2, %c0_3, %c0_4] : memref<4x16x16xf32, #tpu.memory_space<vmem>>, vector<4x16x16xf32>
    %c0_5 = arith.constant 0 : index
    %c0_6 = arith.constant 0 : index
    %c0_7 = arith.constant 0 : index
    %5 = vector.load %arg3[%c0_5, %c0_6, %c0_7] : memref<1x1x128xf32, #tpu.memory_space<vmem>>, vector<1x1x128xf32>
    %6 = vector.shape_cast %5 : vector<1x1x128xf32> to vector<1x128xf32>
    %7 = arith.mulf %3, %3 : vector<32x128xf32>
    %cst = arith.constant dense<0.000000e+00> : vector<32xf32>
    %8 = vector.multi_reduction <add>, %7, %cst [1] : vector<32x128xf32> to vector<32xf32>
    %9 = vector.shape_cast %8 : vector<32xf32> to vector<32x1xf32>
    %cst_8 = arith.constant 1.280000e+02 : f32
    %10 = vector.broadcast %cst_8 : f32 to vector<32x1xf32>
    %11 = arith.divf %9, %10 : vector<32x1xf32>
    %cst_9 = arith.constant 9.99999997E-7 : f32
    %12 = vector.broadcast %cst_9 : f32 to vector<32x1xf32>
    %13 = arith.addf %11, %12 : vector<32x1xf32>
    %14 = math.rsqrt %13 : vector<32x1xf32>
    %15 = vector.broadcast %14 : vector<32x1xf32> to vector<32x128xf32>
    %16 = arith.mulf %3, %15 : vector<32x128xf32>
    %17 = vector.broadcast %6 : vector<1x128xf32> to vector<32x128xf32>
    %18 = arith.mulf %16, %17 : vector<32x128xf32>
    %19 = arith.truncf %18 : vector<32x128xf32> to vector<32x128xbf16>
    %c0_10 = arith.constant 0 : index
    %c0_11 = arith.constant 0 : index
    %c0_12 = arith.constant 0 : index
    %20 = vector.load %arg4[%c0_10, %c0_11, %c0_12] : memref<1x128x384xbf16, #tpu.memory_space<vmem>>, vector<1x128x384xbf16>
    %21 = vector.shape_cast %20 : vector<1x128x384xbf16> to vector<128x384xbf16>
    %cst_13 = arith.constant dense<0.000000e+00> : vector<32x384xf32>
    %22 = tpu.matmul %19, %21, %cst_13 {dimension_numbers = #tpu.dot_dimension_numbers<[1], [0], [0], [1], [0, 0, 1, 1], [], []>} : vector<32x128xbf16>, vector<128x384xbf16>, vector<32x384xf32> -> vector<32x384xf32>
    %23 = arith.truncf %22 : vector<32x384xf32> to vector<32x384xbf16>
    %c0_14 = arith.constant 0 : index
    %c0_15 = arith.constant 0 : index
    %c0_16 = arith.constant 0 : index
    %24 = vector.load %arg5[%c0_14, %c0_15, %c0_16] : memref<1x128x128xbf16, #tpu.memory_space<vmem>>, vector<1x128x128xbf16>
    %25 = vector.shape_cast %24 : vector<1x128x128xbf16> to vector<128x128xbf16>
    %26 = vector.extract_strided_slice %23 {offsets = [0, 0], sizes = [32, 128], strides = [1, 1]} : vector<32x384xbf16> to vector<32x128xbf16>
    %27 = vector.shape_cast %26 : vector<32x128xbf16> to vector<2x16x128xbf16>
    %28 = vector.extract_strided_slice %23 {offsets = [0, 128], sizes = [32, 128], strides = [1, 1]} : vector<32x384xbf16> to vector<32x128xbf16>
    %29 = vector.shape_cast %28 : vector<32x128xbf16> to vector<2x16x128xbf16>
    %30 = vector.extract_strided_slice %23 {offsets = [0, 256], sizes = [32, 128], strides = [1, 1]} : vector<32x384xbf16> to vector<32x128xbf16>
    %31 = vector.shape_cast %30 : vector<32x128xbf16> to vector<2x16x128xbf16>
    %32 = vector.extract_strided_slice %27 {offsets = [0, 0, 0], sizes = [2, 16, 32], strides = [1, 1, 1]} : vector<2x16x128xbf16> to vector<2x16x32xbf16>
    %33 = vector.extract_strided_slice %29 {offsets = [0, 0, 0], sizes = [2, 16, 32], strides = [1, 1, 1]} : vector<2x16x128xbf16> to vector<2x16x32xbf16>
    "tpu.trace_start"() <{level = 10 : i32, message = "bqd,bkd->bqk"}> : () -> ()
    %cst_17 = arith.constant dense<0.000000e+00> : vector<2x16x16xf32>
    %34 = tpu.matmul %32, %33, %cst_17 {dimension_numbers = #tpu.dot_dimension_numbers<[2], [2], [1], [1], [0, 0, 0, 1, 1, 1], [0], [0]>} : vector<2x16x32xbf16>, vector<2x16x32xbf16>, vector<2x16x16xf32> -> vector<2x16x16xf32>
    "tpu.trace_stop"() : () -> ()
    %35 = vector.extract_strided_slice %4 {offsets = [0, 0, 0], sizes = [1, 16, 16], strides = [1, 1, 1]} : vector<4x16x16xf32> to vector<1x16x16xf32>
    %36 = vector.shape_cast %35 : vector<1x16x16xf32> to vector<16x16xf32>
    %37 = vector.shape_cast %36 : vector<16x16xf32> to vector<1x16x16xf32>
    %38 = vector.broadcast %37 : vector<1x16x16xf32> to vector<2x16x16xf32>
    %39 = arith.addf %34, %38 : vector<2x16x16xf32>
    %cst_18 = arith.constant dense<0xFF800000> : vector<2x16xf32>
    %40 = vector.multi_reduction <maximumf>, %39, %cst_18 [2] : vector<2x16x16xf32> to vector<2x16xf32>
    %41 = vector.shape_cast %40 : vector<2x16xf32> to vector<2x16x1xf32>
    %42 = vector.broadcast %41 : vector<2x16x1xf32> to vector<2x16x16xf32>
    %43 = arith.subf %39, %42 : vector<2x16x16xf32>
    %44 = math.exp %43 : vector<2x16x16xf32>
    %cst_19 = arith.constant dense<0.000000e+00> : vector<2x16xf32>
    %45 = vector.multi_reduction <add>, %44, %cst_19 [2] : vector<2x16x16xf32> to vector<2x16xf32>
    %46 = vector.shape_cast %45 : vector<2x16xf32> to vector<2x16x1xf32>
    %47 = vector.broadcast %46 : vector<2x16x1xf32> to vector<2x16x16xf32>
    %48 = arith.divf %44, %47 : vector<2x16x16xf32>
    %49 = arith.truncf %48 : vector<2x16x16xf32> to vector<2x16x16xbf16>
    %50 = vector.extract_strided_slice %31 {offsets = [0, 0, 0], sizes = [2, 16, 32], strides = [1, 1, 1]} : vector<2x16x128xbf16> to vector<2x16x32xbf16>
    "tpu.trace_start"() <{level = 10 : i32, message = "bqk,bkd->bqd"}> : () -> ()
    %cst_20 = arith.constant dense<0.000000e+00> : vector<2x16x32xf32>
    %51 = tpu.matmul %49, %50, %cst_20 {dimension_numbers = #tpu.dot_dimension_numbers<[2], [1], [1], [2], [0, 0, 0, 1, 1, 2], [0], [0]>} : vector<2x16x16xbf16>, vector<2x16x32xbf16>, vector<2x16x32xf32> -> vector<2x16x32xf32>
    "tpu.trace_stop"() : () -> ()
    %52 = vector.extract_strided_slice %27 {offsets = [0, 0, 32], sizes = [2, 16, 32], strides = [1, 1, 1]} : vector<2x16x128xbf16> to vector<2x16x32xbf16>
    %53 = vector.extract_strided_slice %29 {offsets = [0, 0, 32], sizes = [2, 16, 32], strides = [1, 1, 1]} : vector<2x16x128xbf16> to vector<2x16x32xbf16>
    "tpu.trace_start"() <{level = 10 : i32, message = "bqd,bkd->bqk"}> : () -> ()
    %cst_21 = arith.constant dense<0.000000e+00> : vector<2x16x16xf32>
    %54 = tpu.matmul %52, %53, %cst_21 {dimension_numbers = #tpu.dot_dimension_numbers<[2], [2], [1], [1], [0, 0, 0, 1, 1, 1], [0], [0]>} : vector<2x16x32xbf16>, vector<2x16x32xbf16>, vector<2x16x16xf32> -> vector<2x16x16xf32>
    "tpu.trace_stop"() : () -> ()
    %55 = vector.extract_strided_slice %4 {offsets = [1, 0, 0], sizes = [1, 16, 16], strides = [1, 1, 1]} : vector<4x16x16xf32> to vector<1x16x16xf32>
    %56 = vector.shape_cast %55 : vector<1x16x16xf32> to vector<16x16xf32>
    %57 = vector.shape_cast %56 : vector<16x16xf32> to vector<1x16x16xf32>
    %58 = vector.broadcast %57 : vector<1x16x16xf32> to vector<2x16x16xf32>
    %59 = arith.addf %54, %58 : vector<2x16x16xf32>
    %cst_22 = arith.constant dense<0xFF800000> : vector<2x16xf32>
    %60 = vector.multi_reduction <maximumf>, %59, %cst_22 [2] : vector<2x16x16xf32> to vector<2x16xf32>
    %61 = vector.shape_cast %60 : vector<2x16xf32> to vector<2x16x1xf32>
    %62 = vector.broadcast %61 : vector<2x16x1xf32> to vector<2x16x16xf32>
    %63 = arith.subf %59, %62 : vector<2x16x16xf32>
    %64 = math.exp %63 : vector<2x16x16xf32>
    %cst_23 = arith.constant dense<0.000000e+00> : vector<2x16xf32>
    %65 = vector.multi_reduction <add>, %64, %cst_23 [2] : vector<2x16x16xf32> to vector<2x16xf32>
    %66 = vector.shape_cast %65 : vector<2x16xf32> to vector<2x16x1xf32>
    %67 = vector.broadcast %66 : vector<2x16x1xf32> to vector<2x16x16xf32>
    %68 = arith.divf %64, %67 : vector<2x16x16xf32>
    %69 = arith.truncf %68 : vector<2x16x16xf32> to vector<2x16x16xbf16>
    %70 = vector.extract_strided_slice %31 {offsets = [0, 0, 32], sizes = [2, 16, 32], strides = [1, 1, 1]} : vector<2x16x128xbf16> to vector<2x16x32xbf16>
    "tpu.trace_start"() <{level = 10 : i32, message = "bqk,bkd->bqd"}> : () -> ()
    %cst_24 = arith.constant dense<0.000000e+00> : vector<2x16x32xf32>
    %71 = tpu.matmul %69, %70, %cst_24 {dimension_numbers = #tpu.dot_dimension_numbers<[2], [1], [1], [2], [0, 0, 0, 1, 1, 2], [0], [0]>} : vector<2x16x16xbf16>, vector<2x16x32xbf16>, vector<2x16x32xf32> -> vector<2x16x32xf32>
    "tpu.trace_stop"() : () -> ()
    %72 = vector.extract_strided_slice %27 {offsets = [0, 0, 64], sizes = [2, 16, 32], strides = [1, 1, 1]} : vector<2x16x128xbf16> to vector<2x16x32xbf16>
    %73 = vector.extract_strided_slice %29 {offsets = [0, 0, 64], sizes = [2, 16, 32], strides = [1, 1, 1]} : vector<2x16x128xbf16> to vector<2x16x32xbf16>
    "tpu.trace_start"() <{level = 10 : i32, message = "bqd,bkd->bqk"}> : () -> ()
    %cst_25 = arith.constant dense<0.000000e+00> : vector<2x16x16xf32>
    %74 = tpu.matmul %72, %73, %cst_25 {dimension_numbers = #tpu.dot_dimension_numbers<[2], [2], [1], [1], [0, 0, 0, 1, 1, 1], [0], [0]>} : vector<2x16x32xbf16>, vector<2x16x32xbf16>, vector<2x16x16xf32> -> vector<2x16x16xf32>
    "tpu.trace_stop"() : () -> ()
    %75 = vector.extract_strided_slice %4 {offsets = [2, 0, 0], sizes = [1, 16, 16], strides = [1, 1, 1]} : vector<4x16x16xf32> to vector<1x16x16xf32>
    %76 = vector.shape_cast %75 : vector<1x16x16xf32> to vector<16x16xf32>
    %77 = vector.shape_cast %76 : vector<16x16xf32> to vector<1x16x16xf32>
    %78 = vector.broadcast %77 : vector<1x16x16xf32> to vector<2x16x16xf32>
    %79 = arith.addf %74, %78 : vector<2x16x16xf32>
    %cst_26 = arith.constant dense<0xFF800000> : vector<2x16xf32>
    %80 = vector.multi_reduction <maximumf>, %79, %cst_26 [2] : vector<2x16x16xf32> to vector<2x16xf32>
    %81 = vector.shape_cast %80 : vector<2x16xf32> to vector<2x16x1xf32>
    %82 = vector.broadcast %81 : vector<2x16x1xf32> to vector<2x16x16xf32>
    %83 = arith.subf %79, %82 : vector<2x16x16xf32>
    %84 = math.exp %83 : vector<2x16x16xf32>
    %cst_27 = arith.constant dense<0.000000e+00> : vector<2x16xf32>
    %85 = vector.multi_reduction <add>, %84, %cst_27 [2] : vector<2x16x16xf32> to vector<2x16xf32>
    %86 = vector.shape_cast %85 : vector<2x16xf32> to vector<2x16x1xf32>
    %87 = vector.broadcast %86 : vector<2x16x1xf32> to vector<2x16x16xf32>
    %88 = arith.divf %84, %87 : vector<2x16x16xf32>
    %89 = arith.truncf %88 : vector<2x16x16xf32> to vector<2x16x16xbf16>
    %90 = vector.extract_strided_slice %31 {offsets = [0, 0, 64], sizes = [2, 16, 32], strides = [1, 1, 1]} : vector<2x16x128xbf16> to vector<2x16x32xbf16>
    "tpu.trace_start"() <{level = 10 : i32, message = "bqk,bkd->bqd"}> : () -> ()
    %cst_28 = arith.constant dense<0.000000e+00> : vector<2x16x32xf32>
    %91 = tpu.matmul %89, %90, %cst_28 {dimension_numbers = #tpu.dot_dimension_numbers<[2], [1], [1], [2], [0, 0, 0, 1, 1, 2], [0], [0]>} : vector<2x16x16xbf16>, vector<2x16x32xbf16>, vector<2x16x32xf32> -> vector<2x16x32xf32>
    "tpu.trace_stop"() : () -> ()
    %92 = vector.extract_strided_slice %27 {offsets = [0, 0, 96], sizes = [2, 16, 32], strides = [1, 1, 1]} : vector<2x16x128xbf16> to vector<2x16x32xbf16>
    %93 = vector.extract_strided_slice %29 {offsets = [0, 0, 96], sizes = [2, 16, 32], strides = [1, 1, 1]} : vector<2x16x128xbf16> to vector<2x16x32xbf16>
    "tpu.trace_start"() <{level = 10 : i32, message = "bqd,bkd->bqk"}> : () -> ()
    %cst_29 = arith.constant dense<0.000000e+00> : vector<2x16x16xf32>
    %94 = tpu.matmul %92, %93, %cst_29 {dimension_numbers = #tpu.dot_dimension_numbers<[2], [2], [1], [1], [0, 0, 0, 1, 1, 1], [0], [0]>} : vector<2x16x32xbf16>, vector<2x16x32xbf16>, vector<2x16x16xf32> -> vector<2x16x16xf32>
    "tpu.trace_stop"() : () -> ()
    %95 = vector.extract_strided_slice %4 {offsets = [3, 0, 0], sizes = [1, 16, 16], strides = [1, 1, 1]} : vector<4x16x16xf32> to vector<1x16x16xf32>
    %96 = vector.shape_cast %95 : vector<1x16x16xf32> to vector<16x16xf32>
    %97 = vector.shape_cast %96 : vector<16x16xf32> to vector<1x16x16xf32>
    %98 = vector.broadcast %97 : vector<1x16x16xf32> to vector<2x16x16xf32>
    %99 = arith.addf %94, %98 : vector<2x16x16xf32>
    %cst_30 = arith.constant dense<0xFF800000> : vector<2x16xf32>
    %100 = vector.multi_reduction <maximumf>, %99, %cst_30 [2] : vector<2x16x16xf32> to vector<2x16xf32>
    %101 = vector.shape_cast %100 : vector<2x16xf32> to vector<2x16x1xf32>
    %102 = vector.broadcast %101 : vector<2x16x1xf32> to vector<2x16x16xf32>
    %103 = arith.subf %99, %102 : vector<2x16x16xf32>
    %104 = math.exp %103 : vector<2x16x16xf32>
    %cst_31 = arith.constant dense<0.000000e+00> : vector<2x16xf32>
    %105 = vector.multi_reduction <add>, %104, %cst_31 [2] : vector<2x16x16xf32> to vector<2x16xf32>
    %106 = vector.shape_cast %105 : vector<2x16xf32> to vector<2x16x1xf32>
    %107 = vector.broadcast %106 : vector<2x16x1xf32> to vector<2x16x16xf32>
    %108 = arith.divf %104, %107 : vector<2x16x16xf32>
    %109 = arith.truncf %108 : vector<2x16x16xf32> to vector<2x16x16xbf16>
    %110 = vector.extract_strided_slice %31 {offsets = [0, 0, 96], sizes = [2, 16, 32], strides = [1, 1, 1]} : vector<2x16x128xbf16> to vector<2x16x32xbf16>
    "tpu.trace_start"() <{level = 10 : i32, message = "bqk,bkd->bqd"}> : () -> ()
    %cst_32 = arith.constant dense<0.000000e+00> : vector<2x16x32xf32>
    %111 = tpu.matmul %109, %110, %cst_32 {dimension_numbers = #tpu.dot_dimension_numbers<[2], [1], [1], [2], [0, 0, 0, 1, 1, 2], [0], [0]>} : vector<2x16x16xbf16>, vector<2x16x32xbf16>, vector<2x16x32xf32> -> vector<2x16x32xf32>
    "tpu.trace_stop"() : () -> ()
    %112 = tpu.concatenate %51, %71, %91, %111 in 2 : vector<2x16x32xf32>, vector<2x16x32xf32>, vector<2x16x32xf32>, vector<2x16x32xf32> -> vector<2x16x128xf32>
    %113 = vector.shape_cast %112 : vector<2x16x128xf32> to vector<32x128xf32>
    %114 = arith.truncf %113 : vector<32x128xf32> to vector<32x128xbf16>
    %cst_33 = arith.constant dense<0.000000e+00> : vector<32x128xf32>
    %115 = tpu.matmul %114, %25, %cst_33 {dimension_numbers = #tpu.dot_dimension_numbers<[1], [0], [0], [1], [0, 0, 1, 1], [], []>} : vector<32x128xbf16>, vector<128x128xbf16>, vector<32x128xf32> -> vector<32x128xf32>
    %116 = arith.addf %3, %115 : vector<32x128xf32>
    %c0_34 = arith.constant 0 : index
    %c0_35 = arith.constant 0 : index
    %c0_36 = arith.constant 0 : index
    %117 = vector.load %arg6[%c0_34, %c0_35, %c0_36] : memref<1x1x128xf32, #tpu.memory_space<vmem>>, vector<1x1x128xf32>
    %118 = vector.shape_cast %117 : vector<1x1x128xf32> to vector<1x128xf32>
    %119 = arith.mulf %116, %116 : vector<32x128xf32>
    %cst_37 = arith.constant dense<0.000000e+00> : vector<32xf32>
    %120 = vector.multi_reduction <add>, %119, %cst_37 [1] : vector<32x128xf32> to vector<32xf32>
    %121 = vector.shape_cast %120 : vector<32xf32> to vector<32x1xf32>
    %cst_38 = arith.constant 1.280000e+02 : f32
    %122 = vector.broadcast %cst_38 : f32 to vector<32x1xf32>
    %123 = arith.divf %121, %122 : vector<32x1xf32>
    %cst_39 = arith.constant 9.99999997E-7 : f32
    %124 = vector.broadcast %cst_39 : f32 to vector<32x1xf32>
    %125 = arith.addf %123, %124 : vector<32x1xf32>
    %126 = math.rsqrt %125 : vector<32x1xf32>
    %127 = vector.broadcast %126 : vector<32x1xf32> to vector<32x128xf32>
    %128 = arith.mulf %116, %127 : vector<32x128xf32>
    %129 = vector.broadcast %118 : vector<1x128xf32> to vector<32x128xf32>
    %130 = arith.mulf %128, %129 : vector<32x128xf32>
    %131 = arith.truncf %130 : vector<32x128xf32> to vector<32x128xbf16>
    %c0_40 = arith.constant 0 : index
    %c0_41 = arith.constant 0 : index
    %c0_42 = arith.constant 0 : index
    %132 = vector.load %arg7[%c0_40, %c0_41, %c0_42] : memref<1x128x512xbf16, #tpu.memory_space<vmem>>, vector<1x128x512xbf16>
    %133 = vector.shape_cast %132 : vector<1x128x512xbf16> to vector<128x512xbf16>
    %cst_43 = arith.constant dense<0.000000e+00> : vector<32x512xf32>
    %134 = tpu.matmul %131, %133, %cst_43 {dimension_numbers = #tpu.dot_dimension_numbers<[1], [0], [0], [1], [0, 0, 1, 1], [], []>} : vector<32x128xbf16>, vector<128x512xbf16>, vector<32x512xf32> -> vector<32x512xf32>
    %135 = vector.extract_strided_slice %134 {offsets = [0, 0], sizes = [32, 256], strides = [1, 1]} : vector<32x512xf32> to vector<32x256xf32>
    %136 = arith.mulf %135, %135 : vector<32x256xf32>
    %137 = arith.mulf %135, %136 : vector<32x256xf32>
    %cst_44 = arith.constant 4.471500e-02 : f32
    %138 = vector.broadcast %cst_44 : f32 to vector<32x256xf32>
    %139 = arith.mulf %138, %137 : vector<32x256xf32>
    %140 = arith.addf %135, %139 : vector<32x256xf32>
    %cst_45 = arith.constant 0.797884583 : f32
    %141 = vector.broadcast %cst_45 : f32 to vector<32x256xf32>
    %142 = arith.mulf %141, %140 : vector<32x256xf32>
    %143 = math.tanh %142 : vector<32x256xf32>
    %cst_46 = arith.constant 1.000000e+00 : f32
    %144 = vector.broadcast %cst_46 : f32 to vector<32x256xf32>
    %145 = arith.addf %144, %143 : vector<32x256xf32>
    %cst_47 = arith.constant 5.000000e-01 : f32
    %146 = vector.broadcast %cst_47 : f32 to vector<32x256xf32>
    %147 = arith.mulf %146, %145 : vector<32x256xf32>
    %148 = arith.mulf %135, %147 : vector<32x256xf32>
    %149 = vector.extract_strided_slice %134 {offsets = [0, 256], sizes = [32, 256], strides = [1, 1]} : vector<32x512xf32> to vector<32x256xf32>
    %150 = arith.mulf %148, %149 : vector<32x256xf32>
    %151 = arith.truncf %150 : vector<32x256xf32> to vector<32x256xbf16>
    %c0_48 = arith.constant 0 : index
    %c0_49 = arith.constant 0 : index
    %c0_50 = arith.constant 0 : index
    %152 = vector.load %arg8[%c0_48, %c0_49, %c0_50] : memref<1x256x128xbf16, #tpu.memory_space<vmem>>, vector<1x256x128xbf16>
    %153 = vector.shape_cast %152 : vector<1x256x128xbf16> to vector<256x128xbf16>
    %cst_51 = arith.constant dense<0.000000e+00> : vector<32x128xf32>
    %154 = tpu.matmul %151, %153, %cst_51 {dimension_numbers = #tpu.dot_dimension_numbers<[1], [0], [0], [1], [0, 0, 1, 1], [], []>} : vector<32x256xbf16>, vector<256x128xbf16>, vector<32x128xf32> -> vector<32x128xf32>
    %155 = arith.addf %116, %154 : vector<32x128xf32>
    %c0_52 = arith.constant 0 : index
    %c0_53 = arith.constant 0 : index
    %156 = vector.load %arg11[%c0_52, %c0_53] : memref<32x128xf32, #tpu.memory_space<vmem>>, vector<32x128xf32>
    tpu.vector_store %arg11[%c0_52, %c0_53], %155 {strides = array<i32>} : memref<32x128xf32, #tpu.memory_space<vmem>>, vector<32x128xf32>,
    %c1_i32 = arith.constant 1 : i32
    %157 = arith.cmpi eq, %arg0, %c1_i32 : i32
    %158 = arith.extui %157 : i1 to i32
    %c0_i32_54 = arith.constant 0 : i32
    %159 = arith.cmpi ne, %158, %c0_i32_54 : i32
    scf.if %159 {
      %c0_55 = arith.constant 0 : index
      %c0_56 = arith.constant 0 : index
      %160 = vector.load %arg9[%c0_55, %c0_56] : memref<1x128xf32, #tpu.memory_space<vmem>>, vector<1x128xf32>
      %161 = arith.mulf %155, %155 : vector<32x128xf32>
      %cst_57 = arith.constant dense<0.000000e+00> : vector<32xf32>
      %162 = vector.multi_reduction <add>, %161, %cst_57 [1] : vector<32x128xf32> to vector<32xf32>
      %163 = vector.shape_cast %162 : vector<32xf32> to vector<32x1xf32>
      %cst_58 = arith.constant 1.280000e+02 : f32
      %164 = vector.broadcast %cst_58 : f32 to vector<32x1xf32>
      %165 = arith.divf %163, %164 : vector<32x1xf32>
      %cst_59 = arith.constant 9.99999997E-7 : f32
      %166 = vector.broadcast %cst_59 : f32 to vector<32x1xf32>
      %167 = arith.addf %165, %166 : vector<32x1xf32>
      %168 = math.rsqrt %167 : vector<32x1xf32>
      %169 = vector.broadcast %168 : vector<32x1xf32> to vector<32x128xf32>
      %170 = arith.mulf %155, %169 : vector<32x128xf32>
      %171 = vector.broadcast %160 : vector<1x128xf32> to vector<32x128xf32>
      %172 = arith.mulf %170, %171 : vector<32x128xf32>
      %c0_60 = arith.constant 0 : index
      %c0_61 = arith.constant 0 : index
      %173 = vector.load %arg10[%c0_60, %c0_61] : memref<32x128xf32, #tpu.memory_space<vmem>>, vector<32x128xf32>
      tpu.vector_store %arg10[%c0_60, %c0_61], %172 {strides = array<i32>} : memref<32x128xf32, #tpu.memory_space<vmem>>, vector<32x128xf32>,
    } else {
    }
    return
  }
  func.func @transform_0(%arg0: i32) -> (i32, i32) {
    %c0_i32 = arith.constant 0 : i32
    %c0_i32_0 = arith.constant 0 : i32
    %c0_i32_1 = arith.constant 0 : i32
    return %c0_i32, %c0_i32_0 : i32, i32
  }
  func.func @transform_1(%arg0: i32) -> (i32, i32, i32) {
    %c0_i32 = arith.constant 0 : i32
    %c0_i32_0 = arith.constant 0 : i32
    %c0_i32_1 = arith.constant 0 : i32
    %c0_i32_2 = arith.constant 0 : i32
    return %c0_i32, %c0_i32_0, %c0_i32_1 : i32, i32, i32
  }
  func.func @transform_2(%arg0: i32) -> (i32, i32, i32) {
    %c0_i32 = arith.constant 0 : i32
    %c0_i32_0 = arith.constant 0 : i32
    %c0_i32_1 = arith.constant 0 : i32
    return %arg0, %c0_i32, %c0_i32_0 : i32, i32, i32
  }
  func.func @transform_3(%arg0: i32) -> (i32, i32, i32) {
    %c0_i32 = arith.constant 0 : i32
    %c0_i32_0 = arith.constant 0 : i32
    %c0_i32_1 = arith.constant 0 : i32
    return %arg0, %c0_i32, %c0_i32_0 : i32, i32, i32
  }
  func.func @transform_4(%arg0: i32) -> (i32, i32, i32) {
    %c0_i32 = arith.constant 0 : i32
    %c0_i32_0 = arith.constant 0 : i32
    %c0_i32_1 = arith.constant 0 : i32
    return %arg0, %c0_i32, %c0_i32_0 : i32, i32, i32
  }
  func.func @transform_5(%arg0: i32) -> (i32, i32, i32) {
    %c0_i32 = arith.constant 0 : i32
    %c0_i32_0 = arith.constant 0 : i32
    %c0_i32_1 = arith.constant 0 : i32
    return %arg0, %c0_i32, %c0_i32_0 : i32, i32, i32
  }
  func.func @transform_6(%arg0: i32) -> (i32, i32, i32) {
    %c0_i32 = arith.constant 0 : i32
    %c0_i32_0 = arith.constant 0 : i32
    %c0_i32_1 = arith.constant 0 : i32
    return %arg0, %c0_i32, %c0_i32_0 : i32, i32, i32
  }
  func.func @transform_7(%arg0: i32) -> (i32, i32, i32) {
    %c0_i32 = arith.constant 0 : i32
    %c0_i32_0 = arith.constant 0 : i32
    %c0_i32_1 = arith.constant 0 : i32
    return %arg0, %c0_i32, %c0_i32_0 : i32, i32, i32
  }
  func.func @transform_8(%arg0: i32) -> (i32, i32) {
    %c0_i32 = arith.constant 0 : i32
    %c0_i32_0 = arith.constant 0 : i32
    %c0_i32_1 = arith.constant 0 : i32
    return %c0_i32, %c0_i32_0 : i32, i32
  }
  func.func @transform_9(%arg0: i32) -> (i32, i32) {
    %c0_i32 = arith.constant 0 : i32
    %c0_i32_0 = arith.constant 0 : i32
    %c0_i32_1 = arith.constant 0 : i32
    return %c0_i32, %c0_i32_0 : i32, i32
  }
}

</mosaic_0001>

<llo_original>
// kernel: frozen_clip_t5_forward.2
$region0: #{frozen_clip_t5_forward.2}
  #allocation0 [shape = 'u32[]', space=smem, size = 0x4, offset = 0x4, fixed_abs, tag = 'smem constant byte address 0x4 - core index']
  #allocation1 [shape = 'u32[144,128]{1,0:T(1,128)}', space=vmem, size = 0x12000, scoped, tag = 'internal scratch']
  #allocation2 [shape = 'f32[32,128]{1,0:T(8,128)}', space=vmem, size = 0x4000, scoped, tag = 'scratch operand']
  %s0 = inlined_call_operand.vmem [shape: f32[32,128], index: 0, kind: input, shape index: {}]
  %s1 = inlined_call_operand.vmem [shape: f32[2,1,128], index: 1, kind: input, shape index: {}]
  %s2 = inlined_call_operand.vmem [shape: f32[2,1,128], index: 2, kind: input, shape index: {}]
  %s3 = inlined_call_operand.vmem [shape: bf16[2,128,384], index: 3, kind: input, shape index: {}]
  %s4 = inlined_call_operand.vmem [shape: f32[2,1,384], index: 4, kind: input, shape index: {}]
  %s5 = inlined_call_operand.hbm [shape: bf16[2,128,128], index: 5, kind: input, shape index: {}]
  %s6 = inlined_call_operand.vmem [shape: f32[2,1,128], index: 6, kind: input, shape index: {}]
  %s7 = inlined_call_operand.vmem [shape: f32[2,1,128], index: 7, kind: input, shape index: {}]
  %s8 = inlined_call_operand.vmem [shape: f32[2,1,128], index: 8, kind: input, shape index: {}]
  %s9 = inlined_call_operand.hbm [shape: bf16[2,128,256], index: 9, kind: input, shape index: {}]
  %s10 = inlined_call_operand.vmem [shape: f32[2,1,256], index: 10, kind: input, shape index: {}]
  %s11 = inlined_call_operand.hbm [shape: bf16[2,256,128], index: 11, kind: input, shape index: {}]
  %s12 = inlined_call_operand.vmem [shape: f32[2,1,128], index: 12, kind: input, shape index: {}]
  %s13 = inlined_call_operand.vmem [shape: f32[1,128], index: 13, kind: input, shape index: {}]
  %s14 = inlined_call_operand.vmem [shape: f32[1,128], index: 14, kind: input, shape index: {}]
  %s15 = inlined_call_operand.hbm [shape: f32[32,128], index: 15, kind: output, shape index: {}]
  %s16 = sld [smem:[#allocation0]]
  $region113: #{frozen_clip_t5_forward.2} parent=0
    _
  %s18 = ssub.s32 1, %s16
  %s19 = scalar_select 0, %s18, %s16
  $region1: #{frozen_clip_t5_forward.2} parent=0
    #allocation3 [shape = 'u8[65536]{0}', space=vmem, size = 0x10000, scoped, tag = 'input window, operand 5']
    #allocation4 [shape = 's32[2]{0}', space=sflag, size = 0x8, scoped, tag = 'scoped memory for frozen_clip_t5_forward.2']
    #allocation5 [shape = 's32[2]{0}', space=sflag, size = 0x8, scoped, tag = 'scoped memory for frozen_clip_t5_forward.2']
    #allocation6 [shape = 'u8[131072]{0}', space=vmem, size = 0x20000, scoped, tag = 'input window, operand 9']
    #allocation7 [shape = 's32[2]{0}', space=sflag, size = 0x8, scoped, tag = 'scoped memory for frozen_clip_t5_forward.2']
    #allocation8 [shape = 'u8[131072]{0}', space=vmem, size = 0x20000, scoped, tag = 'input window, operand 11']
    #allocation9 [shape = 'u8[16384]{0}', space=vmem, size = 0x4000, scoped, tag = 'output window, operand 0, single buffered']
    %20 = vsyncpa [#allocation4], 0
    %s21 = scalar_lea.sflag [#allocation4], 1
    %22 = vsyncpa %s21, 0
    %23 = vsyncpa [#allocation7], 0
    %s24 = scalar_lea.sflag [#allocation7], 1
    %25 = vsyncpa %s24, 0
    %26 = vsyncpa [#allocation5], 0
    loop: start=0, step=1, limit=4
    $region2: #{frozen_clip_t5_forward.2} parent=1 // loop_pre_header
      _
    $region3: #{frozen_clip_t5_forward.2} parent=1 // loop_header
      %s28 = sphi 0, %s32
      %p29 = scmp.ge.s32.totalorder %s28, 4
      %s36 = sphi 0, %s36
      %s38 = sphi 0, %s36
      %s39 = sphi 0, %s38
      %s53 = sphi 0, %s39
      %s59 = sphi 0, %s61
      %s62 = sphi 0, %s59
      %s63 = sphi 0, %s62
      %s79 = sphi 0, %s63
      %s85 = sphi 0, %s87
      %s88 = sphi 0, %s85
      %s89 = sphi 0, %s88
      %s105 = sphi 0, %s89
      %s111 = sphi 0, %s113
      %s114 = sphi 0, %s111
      %s115 = sphi 0, %s114
      %s131 = sphi 0, %s115
      %s137 = sphi 0, %s139
      %s140 = sphi 0, %s137
      %s141 = sphi 0, %s140
      %s157 = sphi 0, %s141
      %s163 = sphi 0, %s165
      %s166 = sphi 0, %s163
      %s167 = sphi 0, %s166
      %s183 = sphi 0, %s167
      %s189 = sphi 0, %s191
      %s192 = sphi 0, %s189
      %s193 = sphi 0, %s192
      %s209 = sphi 0, %s193
      %s215 = sphi 0, %s217
      %s218 = sphi 0, %s215
      %s219 = sphi 0, %s218
      %s235 = sphi 0, %s219
      %s241 = sphi 0, %s243
      %s244 = sphi 0, %s241
      %s245 = sphi 0, %s244
      %s261 = sphi 0, %s245
      %s267 = sphi 0, %s269
      %s270 = sphi 0, %s267
      %s271 = sphi 0, %s270
      %s287 = sphi 0, %s271
      %s293 = sphi 0, %s295
      %s296 = sphi 0, %s293
      %s297 = sphi 0, %s296
      %s313 = sphi 0, %s297
      %s319 = sphi 0, %s321
      %s322 = sphi 0, %s319
      %s323 = sphi 0, %s322
      %s339 = sphi 0, %s323
      %s345 = sphi 0, %s347
      %s348 = sphi 0, %s345
      %s349 = sphi 0, %s348
      %s365 = sphi 0, %s349
      %s369 = sphi 0, %s369
      %s371 = sphi 0, %s369
      %s372 = sphi 0, %s371
      %s386 = sphi 0, %s372
      %s390 = sphi 0, %s390
      %s392 = sphi 0, %s390
      %s393 = sphi 0, %s392
      %s407 = sphi 0, %s393
      %s411 = sphi 0, %s411
      %s413 = sphi 0, %s411
      %s414 = sphi 0, %s413
      %s428 = sphi 0, %s414
    $region4: #{frozen_clip_t5_forward.2} parent=1 // loop_header_branch
      %31 = sbr.rel (%p29) target = $region8
    $region5: #{frozen_clip_t5_forward.2} parent=1 // loop_body
      %s33 = ssub.s32 %s28, 1
      %s34 = ssub.s32 %s28, 2
      %s35 = sadd.s32 %s28, 1
      %s37 = sadd.s32 %s36, 1
      %p40 = scmp.eq.s32.totalorder %s28, 1
      %p41 = scmp.ne.s32.totalorder %s36, %s38
      %p42 = scmp.eq.s32.totalorder %s28, 0
      %p43 = por %p41, %p42
      %p44 = scmp.ne.s32.totalorder %s36, %s38
      %p45 = scmp.eq.s32.totalorder %s33, 1
      %p46 = por %p44, %p45
      %p47 = scmp.ne.s32.totalorder %s38, %s39
      %p48 = scmp.eq.s32.totalorder %s33, 0
      %p49 = por %p47, %p48
      %p50 = scmp.ne.s32.totalorder %s38, %s39
      %p51 = scmp.eq.s32.totalorder %s34, 1
      %p52 = por %p50, %p51
      %p54 = scmp.ne.s32.totalorder %s39, %s53
      %p55 = scmp.eq.s32.totalorder %s34, 0
      %p56 = por %p54, %p55
      %s57 = ssub.s32 %s28, %s35
      %p58 = scmp.eq.s32.totalorder %s57, 0
      %s60 = sadd.s32 %s59, 1
      %s61 = scalar_select %p58, %s59, %s60
      %p64 = pneg %p58
      %p65 = scmp.eq.s32.totalorder %s28, 1
      %p66 = por %p64, %p65
      %p67 = scmp.ne.s32.totalorder %s59, %s62
      %p68 = scmp.eq.s32.totalorder %s28, 0
      %p69 = por %p67, %p68
      %p70 = scmp.ne.s32.totalorder %s59, %s62
      %p71 = scmp.eq.s32.totalorder %s33, 1
      %p72 = por %p70, %p71
      %p73 = scmp.ne.s32.totalorder %s62, %s63
      %p74 = scmp.eq.s32.totalorder %s33, 0
      %p75 = por %p73, %p74
      %p76 = scmp.ne.s32.totalorder %s62, %s63
      %p77 = scmp.eq.s32.totalorder %s34, 1
      %p78 = por %p76, %p77
      %p80 = scmp.ne.s32.totalorder %s63, %s79
      %p81 = scmp.eq.s32.totalorder %s34, 0
      %p82 = por %p80, %p81
      %s83 = ssub.s32 %s28, %s35
      %p84 = scmp.eq.s32.totalorder %s83, 0
      %s86 = sadd.s32 %s85, 1
      %s87 = scalar_select %p84, %s85, %s86
      %p90 = pneg %p84
      %p91 = scmp.eq.s32.totalorder %s28, 1
      %p92 = por %p90, %p91
      %p93 = scmp.ne.s32.totalorder %s85, %s88
      %p94 = scmp.eq.s32.totalorder %s28, 0
      %p95 = por %p93, %p94
      %p96 = scmp.ne.s32.totalorder %s85, %s88
      %p97 = scmp.eq.s32.totalorder %s33, 1
      %p98 = por %p96, %p97
      %p99 = scmp.ne.s32.totalorder %s88, %s89
      %p100 = scmp.eq.s32.totalorder %s33, 0
      %p101 = por %p99, %p100
      %p102 = scmp.ne.s32.totalorder %s88, %s89
      %p103 = scmp.eq.s32.totalorder %s34, 1
      %p104 = por %p102, %p103
      %p106 = scmp.ne.s32.totalorder %s89, %s105
      %p107 = scmp.eq.s32.totalorder %s34, 0
      %p108 = por %p106, %p107
      %s109 = ssub.s32 %s28, %s35
      %p110 = scmp.eq.s32.totalorder %s109, 0
      %s112 = sadd.s32 %s111, 1
      %s113 = scalar_select %p110, %s111, %s112
      %p116 = pneg %p110
      %p117 = scmp.eq.s32.totalorder %s28, 1
      %p118 = por %p116, %p117
      %p119 = scmp.ne.s32.totalorder %s111, %s114
      %p120 = scmp.eq.s32.totalorder %s28, 0
      %p121 = por %p119, %p120
      %p122 = scmp.ne.s32.totalorder %s111, %s114
      %p123 = scmp.eq.s32.totalorder %s33, 1
      %p124 = por %p122, %p123
      %p125 = scmp.ne.s32.totalorder %s114, %s115
      %p126 = scmp.eq.s32.totalorder %s33, 0
      %p127 = por %p125, %p126
      %p128 = scmp.ne.s32.totalorder %s114, %s115
      %p129 = scmp.eq.s32.totalorder %s34, 1
      %p130 = por %p128, %p129
      %p132 = scmp.ne.s32.totalorder %s115, %s131
      %p133 = scmp.eq.s32.totalorder %s34, 0
      %p134 = por %p132, %p133
      %s135 = ssub.s32 %s28, %s35
      %p136 = scmp.eq.s32.totalorder %s135, 0
      %s138 = sadd.s32 %s137, 1
      %s139 = scalar_select %p136, %s137, %s138
      %p142 = pneg %p136
      %p143 = scmp.eq.s32.totalorder %s28, 1
      %p144 = por %p142, %p143
      %p145 = scmp.ne.s32.totalorder %s137, %s140
      %p146 = scmp.eq.s32.totalorder %s28, 0
      %p147 = por %p145, %p146
      %p148 = scmp.ne.s32.totalorder %s137, %s140
      %p149 = scmp.eq.s32.totalorder %s33, 1
      %p150 = por %p148, %p149
      %p151 = scmp.ne.s32.totalorder %s140, %s141
      %p152 = scmp.eq.s32.totalorder %s33, 0
      %p153 = por %p151, %p152
      %p154 = scmp.ne.s32.totalorder %s140, %s141
      %p155 = scmp.eq.s32.totalorder %s34, 1
      %p156 = por %p154, %p155
      %p158 = scmp.ne.s32.totalorder %s141, %s157
      %p159 = scmp.eq.s32.totalorder %s34, 0
      %p160 = por %p158, %p159
      %s161 = ssub.s32 %s28, %s35
      %p162 = scmp.eq.s32.totalorder %s161, 0
      %s164 = sadd.s32 %s163, 1
      %s165 = scalar_select %p162, %s163, %s164
      %p168 = pneg %p162
      %p169 = scmp.eq.s32.totalorder %s28, 1
      %p170 = por %p168, %p169
      %p171 = scmp.ne.s32.totalorder %s163, %s166
      %p172 = scmp.eq.s32.totalorder %s28, 0
      %p173 = por %p171, %p172
      %p174 = scmp.ne.s32.totalorder %s163, %s166
      %p175 = scmp.eq.s32.totalorder %s33, 1
      %p176 = por %p174, %p175
      %p177 = scmp.ne.s32.totalorder %s166, %s167
      %p178 = scmp.eq.s32.totalorder %s33, 0
      %p179 = por %p177, %p178
      %p180 = scmp.ne.s32.totalorder %s166, %s167
      %p181 = scmp.eq.s32.totalorder %s34, 1
      %p182 = por %p180, %p181
      %p184 = scmp.ne.s32.totalorder %s167, %s183
      %p185 = scmp.eq.s32.totalorder %s34, 0
      %p186 = por %p184, %p185
      %s187 = ssub.s32 %s28, %s35
      %p188 = scmp.eq.s32.totalorder %s187, 0
      %s190 = sadd.s32 %s189, 1
      %s191 = scalar_select %p188, %s189, %s190
      %p194 = pneg %p188
      %p195 = scmp.eq.s32.totalorder %s28, 1
      %p196 = por %p194, %p195
      %p197 = scmp.ne.s32.totalorder %s189, %s192
      %p198 = scmp.eq.s32.totalorder %s28, 0
      %p199 = por %p197, %p198
      %p200 = scmp.ne.s32.totalorder %s189, %s192
      %p201 = scmp.eq.s32.totalorder %s33, 1
      %p202 = por %p200, %p201
      %p203 = scmp.ne.s32.totalorder %s192, %s193
      %p204 = scmp.eq.s32.totalorder %s33, 0
      %p205 = por %p203, %p204
      %p206 = scmp.ne.s32.totalorder %s192, %s193
      %p207 = scmp.eq.s32.totalorder %s34, 1
      %p208 = por %p206, %p207
      %p210 = scmp.ne.s32.totalorder %s193, %s209
      %p211 = scmp.eq.s32.totalorder %s34, 0
      %p212 = por %p210, %p211
      %s213 = ssub.s32 %s28, %s35
      %p214 = scmp.eq.s32.totalorder %s213, 0
      %s216 = sadd.s32 %s215, 1
      %s217 = scalar_select %p214, %s215, %s216
      %p220 = pneg %p214
      %p221 = scmp.eq.s32.totalorder %s28, 1
      %p222 = por %p220, %p221
      %p223 = scmp.ne.s32.totalorder %s215, %s218
      %p224 = scmp.eq.s32.totalorder %s28, 0
      %p225 = por %p223, %p224
      %p226 = scmp.ne.s32.totalorder %s215, %s218
      %p227 = scmp.eq.s32.totalorder %s33, 1
      %p228 = por %p226, %p227
      %p229 = scmp.ne.s32.totalorder %s218, %s219
      %p230 = scmp.eq.s32.totalorder %s33, 0
      %p231 = por %p229, %p230
      %p232 = scmp.ne.s32.totalorder %s218, %s219
      %p233 = scmp.eq.s32.totalorder %s34, 1
      %p234 = por %p232, %p233
      %p236 = scmp.ne.s32.totalorder %s219, %s235
      %p237 = scmp.eq.s32.totalorder %s34, 0
      %p238 = por %p236, %p237
      %s239 = ssub.s32 %s28, %s35
      %p240 = scmp.eq.s32.totalorder %s239, 0
      %s242 = sadd.s32 %s241, 1
      %s243 = scalar_select %p240, %s241, %s242
      %p246 = pneg %p240
      %p247 = scmp.eq.s32.totalorder %s28, 1
      %p248 = por %p246, %p247
      %p249 = scmp.ne.s32.totalorder %s241, %s244
      %p250 = scmp.eq.s32.totalorder %s28, 0
      %p251 = por %p249, %p250
      %p252 = scmp.ne.s32.totalorder %s241, %s244
      %p253 = scmp.eq.s32.totalorder %s33, 1
      %p254 = por %p252, %p253
      %p255 = scmp.ne.s32.totalorder %s244, %s245
      %p256 = scmp.eq.s32.totalorder %s33, 0
      %p257 = por %p255, %p256
      %p258 = scmp.ne.s32.totalorder %s244, %s245
      %p259 = scmp.eq.s32.totalorder %s34, 1
      %p260 = por %p258, %p259
      %p262 = scmp.ne.s32.totalorder %s245, %s261
      %p263 = scmp.eq.s32.totalorder %s34, 0
      %p264 = por %p262, %p263
      %s265 = ssub.s32 %s28, %s35
      %p266 = scmp.eq.s32.totalorder %s265, 0
      %s268 = sadd.s32 %s267, 1
      %s269 = scalar_select %p266, %s267, %s268
      %p272 = pneg %p266
      %p273 = scmp.eq.s32.totalorder %s28, 1
      %p274 = por %p272, %p273
      %p275 = scmp.ne.s32.totalorder %s267, %s270
      %p276 = scmp.eq.s32.totalorder %s28, 0
      %p277 = por %p275, %p276
      %p278 = scmp.ne.s32.totalorder %s267, %s270
      %p279 = scmp.eq.s32.totalorder %s33, 1
      %p280 = por %p278, %p279
      %p281 = scmp.ne.s32.totalorder %s270, %s271
      %p282 = scmp.eq.s32.totalorder %s33, 0
      %p283 = por %p281, %p282
      %p284 = scmp.ne.s32.totalorder %s270, %s271
      %p285 = scmp.eq.s32.totalorder %s34, 1
      %p286 = por %p284, %p285
      %p288 = scmp.ne.s32.totalorder %s271, %s287
      %p289 = scmp.eq.s32.totalorder %s34, 0
      %p290 = por %p288, %p289
      %s291 = ssub.s32 %s28, %s35
      %p292 = scmp.eq.s32.totalorder %s291, 0
      %s294 = sadd.s32 %s293, 1
      %s295 = scalar_select %p292, %s293, %s294
      %p298 = pneg %p292
      %p299 = scmp.eq.s32.totalorder %s28, 1
      %p300 = por %p298, %p299
      %p301 = scmp.ne.s32.totalorder %s293, %s296
      %p302 = scmp.eq.s32.totalorder %s28, 0
      %p303 = por %p301, %p302
      %p304 = scmp.ne.s32.totalorder %s293, %s296
      %p305 = scmp.eq.s32.totalorder %s33, 1
      %p306 = por %p304, %p305
      %p307 = scmp.ne.s32.totalorder %s296, %s297
      %p308 = scmp.eq.s32.totalorder %s33, 0
      %p309 = por %p307, %p308
      %p310 = scmp.ne.s32.totalorder %s296, %s297
      %p311 = scmp.eq.s32.totalorder %s34, 1
      %p312 = por %p310, %p311
      %p314 = scmp.ne.s32.totalorder %s297, %s313
      %p315 = scmp.eq.s32.totalorder %s34, 0
      %p316 = por %p314, %p315
      %s317 = ssub.s32 %s28, %s35
      %p318 = scmp.eq.s32.totalorder %s317, 0
      %s320 = sadd.s32 %s319, 1
      %s321 = scalar_select %p318, %s319, %s320
      %p324 = pneg %p318
      %p325 = scmp.eq.s32.totalorder %s28, 1
      %p326 = por %p324, %p325
      %p327 = scmp.ne.s32.totalorder %s319, %s322
      %p328 = scmp.eq.s32.totalorder %s28, 0
      %p329 = por %p327, %p328
      %p330 = scmp.ne.s32.totalorder %s319, %s322
      %p331 = scmp.eq.s32.totalorder %s33, 1
      %p332 = por %p330, %p331
      %p333 = scmp.ne.s32.totalorder %s322, %s323
      %p334 = scmp.eq.s32.totalorder %s33, 0
      %p335 = por %p333, %p334
      %p336 = scmp.ne.s32.totalorder %s322, %s323
      %p337 = scmp.eq.s32.totalorder %s34, 1
      %p338 = por %p336, %p337
      %p340 = scmp.ne.s32.totalorder %s323, %s339
      %p341 = scmp.eq.s32.totalorder %s34, 0
      %p342 = por %p340, %p341
      %s343 = ssub.s32 %s28, %s35
      %p344 = scmp.eq.s32.totalorder %s343, 0
      %s346 = sadd.s32 %s345, 1
      %s347 = scalar_select %p344, %s345, %s346
      %p350 = pneg %p344
      %p351 = scmp.eq.s32.totalorder %s28, 1
      %p352 = por %p350, %p351
      %p353 = scmp.ne.s32.totalorder %s345, %s348
      %p354 = scmp.eq.s32.totalorder %s28, 0
      %p355 = por %p353, %p354
      %p356 = scmp.ne.s32.totalorder %s345, %s348
      %p357 = scmp.eq.s32.totalorder %s33, 1
      %p358 = por %p356, %p357
      %p359 = scmp.ne.s32.totalorder %s348, %s349
      %p360 = scmp.eq.s32.totalorder %s33, 0
      %p361 = por %p359, %p360
      %p362 = scmp.ne.s32.totalorder %s348, %s349
      %p363 = scmp.eq.s32.totalorder %s34, 1
      %p364 = por %p362, %p363
      %p366 = scmp.ne.s32.totalorder %s349, %s365
      %p367 = scmp.eq.s32.totalorder %s34, 0
      %p368 = por %p366, %p367
      %s370 = sadd.s32 %s369, 1
      %p373 = scmp.eq.s32.totalorder %s28, 1
      %p374 = scmp.ne.s32.totalorder %s369, %s371
      %p375 = scmp.eq.s32.totalorder %s28, 0
      %p376 = por %p374, %p375
      %p377 = scmp.ne.s32.totalorder %s369, %s371
      %p378 = scmp.eq.s32.totalorder %s33, 1
      %p379 = por %p377, %p378
      %p380 = scmp.ne.s32.totalorder %s371, %s372
      %p381 = scmp.eq.s32.totalorder %s33, 0
      %p382 = por %p380, %p381
      %p383 = scmp.ne.s32.totalorder %s371, %s372
      %p384 = scmp.eq.s32.totalorder %s34, 1
      %p385 = por %p383, %p384
      %p387 = scmp.ne.s32.totalorder %s372, %s386
      %p388 = scmp.eq.s32.totalorder %s34, 0
      %p389 = por %p387, %p388
      %s391 = sadd.s32 %s390, 1
      %p394 = scmp.eq.s32.totalorder %s28, 1
      %p395 = scmp.ne.s32.totalorder %s390, %s392
      %p396 = scmp.eq.s32.totalorder %s28, 0
      %p397 = por %p395, %p396
      %p398 = scmp.ne.s32.totalorder %s390, %s392
      %p399 = scmp.eq.s32.totalorder %s33, 1
      %p400 = por %p398, %p399
      %p401 = scmp.ne.s32.totalorder %s392, %s393
      %p402 = scmp.eq.s32.totalorder %s33, 0
      %p403 = por %p401, %p402
      %p404 = scmp.ne.s32.totalorder %s392, %s393
      %p405 = scmp.eq.s32.totalorder %s34, 1
      %p406 = por %p404, %p405
      %p408 = scmp.ne.s32.totalorder %s393, %s407
      %p409 = scmp.eq.s32.totalorder %s34, 0
      %p410 = por %p408, %p409
      %s412 = sadd.s32 %s411, 1
      %p415 = scmp.eq.s32.totalorder %s28, 1
      %p416 = scmp.ne.s32.totalorder %s411, %s413
      %p417 = scmp.eq.s32.totalorder %s28, 0
      %p418 = por %p416, %p417
      %p419 = scmp.ne.s32.totalorder %s411, %s413
      %p420 = scmp.eq.s32.totalorder %s33, 1
      %p421 = por %p419, %p420
      %p422 = scmp.ne.s32.totalorder %s413, %s414
      %p423 = scmp.eq.s32.totalorder %s33, 0
      %p424 = por %p422, %p423
      %p425 = scmp.ne.s32.totalorder %s413, %s414
      %p426 = scmp.eq.s32.totalorder %s34, 1
      %p427 = por %p425, %p426
      %p429 = scmp.ne.s32.totalorder %s414, %s428
      %p430 = scmp.eq.s32.totalorder %s34, 0
      %p431 = por %p429, %p430
      %p432 = scmp.le.s32.totalorder 1, %s28
      %p433 = scmp.lt.s32.totalorder %s28, 3
      %p434 = pnand %p432, %p433
      %p435 = pneg %p434
      // Predicated region
      $region9: #{frozen_clip_t5_forward.2} parent=5 // pred_check
        _
      $region10: #{frozen_clip_t5_forward.2} parent=5 // pred_check_branch
        %437 = sbr.rel (%p434) target = $region12
      $region11: #{frozen_clip_t5_forward.2} parent=5 // pred_region
        %s438 = ssub.s32 %s28, 1
        // Predicated region
        $region13: #{frozen_clip_t5_forward.2} parent=11 // pred_check
          %p439 = pneg %p49
        $region14: #{frozen_clip_t5_forward.2} parent=11 // pred_check_branch
          %441 = sbr.rel (%p439) target = $region16
        $region15: #{frozen_clip_t5_forward.2} parent=11 // pred_region
          _
        $region16: #{frozen_clip_t5_forward.2} parent=11 // pred_fallthru
          _
        // Predicated region
        $region17: #{frozen_clip_t5_forward.2} parent=11 // pred_check
          %p442 = pneg %p382
        $region18: #{frozen_clip_t5_forward.2} parent=11 // pred_check_branch
          %444 = sbr.rel (%p442) target = $region20
        $region19: #{frozen_clip_t5_forward.2} parent=11 // pred_region
          _
        $region20: #{frozen_clip_t5_forward.2} parent=11 // pred_fallthru
          _
        // Predicated region
        $region21: #{frozen_clip_t5_forward.2} parent=11 // pred_check
          %p445 = pneg %p403
        $region22: #{frozen_clip_t5_forward.2} parent=11 // pred_check_branch
          %447 = sbr.rel (%p445) target = $region24
        $region23: #{frozen_clip_t5_forward.2} parent=11 // pred_region
          _
        $region24: #{frozen_clip_t5_forward.2} parent=11 // pred_fallthru
          _
      $region12: #{frozen_clip_t5_forward.2} parent=5 // pred_fallthru
        _
      %p448 = scmp.lt.s32.totalorder %s28, 2
      // Predicated region
      $region25: #{frozen_clip_t5_forward.2} parent=5 // pred_check
        %p449 = pneg %p448
      $region26: #{frozen_clip_t5_forward.2} parent=5 // pred_check_branch
        %451 = sbr.rel (%p449) target = $region28
      $region27: #{frozen_clip_t5_forward.2} parent=5 // pred_region
        // Predicated region
        $region29: #{frozen_clip_t5_forward.2} parent=27 // pred_check
          %p452 = pneg %p69
        $region30: #{frozen_clip_t5_forward.2} parent=27 // pred_check_branch
          %454 = sbr.rel (%p452) target = $region32
        $region31: #{frozen_clip_t5_forward.2} parent=27 // pred_region
          %p455 = scmp.lt.s32.totalorder %s28, 1
          %s456 = scalar_select %p455, %s28, 1
          %s457 = scalar_lea.vmem %s1, %s456
        $region32: #{frozen_clip_t5_forward.2} parent=27 // pred_fallthru
          _
        // Predicated region
        $region33: #{frozen_clip_t5_forward.2} parent=27 // pred_check
          %p458 = pneg %p95
        $region34: #{frozen_clip_t5_forward.2} parent=27 // pred_check_branch
          %460 = sbr.rel (%p458) target = $region36
        $region35: #{frozen_clip_t5_forward.2} parent=27 // pred_region
          %p461 = scmp.lt.s32.totalorder %s28, 1
          %s462 = scalar_select %p461, %s28, 1
          %s463 = scalar_lea.vmem %s2, %s462
        $region36: #{frozen_clip_t5_forward.2} parent=27 // pred_fallthru
          _
        // Predicated region
        $region37: #{frozen_clip_t5_forward.2} parent=27 // pred_check
          %p464 = pneg %p121
        $region38: #{frozen_clip_t5_forward.2} parent=27 // pred_check_branch
          %466 = sbr.rel (%p464) target = $region40
        $region39: #{frozen_clip_t5_forward.2} parent=27 // pred_region
          %p467 = scmp.lt.s32.totalorder %s28, 1
          %s468 = scalar_select %p467, %s28, 1
          %s469 = smul.addr %s468, 48
          %s470 = smul.addr %s469, 4
          %s471 = scalar_lea.vmem %s3, %s470
        $region40: #{frozen_clip_t5_forward.2} parent=27 // pred_fallthru
          _
        // Predicated region
        $region41: #{frozen_clip_t5_forward.2} parent=27 // pred_check
          %p472 = pneg %p147
        $region42: #{frozen_clip_t5_forward.2} parent=27 // pred_check_branch
          %474 = sbr.rel (%p472) target = $region44
        $region43: #{frozen_clip_t5_forward.2} parent=27 // pred_region
          %p475 = scmp.lt.s32.totalorder %s28, 1
          %s476 = scalar_select %p475, %s28, 1
          %s477 = smul.addr %s476, 3
          %s478 = scalar_lea.vmem %s4, %s477
        $region44: #{frozen_clip_t5_forward.2} parent=27 // pred_fallthru
          _
        // Predicated region
        $region45: #{frozen_clip_t5_forward.2} parent=27 // pred_check
          %p479 = pneg %p173
        $region46: #{frozen_clip_t5_forward.2} parent=27 // pred_check_branch
          %481 = sbr.rel (%p479) target = $region48
        $region47: #{frozen_clip_t5_forward.2} parent=27 // pred_region
          %s482 = sand.u32 %s163, 1
          %s483 = scalar_lea.sflag [#allocation4], %s482
          %s484 = sand.u32 %s163, 1
          %s485 = smul.addr %s484, 64
          %s486 = scalar_lea.vmem [#allocation3], %s485
          %s488 = ssub.s32 1024, 1024
          %489 = vsyncadd %s483, %s488
          %s490 = smul.addr %s28, 16
          %s491 = smul.addr %s490, 64
          %s492 = scalar_lea.hbm %s5, %s491
          %s493 = sshll.u32 %s486, 4
          %s494 = int_to_ptr.vmem [resolvable:$true] %s493
          %499 = dma.hbm_to_vmem [thread:$0]  %s492, 1024, %s494, %s483, 64, 64, 4
        $region48: #{frozen_clip_t5_forward.2} parent=27 // pred_fallthru
          _
        // Predicated region
        $region49: #{frozen_clip_t5_forward.2} parent=27 // pred_check
          %p500 = pneg %p199
        $region50: #{frozen_clip_t5_forward.2} parent=27 // pred_check_branch
          %502 = sbr.rel (%p500) target = $region52
        $region51: #{frozen_clip_t5_forward.2} parent=27 // pred_region
          %p503 = scmp.lt.s32.totalorder %s28, 1
          %s504 = scalar_select %p503, %s28, 1
          %s505 = scalar_lea.vmem %s6, %s504
        $region52: #{frozen_clip_t5_forward.2} parent=27 // pred_fallthru
          _
        // Predicated region
        $region53: #{frozen_clip_t5_forward.2} parent=27 // pred_check
          %p506 = pneg %p225
        $region54: #{frozen_clip_t5_forward.2} parent=27 // pred_check_branch
          %508 = sbr.rel (%p506) target = $region56
        $region55: #{frozen_clip_t5_forward.2} parent=27 // pred_region
          %p509 = scmp.lt.s32.totalorder %s28, 1
          %s510 = scalar_select %p509, %s28, 1
          %s511 = scalar_lea.vmem %s7, %s510
        $region56: #{frozen_clip_t5_forward.2} parent=27 // pred_fallthru
          _
        // Predicated region
        $region57: #{frozen_clip_t5_forward.2} parent=27 // pred_check
          %p512 = pneg %p251
        $region58: #{frozen_clip_t5_forward.2} parent=27 // pred_check_branch
          %514 = sbr.rel (%p512) target = $region60
        $region59: #{frozen_clip_t5_forward.2} parent=27 // pred_region
          %p515 = scmp.lt.s32.totalorder %s28, 1
          %s516 = scalar_select %p515, %s28, 1
          %s517 = scalar_lea.vmem %s8, %s516
        $region60: #{frozen_clip_t5_forward.2} parent=27 // pred_fallthru
          _
        // Predicated region
        $region61: #{frozen_clip_t5_forward.2} parent=27 // pred_check
          %p518 = pneg %p277
        $region62: #{frozen_clip_t5_forward.2} parent=27 // pred_check_branch
          %520 = sbr.rel (%p518) target = $region64
        $region63: #{frozen_clip_t5_forward.2} parent=27 // pred_region
          %s521 = sand.u32 %s28, 1
          %s522 = scalar_lea.sflag [#allocation7], %s521
          %s523 = sand.u32 %s267, 1
          %s524 = smul.addr %s523, 128
          %s525 = scalar_lea.vmem [#allocation6], %s524
          %s527 = ssub.s32 2048, 2048
          %528 = vsyncadd %s522, %s527
          %s529 = smul.addr %s28, 32
          %s530 = smul.addr %s529, 64
          %s531 = scalar_lea.hbm %s9, %s530
          %s532 = sshll.u32 %s525, 4
          %s533 = int_to_ptr.vmem [resolvable:$true] %s532
          %538 = dma.hbm_to_vmem [thread:$0]  %s531, 2048, %s533, %s522, 128, 128, 8
        $region64: #{frozen_clip_t5_forward.2} parent=27 // pred_fallthru
          _
        // Predicated region
        $region65: #{frozen_clip_t5_forward.2} parent=27 // pred_check
          %p539 = pneg %p303
        $region66: #{frozen_clip_t5_forward.2} parent=27 // pred_check_branch
          %541 = sbr.rel (%p539) target = $region68
        $region67: #{frozen_clip_t5_forward.2} parent=27 // pred_region
          %p542 = scmp.lt.s32.totalorder %s28, 1
          %s543 = scalar_select %p542, %s28, 1
          %s544 = smul.addr %s543, 2
          %s545 = scalar_lea.vmem %s10, %s544
        $region68: #{frozen_clip_t5_forward.2} parent=27 // pred_fallthru
          _
        // Predicated region
        $region69: #{frozen_clip_t5_forward.2} parent=27 // pred_check
          %p546 = pneg %p329
        $region70: #{frozen_clip_t5_forward.2} parent=27 // pred_check_branch
          %548 = sbr.rel (%p546) target = $region72
        $region71: #{frozen_clip_t5_forward.2} parent=27 // pred_region
          %s549 = sand.u32 %s28, 1
          %s550 = scalar_lea.sflag [#allocation7], %s549
          %s551 = sand.u32 %s319, 1
          %s552 = smul.addr %s551, 128
          %s553 = scalar_lea.vmem [#allocation8], %s552
          %s555 = ssub.s32 2048, 2048
          %556 = vsyncadd %s550, %s555
          %s557 = smul.addr %s28, 32
          %s558 = smul.addr %s557, 64
          %s559 = scalar_lea.hbm %s11, %s558
          %s560 = sshll.u32 %s553, 4
          %s561 = int_to_ptr.vmem [resolvable:$true] %s560
          %566 = dma.hbm_to_vmem [thread:$0]  %s559, 2048, %s561, %s550, 64, 64, 4
        $region72: #{frozen_clip_t5_forward.2} parent=27 // pred_fallthru
          _
        // Predicated region
        $region73: #{frozen_clip_t5_forward.2} parent=27 // pred_check
          %p567 = pneg %p355
        $region74: #{frozen_clip_t5_forward.2} parent=27 // pred_check_branch
          %569 = sbr.rel (%p567) target = $region76
        $region75: #{frozen_clip_t5_forward.2} parent=27 // pred_region
          %p570 = scmp.lt.s32.totalorder %s28, 1
          %s571 = scalar_select %p570, %s28, 1
          %s572 = scalar_lea.vmem %s12, %s571
        $region76: #{frozen_clip_t5_forward.2} parent=27 // pred_fallthru
          _
      $region28: #{frozen_clip_t5_forward.2} parent=5 // pred_fallthru
        _
      %p573 = scmp.le.s32.totalorder 1, %s28
      %p574 = scmp.lt.s32.totalorder %s28, 3
      %p575 = pnand %p573, %p574
      %p576 = pneg %p575
      // Predicated region
      $region77: #{frozen_clip_t5_forward.2} parent=5 // pred_check
        _
      $region78: #{frozen_clip_t5_forward.2} parent=5 // pred_check_branch
        %578 = sbr.rel (%p575) target = $region80
      $region79: #{frozen_clip_t5_forward.2} parent=5 // pred_region
        %s579 = ssub.s32 %s28, 1
        %s580 = sand.u32 %s166, 1
        %s581 = scalar_lea.sflag [#allocation4], %s580
        %s582 = sand.u32 %s166, 1
        %s583 = smul.addr %s582, 64
        %s584 = scalar_lea.vmem [#allocation3], %s583
        // Predicated region
        $region81: #{frozen_clip_t5_forward.2} parent=79 // pred_check
          %p585 = pneg %p179
        $region82: #{frozen_clip_t5_forward.2} parent=79 // pred_check_branch
          %587 = sbr.rel (%p585) target = $region84
        $region83: #{frozen_clip_t5_forward.2} parent=79 // pred_region
          %588 = dma.done %s581, 1024
        $region84: #{frozen_clip_t5_forward.2} parent=79 // pred_fallthru
          _
        %s589 = sand.u32 %s33, 1
        %s590 = scalar_lea.sflag [#allocation7], %s589
        %s591 = sand.u32 %s270, 1
        %s592 = smul.addr %s591, 128
        %s593 = scalar_lea.vmem [#allocation6], %s592
        // Predicated region
        $region85: #{frozen_clip_t5_forward.2} parent=79 // pred_check
          %p594 = pneg %p283
        $region86: #{frozen_clip_t5_forward.2} parent=79 // pred_check_branch
          %596 = sbr.rel (%p594) target = $region88
        $region87: #{frozen_clip_t5_forward.2} parent=79 // pred_region
          %597 = dma.done %s590, 2048
        $region88: #{frozen_clip_t5_forward.2} parent=79 // pred_fallthru
          _
        %s598 = sand.u32 %s33, 1
        %s599 = scalar_lea.sflag [#allocation7], %s598
        %s600 = sand.u32 %s322, 1
        %s601 = smul.addr %s600, 128
        %s602 = scalar_lea.vmem [#allocation8], %s601
        // Predicated region
        $region89: #{frozen_clip_t5_forward.2} parent=79 // pred_check
          %p603 = pneg %p335
        $region90: #{frozen_clip_t5_forward.2} parent=79 // pred_check_branch
          %605 = sbr.rel (%p603) target = $region92
        $region91: #{frozen_clip_t5_forward.2} parent=79 // pred_region
          %606 = dma.done %s599, 2048
        $region92: #{frozen_clip_t5_forward.2} parent=79 // pred_fallthru
          _
        %p607 = pneg %p49
        %p608 = pneg %p46
        %p609 = scmp.lt.s32.totalorder %s33, 1
        %s610 = scalar_select %p609, %s33, 1
        %s611 = scalar_lea.vmem %s1, %s610
        %p612 = pneg %p75
        %p613 = pneg %p72
        %p614 = scmp.lt.s32.totalorder %s33, 1
        %s615 = scalar_select %p614, %s33, 1
        %s616 = scalar_lea.vmem %s2, %s615
        %p617 = pneg %p101
        %p618 = pneg %p98
        %p619 = scmp.lt.s32.totalorder %s33, 1
        %s620 = scalar_select %p619, %s33, 1
        %s621 = smul.addr %s620, 48
        %s622 = smul.addr %s621, 4
        %s623 = scalar_lea.vmem %s3, %s622
        %p624 = pneg %p127
        %p625 = pneg %p124
        %p626 = scmp.lt.s32.totalorder %s33, 1
        %s627 = scalar_select %p626, %s33, 1
        %s628 = smul.addr %s627, 3
        %s629 = scalar_lea.vmem %s4, %s628
        %p630 = pneg %p153
        %p631 = pneg %p150
        %s632 = sand.u32 %s166, 1
        %s633 = scalar_lea.sflag [#allocation4], %s632
        %s634 = sand.u32 %s166, 1
        %s635 = smul.addr %s634, 64
        %s636 = scalar_lea.vmem [#allocation3], %s635
        %p637 = pneg %p179
        %p638 = pneg %p176
        %p639 = scmp.lt.s32.totalorder %s33, 1
        %s640 = scalar_select %p639, %s33, 1
        %s641 = scalar_lea.vmem %s6, %s640
        %p642 = pneg %p205
        %p643 = pneg %p202
        %p644 = scmp.lt.s32.totalorder %s33, 1
        %s645 = scalar_select %p644, %s33, 1
        %s646 = scalar_lea.vmem %s7, %s645
        %p647 = pneg %p231
        %p648 = pneg %p228
        %p649 = scmp.lt.s32.totalorder %s33, 1
        %s650 = scalar_select %p649, %s33, 1
        %s651 = scalar_lea.vmem %s8, %s650
        %p652 = pneg %p257
        %p653 = pneg %p254
        %s654 = sand.u32 %s33, 1
        %s655 = scalar_lea.sflag [#allocation7], %s654
        %s656 = sand.u32 %s270, 1
        %s657 = smul.addr %s656, 128
        %s658 = scalar_lea.vmem [#allocation6], %s657
        %p659 = pneg %p283
        %p660 = pneg %p280
        %p661 = scmp.lt.s32.totalorder %s33, 1
        %s662 = scalar_select %p661, %s33, 1
        %s663 = smul.addr %s662, 2
        %s664 = scalar_lea.vmem %s10, %s663
        %p665 = pneg %p309
        %p666 = pneg %p306
        %s667 = sand.u32 %s33, 1
        %s668 = scalar_lea.sflag [#allocation7], %s667
        %s669 = sand.u32 %s322, 1
        %s670 = smul.addr %s669, 128
        %s671 = scalar_lea.vmem [#allocation8], %s670
        %p672 = pneg %p335
        %p673 = pneg %p332
        %p674 = scmp.lt.s32.totalorder %s33, 1
        %s675 = scalar_select %p674, %s33, 1
        %s676 = scalar_lea.vmem %s12, %s675
        %p677 = pneg %p361
        %p678 = pneg %p358
        %p679 = pneg %p382
        %p680 = pneg %p379
        %p681 = pneg %p403
        %p682 = pneg %p400
        %p683 = pneg %p424
        %p684 = pneg %p421
        %p685 = scmp.lt.s32.totalorder %s33, 1
        %s686 = scalar_select %p685, %s33, 1
        %s687 = scalar_lea.vmem %s1, %s686
        %p688 = scmp.lt.s32.totalorder %s33, 1
        %s689 = scalar_select %p688, %s33, 1
        %s690 = scalar_lea.vmem %s2, %s689
        %p691 = scmp.lt.s32.totalorder %s33, 1
        %s692 = scalar_select %p691, %s33, 1
        %s693 = smul.addr %s692, 48
        %s694 = smul.addr %s693, 4
        %s695 = scalar_lea.vmem %s3, %s694
        %p696 = scmp.lt.s32.totalorder %s33, 1
        %s697 = scalar_select %p696, %s33, 1
        %s698 = smul.addr %s697, 3
        %s699 = scalar_lea.vmem %s4, %s698
        %p700 = scmp.lt.s32.totalorder %s33, 1
        %s701 = scalar_select %p700, %s33, 1
        %s702 = scalar_lea.vmem %s6, %s701
        %p703 = scmp.lt.s32.totalorder %s33, 1
        %s704 = scalar_select %p703, %s33, 1
        %s705 = scalar_lea.vmem %s7, %s704
        %p706 = scmp.lt.s32.totalorder %s33, 1
        %s707 = scalar_select %p706, %s33, 1
        %s708 = scalar_lea.vmem %s8, %s707
        %p709 = scmp.lt.s32.totalorder %s33, 1
        %s710 = scalar_select %p709, %s33, 1
        %s711 = smul.addr %s710, 2
        %s712 = scalar_lea.vmem %s10, %s711
        %p713 = scmp.lt.s32.totalorder %s33, 1
        %s714 = scalar_select %p713, %s33, 1
        %s715 = scalar_lea.vmem %s12, %s714
        %p717 = scmp.eq.s32.totalorder %s33, 0
        // Predicated region
        $region93: #{frozen_clip_t5_forward.2} parent=79 // pred_check
          %p718 = pneg %p717
        $region94: #{frozen_clip_t5_forward.2} parent=79 // pred_check_branch
          %720 = sbr.rel (%p718) target = $region96
        $region95: #{frozen_clip_t5_forward.2} parent=79 // pred_region
          %v721 = vld [vmem:[%s0] sm:$0xff]
          %v722 = vld [vmem:[%s0 + $0x8] sm:$0xff]
          %v723 = vld [vmem:[%s0 + $0x10] sm:$0xff]
          %v724 = vld [vmem:[%s0 + $0x18] sm:$0xff]
          %725 = vst [vmem:[#allocation2] sm:$0xff] %v721
          %726 = vst [vmem:[#allocation2 + $0x8] sm:$0xff] %v722
          %727 = vst [vmem:[#allocation2 + $0x10] sm:$0xff] %v723
          %728 = vst [vmem:[#allocation2 + $0x18] sm:$0xff] %v724
        $region96: #{frozen_clip_t5_forward.2} parent=79 // pred_fallthru
          _
        %v729 = vld [vmem:[#allocation2] sm:$0xff]
        %v730 = vld [vmem:[#allocation2 + $0x8] sm:$0xff]
        %v731 = vld [vmem:[#allocation2 + $0x10] sm:$0xff]
        %v732 = vld [vmem:[#allocation2 + $0x18] sm:$0xff]
        %v733 = vlaneseq
        %v734 = vshrl.u32 %v733, 7
        %v735 = vadd.s32 %v734, 8
        %v736 = vlaneseq
        %v737 = vand.u32 %v736, 127
        %vm738 = vcmp.le.s32.totalorder %v737, %v734
        %vm739 = vcmp.le.s32.totalorder %v737, %v735
        %v740 = vsel %vm738, 0.0, -1e+09
        %v741 = vsel %vm739, 0.0, -1e+09
        %v742 = vld [vmem:[%s687] sm:$0x1]
        %v743 = vld [vmem:[%s690] sm:$0x1]
        %744 = vadd.xlane.f32.xlu0 %v729
        %v745 = vpop.xlane.xlu0 %744
        %746 = vadd.xlane.f32.xlu0 %v730
        %v747 = vpop.xlane.xlu0 %746
        %748 = vadd.xlane.f32.xlu0 %v731
        %v749 = vpop.xlane.xlu0 %748
        %750 = vadd.xlane.f32.xlu0 %v732
        %v751 = vpop.xlane.xlu0 %750
        %v752 = vrcp.pop 128.0
        %v753 = vmul.f32 %v745, %v752
        %v754 = vmul.f32 %v747, %v752
        %v755 = vmul.f32 %v749, %v752
        %v756 = vmul.f32 %v751, %v752
        %v757 = vsub.f32 %v729, %v753
        %v758 = vsub.f32 %v730, %v754
        %v759 = vsub.f32 %v731, %v755
        %v760 = vsub.f32 %v732, %v756
        %v761 = vmul.f32 %v757, %v757
        %v762 = vmul.f32 %v758, %v758
        %v763 = vmul.f32 %v759, %v759
        %v764 = vmul.f32 %v760, %v760
        %765 = vadd.xlane.f32.xlu0 %v761
        %v766 = vpop.xlane.xlu0 %765
        %767 = vadd.xlane.f32.xlu0 %v762
        %v768 = vpop.xlane.xlu0 %767
        %769 = vadd.xlane.f32.xlu0 %v763
        %v770 = vpop.xlane.xlu0 %769
        %771 = vadd.xlane.f32.xlu0 %v764
        %v772 = vpop.xlane.xlu0 %771
        %v773 = vmul.f32 %v766, %v752
        %v774 = vmul.f32 %v768, %v752
        %v775 = vmul.f32 %v770, %v752
        %v776 = vmul.f32 %v772, %v752
        %v777 = vadd.f32 %v773, 1e-05
        %v778 = vadd.f32 %v774, 1e-05
        %v779 = vadd.f32 %v775, 1e-05
        %v780 = vadd.f32 %v776, 1e-05
        %v781 = vrsqrt.pop %v777
        %v782 = vrsqrt.pop %v778
        %v783 = vrsqrt.pop %v779
        %v784 = vrsqrt.pop %v780
        %v785 = vmul.f32 %v757, %v781
        %v786 = vmul.f32 %v758, %v782
        %v787 = vmul.f32 %v759, %v783
        %v788 = vmul.f32 %v760, %v784
        %v790 = vlaneseq
        %v791 = vshrl.u32 %v790, 7
        %v792 = vsub.s32 0, %v791
        %v793 = vrot.slane %v742, %v792
        %v795 = vmul.f32 %v785, %v793
        %v796 = vmul.f32 %v786, %v793
        %v797 = vmul.f32 %v787, %v793
        %v798 = vmul.f32 %v788, %v793
        %v800 = vlaneseq
        %v801 = vshrl.u32 %v800, 7
        %v802 = vsub.s32 0, %v801
        %v803 = vrot.slane %v743, %v802
        %v805 = vadd.f32 %v795, %v803
        %v806 = vadd.f32 %v796, %v803
        %v807 = vadd.f32 %v797, %v803
        %v808 = vadd.f32 %v798, %v803
        %v809 = vpack.c.bf16 %v806, %v805
        %v810 = vpack.c.bf16 %v808, %v807
        %v811 = vld [vmem:[%s695] sm:$0xff]
        %v812 = vld [vmem:[%s695 + $0x8] sm:$0xf]
        %v813 = vld [vmem:[%s695 + $0xc] sm:$0xff]
        %v814 = vld [vmem:[%s695 + $0x14] sm:$0xf]
        %v815 = vld [vmem:[%s695 + $0x18] sm:$0xff]
        %v816 = vld [vmem:[%s695 + $0x20] sm:$0xf]
        %v817 = vld [vmem:[%s695 + $0x24] sm:$0xff]
        %v818 = vld [vmem:[%s695 + $0x2c] sm:$0xf]
        %v819 = vld [vmem:[%s695 + $0x30] sm:$0xff]
        %v820 = vld [vmem:[%s695 + $0x38] sm:$0xf]
        %v821 = vld [vmem:[%s695 + $0x3c] sm:$0xff]
        %v822 = vld [vmem:[%s695 + $0x44] sm:$0xf]
        %v823 = vld [vmem:[%s695 + $0x48] sm:$0xff]
        %v824 = vld [vmem:[%s695 + $0x50] sm:$0xf]
        %v825 = vld [vmem:[%s695 + $0x54] sm:$0xff]
        %v826 = vld [vmem:[%s695 + $0x5c] sm:$0xf]
        %v827 = vld [vmem:[%s695 + $0x60] sm:$0xff]
        %v828 = vld [vmem:[%s695 + $0x68] sm:$0xf]
        %v829 = vld [vmem:[%s695 + $0x6c] sm:$0xff]
        %v830 = vld [vmem:[%s695 + $0x74] sm:$0xf]
        %v831 = vld [vmem:[%s695 + $0x78] sm:$0xff]
        %v832 = vld [vmem:[%s695 + $0x80] sm:$0xf]
        %v833 = vld [vmem:[%s695 + $0x84] sm:$0xff]
        %v834 = vld [vmem:[%s695 + $0x8c] sm:$0xf]
        %v835 = vld [vmem:[%s695 + $0x90] sm:$0xff]
        %v836 = vld [vmem:[%s695 + $0x98] sm:$0xf]
        %v837 = vld [vmem:[%s695 + $0x9c] sm:$0xff]
        %v838 = vld [vmem:[%s695 + $0xa4] sm:$0xf]
        %v839 = vld [vmem:[%s695 + $0xa8] sm:$0xff]
        %v840 = vld [vmem:[%s695 + $0xb0] sm:$0xf]
        %v841 = vld [vmem:[%s695 + $0xb4] sm:$0xff]
        %v842 = vld [vmem:[%s695 + $0xbc] sm:$0xf]
        %v843 = vld [vmem:[%s699] sm:$0x7]
        %v845 = vlaneseq
        %v846 = vshrl.u32 %v845, 7
        %v847 = vsub.s32 0, %v846
        %v848 = vrot.slane %v843, %v847
        %v849 = vlaneseq
        %v850 = vshrl.u32 %v849, 7
        %v851 = vsub.s32 1, %v850
        %v852 = vrot.slane %v843, %v851
        %v853 = vlaneseq
        %v854 = vshrl.u32 %v853, 7
        %v855 = vsub.s32 2, %v854
        %v856 = vrot.slane %v843, %v855
        %v892 = vunpack.c.l.b16 %v811
        %v893 = vunpack.c.h.b16 %v811
        %v894 = vunpack.c.l.b16 %v812
        %v895 = vunpack.c.l.b16 %v813
        %v896 = vunpack.c.h.b16 %v813
        %v897 = vunpack.c.l.b16 %v814
        %v898 = vunpack.c.l.b16 %v815
        %v899 = vunpack.c.h.b16 %v815
        %v900 = vunpack.c.l.b16 %v816
        %v901 = vunpack.c.l.b16 %v817
        %v902 = vunpack.c.h.b16 %v817
        %v903 = vunpack.c.l.b16 %v818
        %v904 = vunpack.c.l.b16 %v819
        %v905 = vunpack.c.h.b16 %v819
        %v906 = vunpack.c.l.b16 %v820
        %v907 = vunpack.c.l.b16 %v821
        %v908 = vunpack.c.h.b16 %v821
        %v909 = vunpack.c.l.b16 %v822
        %v910 = vunpack.c.l.b16 %v823
        %v911 = vunpack.c.h.b16 %v823
        %v912 = vunpack.c.l.b16 %v824
        %v913 = vunpack.c.l.b16 %v825
        %v914 = vunpack.c.h.b16 %v825
        %v915 = vunpack.c.l.b16 %v826
        %v916 = vunpack.c.l.b16 %v827
        %v917 = vunpack.c.h.b16 %v827
        %v918 = vunpack.c.l.b16 %v828
        %v919 = vunpack.c.l.b16 %v829
        %v920 = vunpack.c.h.b16 %v829
        %v921 = vunpack.c.l.b16 %v830
        %v922 = vunpack.c.l.b16 %v831
        %v923 = vunpack.c.h.b16 %v831
        %v924 = vunpack.c.l.b16 %v832
        %v925 = vunpack.c.l.b16 %v833
        %v926 = vunpack.c.h.b16 %v833
        %v927 = vunpack.c.l.b16 %v834
        %v928 = vunpack.c.l.b16 %v835
        %v929 = vunpack.c.h.b16 %v835
        %v930 = vunpack.c.l.b16 %v836
        %v931 = vunpack.c.l.b16 %v837
        %v932 = vunpack.c.h.b16 %v837
        %v933 = vunpack.c.l.b16 %v838
        %v934 = vunpack.c.l.b16 %v839
        %v935 = vunpack.c.h.b16 %v839
        %v936 = vunpack.c.l.b16 %v840
        %v937 = vunpack.c.l.b16 %v841
        %v938 = vunpack.c.h.b16 %v841
        %v939 = vunpack.c.l.b16 %v842
        %v940 = vpack.c.b16 %v895, %v892
        %v941 = vpack.c.b16 %v896, %v893
        %v942 = vpack.c.b16 %v897, %v894
        %v943 = vpack.c.b16 %v901, %v898
        %v944 = vpack.c.b16 %v902, %v899
        %v945 = vpack.c.b16 %v903, %v900
        %v946 = vpack.c.b16 %v907, %v904
        %v947 = vpack.c.b16 %v908, %v905
        %v948 = vpack.c.b16 %v909, %v906
        %v949 = vpack.c.b16 %v913, %v910
        %v950 = vpack.c.b16 %v914, %v911
        %v951 = vpack.c.b16 %v915, %v912
        %v952 = vpack.c.b16 %v919, %v916
        %v953 = vpack.c.b16 %v920, %v917
        %v954 = vpack.c.b16 %v921, %v918
        %v955 = vpack.c.b16 %v925, %v922
        %v956 = vpack.c.b16 %v926, %v923
        %v957 = vpack.c.b16 %v927, %v924
        %v958 = vpack.c.b16 %v931, %v928
        %v959 = vpack.c.b16 %v932, %v929
        %v960 = vpack.c.b16 %v933, %v930
        %v961 = vpack.c.b16 %v937, %v934
        %v962 = vpack.c.b16 %v938, %v935
        %v963 = vpack.c.b16 %v939, %v936
        %988 = vmatprep.subr.bf16.mxu0 %v962
        %989 = vmatpush1.bf16.msra.mxu0 %v961
        %990 = vmatprep.subr.bf16.mxu0 %v959
        %991 = vmatpush1.bf16.msra.mxu0 %v958
        %992 = vmatprep.subr.bf16.mxu0 %v956
        %993 = vmatpush1.bf16.msra.mxu0 %v955
        %994 = vmatprep.subr.bf16.mxu0 %v953
        %995 = vmatpush1.bf16.msra.mxu0 %v952
        %996 = vmatprep.subr.bf16.mxu0 %v950
        %997 = vmatpush1.bf16.msra.mxu0 %v949
        %998 = vmatprep.subr.bf16.mxu0 %v947
        %999 = vmatpush1.bf16.msra.mxu0 %v946
        %1000 = vmatprep.subr.bf16.mxu0 %v944
        %1001 = vmatpush1.bf16.msra.mxu0 %v943
        %1002 = vmatprep.subr.bf16.mxu0 %v941
        %1003 = vmatpush1.bf16.msra.mxu0 %v940
        %1004 = vmatprep.subr.bf16.mxu0 0
        %1005 = vmatpush2.bf16.msra.mxu0 0
        %1006 = vmatprep.subr.bf16.mxu0 0
        %1007 = vmatpush2.bf16.msra.mxu0 0
        %1008 = vmatprep.subr.bf16.mxu0 0
        %1009 = vmatpush2.bf16.msra.mxu0 0
        %1010 = vmatprep.subr.bf16.mxu0 0
        %1011 = vmatpush2.bf16.msra.mxu0 0
        %1012 = vmatprep.subr.bf16.mxu0 0
        %1013 = vmatpush2.bf16.msra.mxu0 0
        %1014 = vmatprep.subr.bf16.mxu0 0
        %1015 = vmatpush2.bf16.msra.mxu0 0
        %1016 = vmatprep.subr.bf16.mxu0 0
        %1017 = vmatpush2.bf16.msra.mxu0 0
        %1018 = vmatprep.subr.bf16.mxu0 0
        %1019 = vmatpush2.bf16.msra.mxu0 0
        %1020 = vmatprep.mubr.bf16.mxu0 0
        %1021 = vmatmul.mubr.bf16.gmra.mxu0 %v809
        %v1022 = vpop.f32.mrf.mxu0
        %v1023 = vadd.f32 %v848, %v1022
        %v1024 = vpop.f32.mrf.mxu0
        %v1025 = vadd.f32 %v852, %v1024
        %v1026 = vpop.f32.mrf.mxu0
        %v1027 = vadd.f32 %v848, %v1026
        %v1028 = vpop.f32.mrf.mxu0
        %v1029 = vadd.f32 %v852, %v1028
        %1030 = vmatprep.mubr.bf16.mxu0 0
        %1031 = vmatmul.mubr.bf16.gmra.mxu0 %v810
        %v1032 = vpop.f32.mrf.mxu0
        %v1033 = vadd.f32 %v848, %v1032
        %v1034 = vpop.f32.mrf.mxu0
        %v1035 = vadd.f32 %v852, %v1034
        %v1036 = vpop.f32.mrf.mxu0
        %v1037 = vadd.f32 %v848, %v1036
        %v1038 = vpop.f32.mrf.mxu0
        %v1039 = vadd.f32 %v852, %v1038
        %1040 = vdwg.mxu0
        %1041 = vmatprep.subr.bf16.mxu0 0
        %1042 = vmatpush1.bf16.msra.mxu0 %v963
        %1043 = vmatprep.subr.bf16.mxu0 0
        %1044 = vmatpush1.bf16.msra.mxu0 %v960
        %1045 = vmatprep.subr.bf16.mxu0 0
        %1046 = vmatpush1.bf16.msra.mxu0 %v957
        %1047 = vmatprep.subr.bf16.mxu0 0
        %1048 = vmatpush1.bf16.msra.mxu0 %v954
        %1049 = vmatprep.subr.bf16.mxu0 0
        %1050 = vmatpush1.bf16.msra.mxu0 %v951
        %1051 = vmatprep.subr.bf16.mxu0 0
        %1052 = vmatpush1.bf16.msra.mxu0 %v948
        %1053 = vmatprep.subr.bf16.mxu0 0
        %1054 = vmatpush1.bf16.msra.mxu0 %v945
        %1055 = vmatprep.subr.bf16.mxu0 0
        %1056 = vmatpush1.bf16.msra.mxu0 %v942
        %1057 = vmatprep.subr.bf16.mxu0 0
        %1058 = vmatpush2.bf16.msra.mxu0 0
        %1059 = vmatprep.subr.bf16.mxu0 0
        %1060 = vmatpush2.bf16.msra.mxu0 0
        %1061 = vmatprep.subr.bf16.mxu0 0
        %1062 = vmatpush2.bf16.msra.mxu0 0
        %1063 = vmatprep.subr.bf16.mxu0 0
        %1064 = vmatpush2.bf16.msra.mxu0 0
        %1065 = vmatprep.subr.bf16.mxu0 0
        %1066 = vmatpush2.bf16.msra.mxu0 0
        %1067 = vmatprep.subr.bf16.mxu0 0
        %1068 = vmatpush2.bf16.msra.mxu0 0
        %1069 = vmatprep.subr.bf16.mxu0 0
        %1070 = vmatpush2.bf16.msra.mxu0 0
        %1071 = vmatprep.subr.bf16.mxu0 0
        %1072 = vmatpush2.bf16.msra.mxu0 0
        %1073 = vmatprep.mubr.bf16.mxu0 0
        %1074 = vmatmul.mubr.bf16.gmra.mxu0 %v809
        %v1075 = vpop.f32.mrf.mxu0
        %v1076 = vadd.f32 %v856, %v1075
        %v1077 = vpop.f32.mrf.mxu0
        %v1078 = vpop.f32.mrf.mxu0
        %v1079 = vadd.f32 %v856, %v1078
        %v1080 = vpop.f32.mrf.mxu0
        %1081 = vmatprep.mubr.bf16.mxu0 0
        %1082 = vmatmul.mubr.bf16.gmra.mxu0 %v810
        %v1083 = vpop.f32.mrf.mxu0
        %v1084 = vadd.f32 %v856, %v1083
        %v1085 = vpop.f32.mrf.mxu0
        %v1086 = vpop.f32.mrf.mxu0
        %v1087 = vadd.f32 %v856, %v1086
        %v1088 = vpop.f32.mrf.mxu0
        %1089 = vdwg.mxu0
        %v1090 = vpack.c.bf16 %v1027, %v1023
        %v1091 = vpack.c.bf16 %v1029, %v1025
        %v1092 = vpack.c.bf16 %v1079, %v1076
        %v1093 = vpack.c.bf16 %v1037, %v1033
        %v1094 = vpack.c.bf16 %v1039, %v1035
        %v1095 = vpack.c.bf16 %v1087, %v1084
        %v1096 = vld [vmem:[%s584] sm:$0xf]
        %v1097 = vld [vmem:[%s584 + $0x4] sm:$0xf]
        %v1098 = vld [vmem:[%s584 + $0x8] sm:$0xf]
        %v1099 = vld [vmem:[%s584 + $0xc] sm:$0xf]
        %v1100 = vld [vmem:[%s584 + $0x10] sm:$0xf]
        %v1101 = vld [vmem:[%s584 + $0x14] sm:$0xf]
        %v1102 = vld [vmem:[%s584 + $0x18] sm:$0xf]
        %v1103 = vld [vmem:[%s584 + $0x1c] sm:$0xf]
        %v1104 = vld [vmem:[%s584 + $0x20] sm:$0xf]
        %v1105 = vld [vmem:[%s584 + $0x24] sm:$0xf]
        %v1106 = vld [vmem:[%s584 + $0x28] sm:$0xf]
        %v1107 = vld [vmem:[%s584 + $0x2c] sm:$0xf]
        %v1108 = vld [vmem:[%s584 + $0x30] sm:$0xf]
        %v1109 = vld [vmem:[%s584 + $0x34] sm:$0xf]
        %v1110 = vld [vmem:[%s584 + $0x38] sm:$0xf]
        %v1111 = vld [vmem:[%s584 + $0x3c] sm:$0xf]
        %vm1112 = vcmask 261120
        %v1114 = vsel %vm1112, %v1090, 0
        %v1117 = vsel %vm1112, %v1091, 0
        %1119 = vmatprep.subr.bf16.mxu0 0
        %1120 = vmatpush1.bf16.xpose.msra.mxu0 0
        %1121 = vmatprep.subr.bf16.mxu0 0
        %1122 = vmatpush1.bf16.xpose.msra.mxu0 0
        %1123 = vmatprep.subr.bf16.mxu0 0
        %1124 = vmatpush1.bf16.xpose.msra.mxu0 0
        %1125 = vmatprep.subr.bf16.mxu0 0
        %1126 = vmatpush1.bf16.xpose.msra.mxu0 0
        %1127 = vmatprep.subr.bf16.mxu0 0
        %1128 = vmatpush1.bf16.xpose.msra.mxu0 0
        %1129 = vmatprep.subr.bf16.mxu0 0
        %1130 = vmatpush1.bf16.xpose.msra.mxu0 0
        %1131 = vmatprep.subr.bf16.mxu0 0
        %1132 = vmatpush1.bf16.xpose.msra.mxu0 0
        %1133 = vmatprep.subr.bf16.mxu0 0
        %1134 = vmatpush1.bf16.xpose.msra.mxu0 %v1117
        %1135 = vmatprep.subr.bf16.mxu0 0
        %1136 = vmatpush2.bf16.xpose.msra.mxu0 0
        %1137 = vmatprep.subr.bf16.mxu0 0
        %1138 = vmatpush2.bf16.xpose.msra.mxu0 0
        %1139 = vmatprep.subr.bf16.mxu0 0
        %1140 = vmatpush2.bf16.xpose.msra.mxu0 0
        %1141 = vmatprep.subr.bf16.mxu0 0
        %1142 = vmatpush2.bf16.xpose.msra.mxu0 0
        %1143 = vmatprep.subr.bf16.mxu0 0
        %1144 = vmatpush2.bf16.xpose.msra.mxu0 0
        %1145 = vmatprep.subr.bf16.mxu0 0
        %1146 = vmatpush2.bf16.xpose.msra.mxu0 0
        %1147 = vmatprep.subr.bf16.mxu0 0
        %1148 = vmatpush2.bf16.xpose.msra.mxu0 0
        %1149 = vmatprep.subr.bf16.mxu0 0
        %1150 = vmatpush2.bf16.xpose.msra.mxu0 0
        %1151 = vmatprep.mubr.bf16.mxu0 0
        %1152 = vmatmul.mubr.bf16.gmra.mxu0 %v1114
        %v1153 = vpop.f32.mrf.mxu0
        %v1154 = vadd.f32 %v740, %v1153
        %v1155 = vpop.f32.mrf.mxu0
        %v1156 = vpop.f32.mrf.mxu0
        %v1157 = vadd.f32 %v741, %v1156
        %v1158 = vpop.f32.mrf.mxu0
        %1159 = vdwg.mxu0
        %v1161 = vsel %vm1112, %v1093, 0
        %v1164 = vsel %vm1112, %v1094, 0
        %1166 = vmatprep.subr.bf16.mxu0 0
        %1167 = vmatpush1.bf16.xpose.msra.mxu0 0
        %1168 = vmatprep.subr.bf16.mxu0 0
        %1169 = vmatpush1.bf16.xpose.msra.mxu0 0
        %1170 = vmatprep.subr.bf16.mxu0 0
        %1171 = vmatpush1.bf16.xpose.msra.mxu0 0
        %1172 = vmatprep.subr.bf16.mxu0 0
        %1173 = vmatpush1.bf16.xpose.msra.mxu0 0
        %1174 = vmatprep.subr.bf16.mxu0 0
        %1175 = vmatpush1.bf16.xpose.msra.mxu0 0
        %1176 = vmatprep.subr.bf16.mxu0 0
        %1177 = vmatpush1.bf16.xpose.msra.mxu0 0
        %1178 = vmatprep.subr.bf16.mxu0 0
        %1179 = vmatpush1.bf16.xpose.msra.mxu0 0
        %1180 = vmatprep.subr.bf16.mxu0 0
        %1181 = vmatpush1.bf16.xpose.msra.mxu0 %v1164
        %1182 = vmatprep.subr.bf16.mxu0 0
        %1183 = vmatpush2.bf16.xpose.msra.mxu0 0
        %1184 = vmatprep.subr.bf16.mxu0 0
        %1185 = vmatpush2.bf16.xpose.msra.mxu0 0
        %1186 = vmatprep.subr.bf16.mxu0 0
        %1187 = vmatpush2.bf16.xpose.msra.mxu0 0
        %1188 = vmatprep.subr.bf16.mxu0 0
        %1189 = vmatpush2.bf16.xpose.msra.mxu0 0
        %1190 = vmatprep.subr.bf16.mxu0 0
        %1191 = vmatpush2.bf16.xpose.msra.mxu0 0
        %1192 = vmatprep.subr.bf16.mxu0 0
        %1193 = vmatpush2.bf16.xpose.msra.mxu0 0
        %1194 = vmatprep.subr.bf16.mxu0 0
        %1195 = vmatpush2.bf16.xpose.msra.mxu0 0
        %1196 = vmatprep.subr.bf16.mxu0 0
        %1197 = vmatpush2.bf16.xpose.msra.mxu0 0
        %1198 = vmatprep.mubr.bf16.mxu0 0
        %1199 = vmatmul.mubr.bf16.gmra.mxu0 %v1161
        %v1200 = vpop.f32.mrf.mxu0
        %v1201 = vadd.f32 %v740, %v1200
        %v1202 = vpop.f32.mrf.mxu0
        %v1203 = vpop.f32.mrf.mxu0
        %v1204 = vadd.f32 %v741, %v1203
        %v1205 = vpop.f32.mrf.mxu0
        %1206 = vdwg.mxu0
        %vm1207 = vcmask 130048
        %v1208 = vsel %vm1207, %v1154, -inf
        %1209 = vmax.xlane.f32.xlu0 %v1208
        %v1210 = vpop.xlane.xlu0 %1209
        %v1211 = vsel %vm1207, %v1157, -inf
        %1212 = vmax.xlane.f32.xlu0 %v1211
        %v1213 = vpop.xlane.xlu0 %1212
        %v1214 = vsel %vm1207, %v1201, -inf
        %1215 = vmax.xlane.f32.xlu0 %v1214
        %v1216 = vpop.xlane.xlu0 %1215
        %v1217 = vsel %vm1207, %v1204, -inf
        %1218 = vmax.xlane.f32.xlu0 %v1217
        %v1219 = vpop.xlane.xlu0 %1218
        %v1220 = vsub.f32 %v1154, %v1210
        %v1221 = vsub.f32 %v1157, %v1213
        %v1222 = vsub.f32 %v1201, %v1216
        %v1223 = vsub.f32 %v1204, %v1219
        %v1224 = vmul.f32 %v1220, 1.442695
        %v1225 = vpow.pop %v1224
        %v1226 = vmul.f32 %v1221, 1.442695
        %v1227 = vpow.pop %v1226
        %v1228 = vmul.f32 %v1222, 1.442695
        %v1229 = vpow.pop %v1228
        %v1230 = vmul.f32 %v1223, 1.442695
        %v1231 = vpow.pop %v1230
        %v1232 = vsel %vm1207, %v1225, 0.0
        %1233 = vadd.xlane.f32.xlu0 %v1232
        %v1234 = vpop.xlane.xlu0 %1233
        %v1235 = vsel %vm1207, %v1227, 0.0
        %1236 = vadd.xlane.f32.xlu0 %v1235
        %v1237 = vpop.xlane.xlu0 %1236
        %v1238 = vsel %vm1207, %v1229, 0.0
        %1239 = vadd.xlane.f32.xlu0 %v1238
        %v1240 = vpop.xlane.xlu0 %1239
        %v1241 = vsel %vm1207, %v1231, 0.0
        %1242 = vadd.xlane.f32.xlu0 %v1241
        %v1243 = vpop.xlane.xlu0 %1242
        %v1244 = vrcp.pop %v1234
        %v1245 = vmul.f32 %v1225, %v1244
        %v1246 = vrcp.pop %v1237
        %v1247 = vmul.f32 %v1227, %v1246
        %v1248 = vrcp.pop %v1240
        %v1249 = vmul.f32 %v1229, %v1248
        %v1250 = vrcp.pop %v1243
        %v1251 = vmul.f32 %v1231, %v1250
        %v1252 = vpack.c.bf16 %v1247, %v1245
        %v1253 = vpack.c.bf16 %v1251, %v1249
        %v1255 = vsel %vm1207, %v1252, 0
        %1257 = vmatprep.subr.bf16.mxu0 0
        %1258 = vmatpush1.bf16.msra.mxu0 0
        %1259 = vmatprep.subr.bf16.mxu0 0
        %1260 = vmatpush1.bf16.msra.mxu0 0
        %1261 = vmatprep.subr.bf16.mxu0 0
        %1262 = vmatpush1.bf16.msra.mxu0 0
        %1263 = vmatprep.subr.bf16.mxu0 0
        %1264 = vmatpush1.bf16.msra.mxu0 0
        %1265 = vmatprep.subr.bf16.mxu0 0
        %1266 = vmatpush1.bf16.msra.mxu0 0
        %1267 = vmatprep.subr.bf16.mxu0 0
        %1268 = vmatpush1.bf16.msra.mxu0 0
        %1269 = vmatprep.subr.bf16.mxu0 0
        %1270 = vmatpush1.bf16.msra.mxu0 0
        %1271 = vmatprep.subr.bf16.mxu0 0
        %1272 = vmatpush1.bf16.msra.mxu0 %v1092
        %1273 = vmatprep.subr.bf16.mxu0 0
        %1274 = vmatpush2.bf16.msra.mxu0 0
        %1275 = vmatprep.subr.bf16.mxu0 0
        %1276 = vmatpush2.bf16.msra.mxu0 0
        %1277 = vmatprep.subr.bf16.mxu0 0
        %1278 = vmatpush2.bf16.msra.mxu0 0
        %1279 = vmatprep.subr.bf16.mxu0 0
        %1280 = vmatpush2.bf16.msra.mxu0 0
        %1281 = vmatprep.subr.bf16.mxu0 0
        %1282 = vmatpush2.bf16.msra.mxu0 0
        %1283 = vmatprep.subr.bf16.mxu0 0
        %1284 = vmatpush2.bf16.msra.mxu0 0
        %1285 = vmatprep.subr.bf16.mxu0 0
        %1286 = vmatpush2.bf16.msra.mxu0 0
        %1287 = vmatprep.subr.bf16.mxu0 0
        %1288 = vmatpush2.bf16.msra.mxu0 0
        %1289 = vmatprep.mubr.bf16.mxu0 0
        %1290 = vmatmul.mubr.bf16.gmra.mxu0 %v1255
        %v1291 = vpop.f32.mrf.mxu0
        %v1292 = vadd.f32 0.0, %v1291
        %v1293 = vpop.f32.mrf.mxu0
        %v1294 = vpop.f32.mrf.mxu0
        %v1295 = vadd.f32 0.0, %v1294
        %v1296 = vpop.f32.mrf.mxu0
        %1297 = vdwg.mxu0
        %v1299 = vsel %vm1207, %v1253, 0
        %1301 = vmatprep.subr.bf16.mxu0 0
        %1302 = vmatpush1.bf16.msra.mxu0 0
        %1303 = vmatprep.subr.bf16.mxu0 0
        %1304 = vmatpush1.bf16.msra.mxu0 0
        %1305 = vmatprep.subr.bf16.mxu0 0
        %1306 = vmatpush1.bf16.msra.mxu0 0
        %1307 = vmatprep.subr.bf16.mxu0 0
        %1308 = vmatpush1.bf16.msra.mxu0 0
        %1309 = vmatprep.subr.bf16.mxu0 0
        %1310 = vmatpush1.bf16.msra.mxu0 0
        %1311 = vmatprep.subr.bf16.mxu0 0
        %1312 = vmatpush1.bf16.msra.mxu0 0
        %1313 = vmatprep.subr.bf16.mxu0 0
        %1314 = vmatpush1.bf16.msra.mxu0 0
        %1315 = vmatprep.subr.bf16.mxu0 0
        %1316 = vmatpush1.bf16.msra.mxu0 %v1095
        %1317 = vmatprep.subr.bf16.mxu0 0
        %1318 = vmatpush2.bf16.msra.mxu0 0
        %1319 = vmatprep.subr.bf16.mxu0 0
        %1320 = vmatpush2.bf16.msra.mxu0 0
        %1321 = vmatprep.subr.bf16.mxu0 0
        %1322 = vmatpush2.bf16.msra.mxu0 0
        %1323 = vmatprep.subr.bf16.mxu0 0
        %1324 = vmatpush2.bf16.msra.mxu0 0
        %1325 = vmatprep.subr.bf16.mxu0 0
        %1326 = vmatpush2.bf16.msra.mxu0 0
        %1327 = vmatprep.subr.bf16.mxu0 0
        %1328 = vmatpush2.bf16.msra.mxu0 0
        %1329 = vmatprep.subr.bf16.mxu0 0
        %1330 = vmatpush2.bf16.msra.mxu0 0
        %1331 = vmatprep.subr.bf16.mxu0 0
        %1332 = vmatpush2.bf16.msra.mxu0 0
        %1333 = vmatprep.mubr.bf16.mxu0 0
        %1334 = vmatmul.mubr.bf16.gmra.mxu0 %v1299
        %v1335 = vpop.f32.mrf.mxu0
        %v1336 = vadd.f32 0.0, %v1335
        %v1337 = vpop.f32.mrf.mxu0
        %v1338 = vpop.f32.mrf.mxu0
        %v1339 = vadd.f32 0.0, %v1338
        %v1340 = vpop.f32.mrf.mxu0
        %1341 = vdwg.mxu0
        %1343 = vrot.lane.b32.xlu0 %v1090, 96
        %v1344 = vpop.permute.xlu0 %1343
        %1346 = vrot.lane.b32.xlu0 %v1091, 96
        %v1347 = vpop.permute.xlu0 %1346
        %v1349 = vsel %vm1112, %v1344, 0
        %v1352 = vsel %vm1112, %v1347, 0
        %1354 = vmatprep.subr.bf16.mxu0 0
        %1355 = vmatpush1.bf16.xpose.msra.mxu0 0
        %1356 = vmatprep.subr.bf16.mxu0 0
        %1357 = vmatpush1.bf16.xpose.msra.mxu0 0
        %1358 = vmatprep.subr.bf16.mxu0 0
        %1359 = vmatpush1.bf16.xpose.msra.mxu0 0
        %1360 = vmatprep.subr.bf16.mxu0 0
        %1361 = vmatpush1.bf16.xpose.msra.mxu0 0
        %1362 = vmatprep.subr.bf16.mxu0 0
        %1363 = vmatpush1.bf16.xpose.msra.mxu0 0
        %1364 = vmatprep.subr.bf16.mxu0 0
        %1365 = vmatpush1.bf16.xpose.msra.mxu0 0
        %1366 = vmatprep.subr.bf16.mxu0 0
        %1367 = vmatpush1.bf16.xpose.msra.mxu0 0
        %1368 = vmatprep.subr.bf16.mxu0 0
        %1369 = vmatpush1.bf16.xpose.msra.mxu0 %v1352
        %1370 = vmatprep.subr.bf16.mxu0 0
        %1371 = vmatpush2.bf16.xpose.msra.mxu0 0
        %1372 = vmatprep.subr.bf16.mxu0 0
        %1373 = vmatpush2.bf16.xpose.msra.mxu0 0
        %1374 = vmatprep.subr.bf16.mxu0 0
        %1375 = vmatpush2.bf16.xpose.msra.mxu0 0
        %1376 = vmatprep.subr.bf16.mxu0 0
        %1377 = vmatpush2.bf16.xpose.msra.mxu0 0
        %1378 = vmatprep.subr.bf16.mxu0 0
        %1379 = vmatpush2.bf16.xpose.msra.mxu0 0
        %1380 = vmatprep.subr.bf16.mxu0 0
        %1381 = vmatpush2.bf16.xpose.msra.mxu0 0
        %1382 = vmatprep.subr.bf16.mxu0 0
        %1383 = vmatpush2.bf16.xpose.msra.mxu0 0
        %1384 = vmatprep.subr.bf16.mxu0 0
        %1385 = vmatpush2.bf16.xpose.msra.mxu0 0
        %1386 = vmatprep.mubr.bf16.mxu0 0
        %1387 = vmatmul.mubr.bf16.gmra.mxu0 %v1349
        %v1388 = vpop.f32.mrf.mxu0
        %v1389 = vadd.f32 %v740, %v1388
        %v1390 = vpop.f32.mrf.mxu0
        %v1391 = vpop.f32.mrf.mxu0
        %v1392 = vadd.f32 %v741, %v1391
        %v1393 = vpop.f32.mrf.mxu0
        %1394 = vdwg.mxu0
        %1396 = vrot.lane.b32.xlu0 %v1093, 96
        %v1397 = vpop.permute.xlu0 %1396
        %1399 = vrot.lane.b32.xlu0 %v1094, 96
        %v1400 = vpop.permute.xlu0 %1399
        %v1402 = vsel %vm1112, %v1397, 0
        %v1405 = vsel %vm1112, %v1400, 0
        %1407 = vmatprep.subr.bf16.mxu0 0
        %1408 = vmatpush1.bf16.xpose.msra.mxu0 0
        %1409 = vmatprep.subr.bf16.mxu0 0
        %1410 = vmatpush1.bf16.xpose.msra.mxu0 0
        %1411 = vmatprep.subr.bf16.mxu0 0
        %1412 = vmatpush1.bf16.xpose.msra.mxu0 0
        %1413 = vmatprep.subr.bf16.mxu0 0
        %1414 = vmatpush1.bf16.xpose.msra.mxu0 0
        %1415 = vmatprep.subr.bf16.mxu0 0
        %1416 = vmatpush1.bf16.xpose.msra.mxu0 0
        %1417 = vmatprep.subr.bf16.mxu0 0
        %1418 = vmatpush1.bf16.xpose.msra.mxu0 0
        %1419 = vmatprep.subr.bf16.mxu0 0
        %1420 = vmatpush1.bf16.xpose.msra.mxu0 0
        %1421 = vmatprep.subr.bf16.mxu0 0
        %1422 = vmatpush1.bf16.xpose.msra.mxu0 %v1405
        %1423 = vmatprep.subr.bf16.mxu0 0
        %1424 = vmatpush2.bf16.xpose.msra.mxu0 0
        %1425 = vmatprep.subr.bf16.mxu0 0
        %1426 = vmatpush2.bf16.xpose.msra.mxu0 0
        %1427 = vmatprep.subr.bf16.mxu0 0
        %1428 = vmatpush2.bf16.xpose.msra.mxu0 0
        %1429 = vmatprep.subr.bf16.mxu0 0
        %1430 = vmatpush2.bf16.xpose.msra.mxu0 0
        %1431 = vmatprep.subr.bf16.mxu0 0
        %1432 = vmatpush2.bf16.xpose.msra.mxu0 0
        %1433 = vmatprep.subr.bf16.mxu0 0
        %1434 = vmatpush2.bf16.xpose.msra.mxu0 0
        %1435 = vmatprep.subr.bf16.mxu0 0
        %1436 = vmatpush2.bf16.xpose.msra.mxu0 0
        %1437 = vmatprep.subr.bf16.mxu0 0
        %1438 = vmatpush2.bf16.xpose.msra.mxu0 0
        %1439 = vmatprep.mubr.bf16.mxu0 0
        %1440 = vmatmul.mubr.bf16.gmra.mxu0 %v1402
        %v1441 = vpop.f32.mrf.mxu0
        %v1442 = vadd.f32 %v740, %v1441
        %v1443 = vpop.f32.mrf.mxu0
        %v1444 = vpop.f32.mrf.mxu0
        %v1445 = vadd.f32 %v741, %v1444
        %v1446 = vpop.f32.mrf.mxu0
        %1447 = vdwg.mxu0
        %v1448 = vsel %vm1207, %v1389, -inf
        %1449 = vmax.xlane.f32.xlu0 %v1448
        %v1450 = vpop.xlane.xlu0 %1449
        %v1451 = vsel %vm1207, %v1392, -inf
        %1452 = vmax.xlane.f32.xlu0 %v1451
        %v1453 = vpop.xlane.xlu0 %1452
        %v1454 = vsel %vm1207, %v1442, -inf
        %1455 = vmax.xlane.f32.xlu0 %v1454
        %v1456 = vpop.xlane.xlu0 %1455
        %v1457 = vsel %vm1207, %v1445, -inf
        %1458 = vmax.xlane.f32.xlu0 %v1457
        %v1459 = vpop.xlane.xlu0 %1458
        %v1460 = vsub.f32 %v1389, %v1450
        %v1461 = vsub.f32 %v1392, %v1453
        %v1462 = vsub.f32 %v1442, %v1456
        %v1463 = vsub.f32 %v1445, %v1459
        %v1464 = vmul.f32 %v1460, 1.442695
        %v1465 = vpow.pop %v1464
        %v1466 = vmul.f32 %v1461, 1.442695
        %v1467 = vpow.pop %v1466
        %v1468 = vmul.f32 %v1462, 1.442695
        %v1469 = vpow.pop %v1468
        %v1470 = vmul.f32 %v1463, 1.442695
        %v1471 = vpow.pop %v1470
        %v1472 = vsel %vm1207, %v1465, 0.0
        %1473 = vadd.xlane.f32.xlu0 %v1472
        %v1474 = vpop.xlane.xlu0 %1473
        %v1475 = vsel %vm1207, %v1467, 0.0
        %1476 = vadd.xlane.f32.xlu0 %v1475
        %v1477 = vpop.xlane.xlu0 %1476
        %v1478 = vsel %vm1207, %v1469, 0.0
        %1479 = vadd.xlane.f32.xlu0 %v1478
        %v1480 = vpop.xlane.xlu0 %1479
        %v1481 = vsel %vm1207, %v1471, 0.0
        %1482 = vadd.xlane.f32.xlu0 %v1481
        %v1483 = vpop.xlane.xlu0 %1482
        %v1484 = vrcp.pop %v1474
        %v1485 = vmul.f32 %v1465, %v1484
        %v1486 = vrcp.pop %v1477
        %v1487 = vmul.f32 %v1467, %v1486
        %v1488 = vrcp.pop %v1480
        %v1489 = vmul.f32 %v1469, %v1488
        %v1490 = vrcp.pop %v1483
        %v1491 = vmul.f32 %v1471, %v1490
        %v1492 = vpack.c.bf16 %v1487, %v1485
        %v1493 = vpack.c.bf16 %v1491, %v1489
        %1495 = vrot.lane.b32.xlu0 %v1092, 96
        %v1496 = vpop.permute.xlu0 %1495
        %v1499 = vsel %vm1207, %v1492, 0
        %1501 = vmatprep.subr.bf16.mxu0 0
        %1502 = vmatpush1.bf16.msra.mxu0 0
        %1503 = vmatprep.subr.bf16.mxu0 0
        %1504 = vmatpush1.bf16.msra.mxu0 0
        %1505 = vmatprep.subr.bf16.mxu0 0
        %1506 = vmatpush1.bf16.msra.mxu0 0
        %1507 = vmatprep.subr.bf16.mxu0 0
        %1508 = vmatpush1.bf16.msra.mxu0 0
        %1509 = vmatprep.subr.bf16.mxu0 0
        %1510 = vmatpush1.bf16.msra.mxu0 0
        %1511 = vmatprep.subr.bf16.mxu0 0
        %1512 = vmatpush1.bf16.msra.mxu0 0
        %1513 = vmatprep.subr.bf16.mxu0 0
        %1514 = vmatpush1.bf16.msra.mxu0 0
        %1515 = vmatprep.subr.bf16.mxu0 0
        %1516 = vmatpush1.bf16.msra.mxu0 %v1496
        %1517 = vmatprep.subr.bf16.mxu0 0
        %1518 = vmatpush2.bf16.msra.mxu0 0
        %1519 = vmatprep.subr.bf16.mxu0 0
        %1520 = vmatpush2.bf16.msra.mxu0 0
        %1521 = vmatprep.subr.bf16.mxu0 0
        %1522 = vmatpush2.bf16.msra.mxu0 0
        %1523 = vmatprep.subr.bf16.mxu0 0
        %1524 = vmatpush2.bf16.msra.mxu0 0
        %1525 = vmatprep.subr.bf16.mxu0 0
        %1526 = vmatpush2.bf16.msra.mxu0 0
        %1527 = vmatprep.subr.bf16.mxu0 0
        %1528 = vmatpush2.bf16.msra.mxu0 0
        %1529 = vmatprep.subr.bf16.mxu0 0
        %1530 = vmatpush2.bf16.msra.mxu0 0
        %1531 = vmatprep.subr.bf16.mxu0 0
        %1532 = vmatpush2.bf16.msra.mxu0 0
        %1533 = vmatprep.mubr.bf16.mxu0 0
        %1534 = vmatmul.mubr.bf16.gmra.mxu0 %v1499
        %v1535 = vpop.f32.mrf.mxu0
        %v1536 = vadd.f32 0.0, %v1535
        %v1537 = vpop.f32.mrf.mxu0
        %v1538 = vpop.f32.mrf.mxu0
        %v1539 = vadd.f32 0.0, %v1538
        %v1540 = vpop.f32.mrf.mxu0
        %1541 = vdwg.mxu0
        %1543 = vrot.lane.b32.xlu0 %v1095, 96
        %v1544 = vpop.permute.xlu0 %1543
        %v1547 = vsel %vm1207, %v1493, 0
        %1549 = vmatprep.subr.bf16.mxu0 0
        %1550 = vmatpush1.bf16.msra.mxu0 0
        %1551 = vmatprep.subr.bf16.mxu0 0
        %1552 = vmatpush1.bf16.msra.mxu0 0
        %1553 = vmatprep.subr.bf16.mxu0 0
        %1554 = vmatpush1.bf16.msra.mxu0 0
        %1555 = vmatprep.subr.bf16.mxu0 0
        %1556 = vmatpush1.bf16.msra.mxu0 0
        %1557 = vmatprep.subr.bf16.mxu0 0
        %1558 = vmatpush1.bf16.msra.mxu0 0
        %1559 = vmatprep.subr.bf16.mxu0 0
        %1560 = vmatpush1.bf16.msra.mxu0 0
        %1561 = vmatprep.subr.bf16.mxu0 0
        %1562 = vmatpush1.bf16.msra.mxu0 0
        %1563 = vmatprep.subr.bf16.mxu0 0
        %1564 = vmatpush1.bf16.msra.mxu0 %v1544
        %1565 = vmatprep.subr.bf16.mxu0 0
        %1566 = vmatpush2.bf16.msra.mxu0 0
        %1567 = vmatprep.subr.bf16.mxu0 0
        %1568 = vmatpush2.bf16.msra.mxu0 0
        %1569 = vmatprep.subr.bf16.mxu0 0
        %1570 = vmatpush2.bf16.msra.mxu0 0
        %1571 = vmatprep.subr.bf16.mxu0 0
        %1572 = vmatpush2.bf16.msra.mxu0 0
        %1573 = vmatprep.subr.bf16.mxu0 0
        %1574 = vmatpush2.bf16.msra.mxu0 0
        %1575 = vmatprep.subr.bf16.mxu0 0
        %1576 = vmatpush2.bf16.msra.mxu0 0
        %1577 = vmatprep.subr.bf16.mxu0 0
        %1578 = vmatpush2.bf16.msra.mxu0 0
        %1579 = vmatprep.subr.bf16.mxu0 0
        %1580 = vmatpush2.bf16.msra.mxu0 0
        %1581 = vmatprep.mubr.bf16.mxu0 0
        %1582 = vmatmul.mubr.bf16.gmra.mxu0 %v1547
        %v1583 = vpop.f32.mrf.mxu0
        %v1584 = vadd.f32 0.0, %v1583
        %v1585 = vpop.f32.mrf.mxu0
        %v1586 = vpop.f32.mrf.mxu0
        %v1587 = vadd.f32 0.0, %v1586
        %v1588 = vpop.f32.mrf.mxu0
        %1589 = vdwg.mxu0
        %1590 = vrot.lane.b32.xlu0 %v1090, 64
        %v1591 = vpop.permute.xlu0 %1590
        %1592 = vrot.lane.b32.xlu0 %v1091, 64
        %v1593 = vpop.permute.xlu0 %1592
        %v1595 = vsel %vm1112, %v1591, 0
        %v1598 = vsel %vm1112, %v1593, 0
        %1600 = vmatprep.subr.bf16.mxu0 0
        %1601 = vmatpush1.bf16.xpose.msra.mxu0 0
        %1602 = vmatprep.subr.bf16.mxu0 0
        %1603 = vmatpush1.bf16.xpose.msra.mxu0 0
        %1604 = vmatprep.subr.bf16.mxu0 0
        %1605 = vmatpush1.bf16.xpose.msra.mxu0 0
        %1606 = vmatprep.subr.bf16.mxu0 0
        %1607 = vmatpush1.bf16.xpose.msra.mxu0 0
        %1608 = vmatprep.subr.bf16.mxu0 0
        %1609 = vmatpush1.bf16.xpose.msra.mxu0 0
        %1610 = vmatprep.subr.bf16.mxu0 0
        %1611 = vmatpush1.bf16.xpose.msra.mxu0 0
        %1612 = vmatprep.subr.bf16.mxu0 0
        %1613 = vmatpush1.bf16.xpose.msra.mxu0 0
        %1614 = vmatprep.subr.bf16.mxu0 0
        %1615 = vmatpush1.bf16.xpose.msra.mxu0 %v1598
        %1616 = vmatprep.subr.bf16.mxu0 0
        %1617 = vmatpush2.bf16.xpose.msra.mxu0 0
        %1618 = vmatprep.subr.bf16.mxu0 0
        %1619 = vmatpush2.bf16.xpose.msra.mxu0 0
        %1620 = vmatprep.subr.bf16.mxu0 0
        %1621 = vmatpush2.bf16.xpose.msra.mxu0 0
        %1622 = vmatprep.subr.bf16.mxu0 0
        %1623 = vmatpush2.bf16.xpose.msra.mxu0 0
        %1624 = vmatprep.subr.bf16.mxu0 0
        %1625 = vmatpush2.bf16.xpose.msra.mxu0 0
        %1626 = vmatprep.subr.bf16.mxu0 0
        %1627 = vmatpush2.bf16.xpose.msra.mxu0 0
        %1628 = vmatprep.subr.bf16.mxu0 0
        %1629 = vmatpush2.bf16.xpose.msra.mxu0 0
        %1630 = vmatprep.subr.bf16.mxu0 0
        %1631 = vmatpush2.bf16.xpose.msra.mxu0 0
        %1632 = vmatprep.mubr.bf16.mxu0 0
        %1633 = vmatmul.mubr.bf16.gmra.mxu0 %v1595
        %v1634 = vpop.f32.mrf.mxu0
        %v1635 = vadd.f32 %v740, %v1634
        %v1636 = vpop.f32.mrf.mxu0
        %v1637 = vpop.f32.mrf.mxu0
        %v1638 = vadd.f32 %v741, %v1637
        %v1639 = vpop.f32.mrf.mxu0
        %1640 = vdwg.mxu0
        %1641 = vrot.lane.b32.xlu0 %v1093, 64
        %v1642 = vpop.permute.xlu0 %1641
        %1643 = vrot.lane.b32.xlu0 %v1094, 64
        %v1644 = vpop.permute.xlu0 %1643
        %v1646 = vsel %vm1112, %v1642, 0
        %v1649 = vsel %vm1112, %v1644, 0
        %1651 = vmatprep.subr.bf16.mxu0 0
        %1652 = vmatpush1.bf16.xpose.msra.mxu0 0
        %1653 = vmatprep.subr.bf16.mxu0 0
        %1654 = vmatpush1.bf16.xpose.msra.mxu0 0
        %1655 = vmatprep.subr.bf16.mxu0 0
        %1656 = vmatpush1.bf16.xpose.msra.mxu0 0
        %1657 = vmatprep.subr.bf16.mxu0 0
        %1658 = vmatpush1.bf16.xpose.msra.mxu0 0
        %1659 = vmatprep.subr.bf16.mxu0 0
        %1660 = vmatpush1.bf16.xpose.msra.mxu0 0
        %1661 = vmatprep.subr.bf16.mxu0 0
        %1662 = vmatpush1.bf16.xpose.msra.mxu0 0
        %1663 = vmatprep.subr.bf16.mxu0 0
        %1664 = vmatpush1.bf16.xpose.msra.mxu0 0
        %1665 = vmatprep.subr.bf16.mxu0 0
        %1666 = vmatpush1.bf16.xpose.msra.mxu0 %v1649
        %1667 = vmatprep.subr.bf16.mxu0 0
        %1668 = vmatpush2.bf16.xpose.msra.mxu0 0
        %1669 = vmatprep.subr.bf16.mxu0 0
        %1670 = vmatpush2.bf16.xpose.msra.mxu0 0
        %1671 = vmatprep.subr.bf16.mxu0 0
        %1672 = vmatpush2.bf16.xpose.msra.mxu0 0
        %1673 = vmatprep.subr.bf16.mxu0 0
        %1674 = vmatpush2.bf16.xpose.msra.mxu0 0
        %1675 = vmatprep.subr.bf16.mxu0 0
        %1676 = vmatpush2.bf16.xpose.msra.mxu0 0
        %1677 = vmatprep.subr.bf16.mxu0 0
        %1678 = vmatpush2.bf16.xpose.msra.mxu0 0
        %1679 = vmatprep.subr.bf16.mxu0 0
        %1680 = vmatpush2.bf16.xpose.msra.mxu0 0
        %1681 = vmatprep.subr.bf16.mxu0 0
        %1682 = vmatpush2.bf16.xpose.msra.mxu0 0
        %1683 = vmatprep.mubr.bf16.mxu0 0
        %1684 = vmatmul.mubr.bf16.gmra.mxu0 %v1646
        %v1685 = vpop.f32.mrf.mxu0
        %v1686 = vadd.f32 %v740, %v1685
        %v1687 = vpop.f32.mrf.mxu0
        %v1688 = vpop.f32.mrf.mxu0
        %v1689 = vadd.f32 %v741, %v1688
        %v1690 = vpop.f32.mrf.mxu0
        %1691 = vdwg.mxu0
        %v1692 = vsel %vm1207, %v1635, -inf
        %1693 = vmax.xlane.f32.xlu0 %v1692
        %v1694 = vpop.xlane.xlu0 %1693
        %v1695 = vsel %vm1207, %v1638, -inf
        %1696 = vmax.xlane.f32.xlu0 %v1695
        %v1697 = vpop.xlane.xlu0 %1696
        %v1698 = vsel %vm1207, %v1686, -inf
        %1699 = vmax.xlane.f32.xlu0 %v1698
        %v1700 = vpop.xlane.xlu0 %1699
        %v1701 = vsel %vm1207, %v1689, -inf
        %1702 = vmax.xlane.f32.xlu0 %v1701
        %v1703 = vpop.xlane.xlu0 %1702
        %v1704 = vsub.f32 %v1635, %v1694
        %v1705 = vsub.f32 %v1638, %v1697
        %v1706 = vsub.f32 %v1686, %v1700
        %v1707 = vsub.f32 %v1689, %v1703
        %v1708 = vmul.f32 %v1704, 1.442695
        %v1709 = vpow.pop %v1708
        %v1710 = vmul.f32 %v1705, 1.442695
        %v1711 = vpow.pop %v1710
        %v1712 = vmul.f32 %v1706, 1.442695
        %v1713 = vpow.pop %v1712
        %v1714 = vmul.f32 %v1707, 1.442695
        %v1715 = vpow.pop %v1714
        %v1716 = vsel %vm1207, %v1709, 0.0
        %1717 = vadd.xlane.f32.xlu0 %v1716
        %v1718 = vpop.xlane.xlu0 %1717
        %v1719 = vsel %vm1207, %v1711, 0.0
        %1720 = vadd.xlane.f32.xlu0 %v1719
        %v1721 = vpop.xlane.xlu0 %1720
        %v1722 = vsel %vm1207, %v1713, 0.0
        %1723 = vadd.xlane.f32.xlu0 %v1722
        %v1724 = vpop.xlane.xlu0 %1723
        %v1725 = vsel %vm1207, %v1715, 0.0
        %1726 = vadd.xlane.f32.xlu0 %v1725
        %v1727 = vpop.xlane.xlu0 %1726
        %v1728 = vrcp.pop %v1718
        %v1729 = vmul.f32 %v1709, %v1728
        %v1730 = vrcp.pop %v1721
        %v1731 = vmul.f32 %v1711, %v1730
        %v1732 = vrcp.pop %v1724
        %v1733 = vmul.f32 %v1713, %v1732
        %v1734 = vrcp.pop %v1727
        %v1735 = vmul.f32 %v1715, %v1734
        %v1736 = vpack.c.bf16 %v1731, %v1729
        %v1737 = vpack.c.bf16 %v1735, %v1733
        %1738 = vrot.lane.b32.xlu0 %v1092, 64
        %v1739 = vpop.permute.xlu0 %1738
        %v1742 = vsel %vm1207, %v1736, 0
        %1744 = vmatprep.subr.bf16.mxu0 0
        %1745 = vmatpush1.bf16.msra.mxu0 0
        %1746 = vmatprep.subr.bf16.mxu0 0
        %1747 = vmatpush1.bf16.msra.mxu0 0
        %1748 = vmatprep.subr.bf16.mxu0 0
        %1749 = vmatpush1.bf16.msra.mxu0 0
        %1750 = vmatprep.subr.bf16.mxu0 0
        %1751 = vmatpush1.bf16.msra.mxu0 0
        %1752 = vmatprep.subr.bf16.mxu0 0
        %1753 = vmatpush1.bf16.msra.mxu0 0
        %1754 = vmatprep.subr.bf16.mxu0 0
        %1755 = vmatpush1.bf16.msra.mxu0 0
        %1756 = vmatprep.subr.bf16.mxu0 0
        %1757 = vmatpush1.bf16.msra.mxu0 0
        %1758 = vmatprep.subr.bf16.mxu0 0
        %1759 = vmatpush1.bf16.msra.mxu0 %v1739
        %1760 = vmatprep.subr.bf16.mxu0 0
        %1761 = vmatpush2.bf16.msra.mxu0 0
        %1762 = vmatprep.subr.bf16.mxu0 0
        %1763 = vmatpush2.bf16.msra.mxu0 0
        %1764 = vmatprep.subr.bf16.mxu0 0
        %1765 = vmatpush2.bf16.msra.mxu0 0
        %1766 = vmatprep.subr.bf16.mxu0 0
        %1767 = vmatpush2.bf16.msra.mxu0 0
        %1768 = vmatprep.subr.bf16.mxu0 0
        %1769 = vmatpush2.bf16.msra.mxu0 0
        %1770 = vmatprep.subr.bf16.mxu0 0
        %1771 = vmatpush2.bf16.msra.mxu0 0
        %1772 = vmatprep.subr.bf16.mxu0 0
        %1773 = vmatpush2.bf16.msra.mxu0 0
        %1774 = vmatprep.subr.bf16.mxu0 0
        %1775 = vmatpush2.bf16.msra.mxu0 0
        %1776 = vmatprep.mubr.bf16.mxu0 0
        %1777 = vmatmul.mubr.bf16.gmra.mxu0 %v1742
        %v1778 = vpop.f32.mrf.mxu0
        %v1779 = vadd.f32 0.0, %v1778
        %v1780 = vpop.f32.mrf.mxu0
        %v1781 = vpop.f32.mrf.mxu0
        %v1782 = vadd.f32 0.0, %v1781
        %v1783 = vpop.f32.mrf.mxu0
        %1784 = vdwg.mxu0
        %1785 = vrot.lane.b32.xlu0 %v1095, 64
        %v1786 = vpop.permute.xlu0 %1785
        %v1789 = vsel %vm1207, %v1737, 0
        %1791 = vmatprep.subr.bf16.mxu0 0
        %1792 = vmatpush1.bf16.msra.mxu0 0
        %1793 = vmatprep.subr.bf16.mxu0 0
        %1794 = vmatpush1.bf16.msra.mxu0 0
        %1795 = vmatprep.subr.bf16.mxu0 0
        %1796 = vmatpush1.bf16.msra.mxu0 0
        %1797 = vmatprep.subr.bf16.mxu0 0
        %1798 = vmatpush1.bf16.msra.mxu0 0
        %1799 = vmatprep.subr.bf16.mxu0 0
        %1800 = vmatpush1.bf16.msra.mxu0 0
        %1801 = vmatprep.subr.bf16.mxu0 0
        %1802 = vmatpush1.bf16.msra.mxu0 0
        %1803 = vmatprep.subr.bf16.mxu0 0
        %1804 = vmatpush1.bf16.msra.mxu0 0
        %1805 = vmatprep.subr.bf16.mxu0 0
        %1806 = vmatpush1.bf16.msra.mxu0 %v1786
        %1807 = vmatprep.subr.bf16.mxu0 0
        %1808 = vmatpush2.bf16.msra.mxu0 0
        %1809 = vmatprep.subr.bf16.mxu0 0
        %1810 = vmatpush2.bf16.msra.mxu0 0
        %1811 = vmatprep.subr.bf16.mxu0 0
        %1812 = vmatpush2.bf16.msra.mxu0 0
        %1813 = vmatprep.subr.bf16.mxu0 0
        %1814 = vmatpush2.bf16.msra.mxu0 0
        %1815 = vmatprep.subr.bf16.mxu0 0
        %1816 = vmatpush2.bf16.msra.mxu0 0
        %1817 = vmatprep.subr.bf16.mxu0 0
        %1818 = vmatpush2.bf16.msra.mxu0 0
        %1819 = vmatprep.subr.bf16.mxu0 0
        %1820 = vmatpush2.bf16.msra.mxu0 0
        %1821 = vmatprep.subr.bf16.mxu0 0
        %1822 = vmatpush2.bf16.msra.mxu0 0
        %1823 = vmatprep.mubr.bf16.mxu0 0
        %1824 = vmatmul.mubr.bf16.gmra.mxu0 %v1789
        %v1825 = vpop.f32.mrf.mxu0
        %v1826 = vadd.f32 0.0, %v1825
        %v1827 = vpop.f32.mrf.mxu0
        %v1828 = vpop.f32.mrf.mxu0
        %v1829 = vadd.f32 0.0, %v1828
        %v1830 = vpop.f32.mrf.mxu0
        %1831 = vdwg.mxu0
        %1832 = vrot.lane.b32.xlu0 %v1090, 32
        %v1833 = vpop.permute.xlu0 %1832
        %1834 = vrot.lane.b32.xlu0 %v1091, 32
        %v1835 = vpop.permute.xlu0 %1834
        %v1837 = vsel %vm1112, %v1833, 0
        %v1840 = vsel %vm1112, %v1835, 0
        %1842 = vmatprep.subr.bf16.mxu0 0
        %1843 = vmatpush1.bf16.xpose.msra.mxu0 0
        %1844 = vmatprep.subr.bf16.mxu0 0
        %1845 = vmatpush1.bf16.xpose.msra.mxu0 0
        %1846 = vmatprep.subr.bf16.mxu0 0
        %1847 = vmatpush1.bf16.xpose.msra.mxu0 0
        %1848 = vmatprep.subr.bf16.mxu0 0
        %1849 = vmatpush1.bf16.xpose.msra.mxu0 0
        %1850 = vmatprep.subr.bf16.mxu0 0
        %1851 = vmatpush1.bf16.xpose.msra.mxu0 0
        %1852 = vmatprep.subr.bf16.mxu0 0
        %1853 = vmatpush1.bf16.xpose.msra.mxu0 0
        %1854 = vmatprep.subr.bf16.mxu0 0
        %1855 = vmatpush1.bf16.xpose.msra.mxu0 0
        %1856 = vmatprep.subr.bf16.mxu0 0
        %1857 = vmatpush1.bf16.xpose.msra.mxu0 %v1840
        %1858 = vmatprep.subr.bf16.mxu0 0
        %1859 = vmatpush2.bf16.xpose.msra.mxu0 0
        %1860 = vmatprep.subr.bf16.mxu0 0
        %1861 = vmatpush2.bf16.xpose.msra.mxu0 0
        %1862 = vmatprep.subr.bf16.mxu0 0
        %1863 = vmatpush2.bf16.xpose.msra.mxu0 0
        %1864 = vmatprep.subr.bf16.mxu0 0
        %1865 = vmatpush2.bf16.xpose.msra.mxu0 0
        %1866 = vmatprep.subr.bf16.mxu0 0
        %1867 = vmatpush2.bf16.xpose.msra.mxu0 0
        %1868 = vmatprep.subr.bf16.mxu0 0
        %1869 = vmatpush2.bf16.xpose.msra.mxu0 0
        %1870 = vmatprep.subr.bf16.mxu0 0
        %1871 = vmatpush2.bf16.xpose.msra.mxu0 0
        %1872 = vmatprep.subr.bf16.mxu0 0
        %1873 = vmatpush2.bf16.xpose.msra.mxu0 0
        %1874 = vmatprep.mubr.bf16.mxu0 0
        %1875 = vmatmul.mubr.bf16.gmra.mxu0 %v1837
        %v1876 = vpop.f32.mrf.mxu0
        %v1877 = vadd.f32 %v740, %v1876
        %v1878 = vpop.f32.mrf.mxu0
        %v1879 = vpop.f32.mrf.mxu0
        %v1880 = vadd.f32 %v741, %v1879
        %v1881 = vpop.f32.mrf.mxu0
        %1882 = vdwg.mxu0
        %1883 = vrot.lane.b32.xlu0 %v1093, 32
        %v1884 = vpop.permute.xlu0 %1883
        %1885 = vrot.lane.b32.xlu0 %v1094, 32
        %v1886 = vpop.permute.xlu0 %1885
        %v1888 = vsel %vm1112, %v1884, 0
        %v1891 = vsel %vm1112, %v1886, 0
        %1893 = vmatprep.subr.bf16.mxu0 0
        %1894 = vmatpush1.bf16.xpose.msra.mxu0 0
        %1895 = vmatprep.subr.bf16.mxu0 0
        %1896 = vmatpush1.bf16.xpose.msra.mxu0 0
        %1897 = vmatprep.subr.bf16.mxu0 0
        %1898 = vmatpush1.bf16.xpose.msra.mxu0 0
        %1899 = vmatprep.subr.bf16.mxu0 0
        %1900 = vmatpush1.bf16.xpose.msra.mxu0 0
        %1901 = vmatprep.subr.bf16.mxu0 0
        %1902 = vmatpush1.bf16.xpose.msra.mxu0 0
        %1903 = vmatprep.subr.bf16.mxu0 0
        %1904 = vmatpush1.bf16.xpose.msra.mxu0 0
        %1905 = vmatprep.subr.bf16.mxu0 0
        %1906 = vmatpush1.bf16.xpose.msra.mxu0 0
        %1907 = vmatprep.subr.bf16.mxu0 0
        %1908 = vmatpush1.bf16.xpose.msra.mxu0 %v1891
        %1909 = vmatprep.subr.bf16.mxu0 0
        %1910 = vmatpush2.bf16.xpose.msra.mxu0 0
        %1911 = vmatprep.subr.bf16.mxu0 0
        %1912 = vmatpush2.bf16.xpose.msra.mxu0 0
        %1913 = vmatprep.subr.bf16.mxu0 0
        %1914 = vmatpush2.bf16.xpose.msra.mxu0 0
        %1915 = vmatprep.subr.bf16.mxu0 0
        %1916 = vmatpush2.bf16.xpose.msra.mxu0 0
        %1917 = vmatprep.subr.bf16.mxu0 0
        %1918 = vmatpush2.bf16.xpose.msra.mxu0 0
        %1919 = vmatprep.subr.bf16.mxu0 0
        %1920 = vmatpush2.bf16.xpose.msra.mxu0 0
        %1921 = vmatprep.subr.bf16.mxu0 0
        %1922 = vmatpush2.bf16.xpose.msra.mxu0 0
        %1923 = vmatprep.subr.bf16.mxu0 0
        %1924 = vmatpush2.bf16.xpose.msra.mxu0 0
        %1925 = vmatprep.mubr.bf16.mxu0 0
        %1926 = vmatmul.mubr.bf16.gmra.mxu0 %v1888
        %v1927 = vpop.f32.mrf.mxu0
        %v1928 = vadd.f32 %v740, %v1927
        %v1929 = vpop.f32.mrf.mxu0
        %v1930 = vpop.f32.mrf.mxu0
        %v1931 = vadd.f32 %v741, %v1930
        %v1932 = vpop.f32.mrf.mxu0
        %1933 = vdwg.mxu0
        %v1934 = vsel %vm1207, %v1877, -inf
        %1935 = vmax.xlane.f32.xlu0 %v1934
        %v1936 = vpop.xlane.xlu0 %1935
        %v1937 = vsel %vm1207, %v1880, -inf
        %1938 = vmax.xlane.f32.xlu0 %v1937
        %v1939 = vpop.xlane.xlu0 %1938
        %v1940 = vsel %vm1207, %v1928, -inf
        %1941 = vmax.xlane.f32.xlu0 %v1940
        %v1942 = vpop.xlane.xlu0 %1941
        %v1943 = vsel %vm1207, %v1931, -inf
        %1944 = vmax.xlane.f32.xlu0 %v1943
        %v1945 = vpop.xlane.xlu0 %1944
        %v1946 = vsub.f32 %v1877, %v1936
        %v1947 = vsub.f32 %v1880, %v1939
        %v1948 = vsub.f32 %v1928, %v1942
        %v1949 = vsub.f32 %v1931, %v1945
        %v1950 = vmul.f32 %v1946, 1.442695
        %v1951 = vpow.pop %v1950
        %v1952 = vmul.f32 %v1947, 1.442695
        %v1953 = vpow.pop %v1952
        %v1954 = vmul.f32 %v1948, 1.442695
        %v1955 = vpow.pop %v1954
        %v1956 = vmul.f32 %v1949, 1.442695
        %v1957 = vpow.pop %v1956
        %v1958 = vsel %vm1207, %v1951, 0.0
        %1959 = vadd.xlane.f32.xlu0 %v1958
        %v1960 = vpop.xlane.xlu0 %1959
        %v1961 = vsel %vm1207, %v1953, 0.0
        %1962 = vadd.xlane.f32.xlu0 %v1961
        %v1963 = vpop.xlane.xlu0 %1962
        %v1964 = vsel %vm1207, %v1955, 0.0
        %1965 = vadd.xlane.f32.xlu0 %v1964
        %v1966 = vpop.xlane.xlu0 %1965
        %v1967 = vsel %vm1207, %v1957, 0.0
        %1968 = vadd.xlane.f32.xlu0 %v1967
        %v1969 = vpop.xlane.xlu0 %1968
        %v1970 = vrcp.pop %v1960
        %v1971 = vmul.f32 %v1951, %v1970
        %v1972 = vrcp.pop %v1963
        %v1973 = vmul.f32 %v1953, %v1972
        %v1974 = vrcp.pop %v1966
        %v1975 = vmul.f32 %v1955, %v1974
        %v1976 = vrcp.pop %v1969
        %v1977 = vmul.f32 %v1957, %v1976
        %v1978 = vpack.c.bf16 %v1973, %v1971
        %v1979 = vpack.c.bf16 %v1977, %v1975
        %1980 = vrot.lane.b32.xlu0 %v1092, 32
        %v1981 = vpop.permute.xlu0 %1980
        %v1984 = vsel %vm1207, %v1978, 0
        %1986 = vmatprep.subr.bf16.mxu0 0
        %1987 = vmatpush1.bf16.msra.mxu0 0
        %1988 = vmatprep.subr.bf16.mxu0 0
        %1989 = vmatpush1.bf16.msra.mxu0 0
        %1990 = vmatprep.subr.bf16.mxu0 0
        %1991 = vmatpush1.bf16.msra.mxu0 0
        %1992 = vmatprep.subr.bf16.mxu0 0
        %1993 = vmatpush1.bf16.msra.mxu0 0
        %1994 = vmatprep.subr.bf16.mxu0 0
        %1995 = vmatpush1.bf16.msra.mxu0 0
        %1996 = vmatprep.subr.bf16.mxu0 0
        %1997 = vmatpush1.bf16.msra.mxu0 0
        %1998 = vmatprep.subr.bf16.mxu0 0
        %1999 = vmatpush1.bf16.msra.mxu0 0
        %2000 = vmatprep.subr.bf16.mxu0 0
        %2001 = vmatpush1.bf16.msra.mxu0 %v1981
        %2002 = vmatprep.subr.bf16.mxu0 0
        %2003 = vmatpush2.bf16.msra.mxu0 0
        %2004 = vmatprep.subr.bf16.mxu0 0
        %2005 = vmatpush2.bf16.msra.mxu0 0
        %2006 = vmatprep.subr.bf16.mxu0 0
        %2007 = vmatpush2.bf16.msra.mxu0 0
        %2008 = vmatprep.subr.bf16.mxu0 0
        %2009 = vmatpush2.bf16.msra.mxu0 0
        %2010 = vmatprep.subr.bf16.mxu0 0
        %2011 = vmatpush2.bf16.msra.mxu0 0
        %2012 = vmatprep.subr.bf16.mxu0 0
        %2013 = vmatpush2.bf16.msra.mxu0 0
        %2014 = vmatprep.subr.bf16.mxu0 0
        %2015 = vmatpush2.bf16.msra.mxu0 0
        %2016 = vmatprep.subr.bf16.mxu0 0
        %2017 = vmatpush2.bf16.msra.mxu0 0
        %2018 = vmatprep.mubr.bf16.mxu0 0
        %2019 = vmatmul.mubr.bf16.gmra.mxu0 %v1984
        %v2020 = vpop.f32.mrf.mxu0
        %v2021 = vadd.f32 0.0, %v2020
        %v2022 = vpop.f32.mrf.mxu0
        %v2023 = vpop.f32.mrf.mxu0
        %v2024 = vadd.f32 0.0, %v2023
        %v2025 = vpop.f32.mrf.mxu0
        %2026 = vdwg.mxu0
        %2027 = vrot.lane.b32.xlu0 %v1095, 32
        %v2028 = vpop.permute.xlu0 %2027
        %v2031 = vsel %vm1207, %v1979, 0
        %2033 = vmatprep.subr.bf16.mxu0 0
        %2034 = vmatpush1.bf16.msra.mxu0 0
        %2035 = vmatprep.subr.bf16.mxu0 0
        %2036 = vmatpush1.bf16.msra.mxu0 0
        %2037 = vmatprep.subr.bf16.mxu0 0
        %2038 = vmatpush1.bf16.msra.mxu0 0
        %2039 = vmatprep.subr.bf16.mxu0 0
        %2040 = vmatpush1.bf16.msra.mxu0 0
        %2041 = vmatprep.subr.bf16.mxu0 0
        %2042 = vmatpush1.bf16.msra.mxu0 0
        %2043 = vmatprep.subr.bf16.mxu0 0
        %2044 = vmatpush1.bf16.msra.mxu0 0
        %2045 = vmatprep.subr.bf16.mxu0 0
        %2046 = vmatpush1.bf16.msra.mxu0 0
        %2047 = vmatprep.subr.bf16.mxu0 0
        %2048 = vmatpush1.bf16.msra.mxu0 %v2028
        %2049 = vmatprep.subr.bf16.mxu0 0
        %2050 = vmatpush2.bf16.msra.mxu0 0
        %2051 = vmatprep.subr.bf16.mxu0 0
        %2052 = vmatpush2.bf16.msra.mxu0 0
        %2053 = vmatprep.subr.bf16.mxu0 0
        %2054 = vmatpush2.bf16.msra.mxu0 0
        %2055 = vmatprep.subr.bf16.mxu0 0
        %2056 = vmatpush2.bf16.msra.mxu0 0
        %2057 = vmatprep.subr.bf16.mxu0 0
        %2058 = vmatpush2.bf16.msra.mxu0 0
        %2059 = vmatprep.subr.bf16.mxu0 0
        %2060 = vmatpush2.bf16.msra.mxu0 0
        %2061 = vmatprep.subr.bf16.mxu0 0
        %2062 = vmatpush2.bf16.msra.mxu0 0
        %2063 = vmatprep.subr.bf16.mxu0 0
        %2064 = vmatpush2.bf16.msra.mxu0 0
        %2065 = vmatprep.mubr.bf16.mxu0 0
        %2066 = vmatmul.mubr.bf16.gmra.mxu0 %v2031
        %v2067 = vpop.f32.mrf.mxu0
        %v2068 = vadd.f32 0.0, %v2067
        %v2069 = vpop.f32.mrf.mxu0
        %v2070 = vpop.f32.mrf.mxu0
        %v2071 = vadd.f32 0.0, %v2070
        %v2072 = vpop.f32.mrf.mxu0
        %2073 = vdwg.mxu0
        %2078 = vrot.lane.b32.xlu0 %v1536, 32
        %v2079 = vpop.permute.xlu0 %2078
        %2080 = vrot.lane.b32.xlu0 %v1539, 32
        %v2081 = vpop.permute.xlu0 %2080
        %2082 = vrot.lane.b32.xlu0 %v1584, 32
        %v2083 = vpop.permute.xlu0 %2082
        %2084 = vrot.lane.b32.xlu0 %v1587, 32
        %v2085 = vpop.permute.xlu0 %2084
        %2094 = vrot.lane.b32.xlu0 %v1779, 64
        %v2095 = vpop.permute.xlu0 %2094
        %2096 = vrot.lane.b32.xlu0 %v1782, 64
        %v2097 = vpop.permute.xlu0 %2096
        %2098 = vrot.lane.b32.xlu0 %v1826, 64
        %v2099 = vpop.permute.xlu0 %2098
        %2100 = vrot.lane.b32.xlu0 %v1829, 64
        %v2101 = vpop.permute.xlu0 %2100
        %2110 = vrot.lane.b32.xlu0 %v2021, 96
        %v2111 = vpop.permute.xlu0 %2110
        %2112 = vrot.lane.b32.xlu0 %v2024, 96
        %v2113 = vpop.permute.xlu0 %2112
        %2114 = vrot.lane.b32.xlu0 %v2068, 96
        %v2115 = vpop.permute.xlu0 %2114
        %2116 = vrot.lane.b32.xlu0 %v2071, 96
        %v2117 = vpop.permute.xlu0 %2116
        %v2122 = vsel %vm1112, %v1292, %v2079
        %v2123 = vsel %vm1112, %v1295, %v2081
        %v2124 = vsel %vm1112, %v1336, %v2083
        %v2125 = vsel %vm1112, %v1339, %v2085
        %vm2126 = vcmask 523264
        %v2127 = vsel %vm2126, %v2122, %v2095
        %v2128 = vsel %vm2126, %v2123, %v2097
        %v2129 = vsel %vm2126, %v2124, %v2099
        %v2130 = vsel %vm2126, %v2125, %v2101
        %vm2131 = vcmask 785408
        %v2132 = vsel %vm2131, %v2127, %v2111
        %v2133 = vsel %vm2131, %v2128, %v2113
        %v2134 = vsel %vm2131, %v2129, %v2115
        %v2135 = vsel %vm2131, %v2130, %v2117
        %v2136 = vpack.c.bf16 %v2133, %v2132
        %v2137 = vpack.c.bf16 %v2135, %v2134
        %v2154 = vunpack.c.l.b16 %v1096
        %v2155 = vunpack.c.l.b16 %v1097
        %v2156 = vunpack.c.l.b16 %v1098
        %v2157 = vunpack.c.l.b16 %v1099
        %v2158 = vunpack.c.l.b16 %v1100
        %v2159 = vunpack.c.l.b16 %v1101
        %v2160 = vunpack.c.l.b16 %v1102
        %v2161 = vunpack.c.l.b16 %v1103
        %v2162 = vunpack.c.l.b16 %v1104
        %v2163 = vunpack.c.l.b16 %v1105
        %v2164 = vunpack.c.l.b16 %v1106
        %v2165 = vunpack.c.l.b16 %v1107
        %v2166 = vunpack.c.l.b16 %v1108
        %v2167 = vunpack.c.l.b16 %v1109
        %v2168 = vunpack.c.l.b16 %v1110
        %v2169 = vunpack.c.l.b16 %v1111
        %v2170 = vpack.c.b16 %v2155, %v2154
        %v2171 = vpack.c.b16 %v2157, %v2156
        %v2172 = vpack.c.b16 %v2159, %v2158
        %v2173 = vpack.c.b16 %v2161, %v2160
        %v2174 = vpack.c.b16 %v2163, %v2162
        %v2175 = vpack.c.b16 %v2165, %v2164
        %v2176 = vpack.c.b16 %v2167, %v2166
        %v2177 = vpack.c.b16 %v2169, %v2168
        %2186 = vmatprep.subr.bf16.mxu0 0
        %2187 = vmatpush1.bf16.msra.mxu0 %v2177
        %2188 = vmatprep.subr.bf16.mxu0 0
        %2189 = vmatpush1.bf16.msra.mxu0 %v2176
        %2190 = vmatprep.subr.bf16.mxu0 0
        %2191 = vmatpush1.bf16.msra.mxu0 %v2175
        %2192 = vmatprep.subr.bf16.mxu0 0
        %2193 = vmatpush1.bf16.msra.mxu0 %v2174
        %2194 = vmatprep.subr.bf16.mxu0 0
        %2195 = vmatpush1.bf16.msra.mxu0 %v2173
        %2196 = vmatprep.subr.bf16.mxu0 0
        %2197 = vmatpush1.bf16.msra.mxu0 %v2172
        %2198 = vmatprep.subr.bf16.mxu0 0
        %2199 = vmatpush1.bf16.msra.mxu0 %v2171
        %2200 = vmatprep.subr.bf16.mxu0 0
        %2201 = vmatpush1.bf16.msra.mxu0 %v2170
        %2202 = vmatprep.subr.bf16.mxu0 0
        %2203 = vmatpush2.bf16.msra.mxu0 0
        %2204 = vmatprep.subr.bf16.mxu0 0
        %2205 = vmatpush2.bf16.msra.mxu0 0
        %2206 = vmatprep.subr.bf16.mxu0 0
        %2207 = vmatpush2.bf16.msra.mxu0 0
        %2208 = vmatprep.subr.bf16.mxu0 0
        %2209 = vmatpush2.bf16.msra.mxu0 0
        %2210 = vmatprep.subr.bf16.mxu0 0
        %2211 = vmatpush2.bf16.msra.mxu0 0
        %2212 = vmatprep.subr.bf16.mxu0 0
        %2213 = vmatpush2.bf16.msra.mxu0 0
        %2214 = vmatprep.subr.bf16.mxu0 0
        %2215 = vmatpush2.bf16.msra.mxu0 0
        %2216 = vmatprep.subr.bf16.mxu0 0
        %2217 = vmatpush2.bf16.msra.mxu0 0
        %2218 = vmatprep.mubr.bf16.mxu0 0
        %2219 = vmatmul.mubr.bf16.gmra.mxu0 %v2136
        %v2220 = vpop.f32.mrf.mxu0
        %v2221 = vadd.f32 0.0, %v2220
        %v2222 = vpop.f32.mrf.mxu0
        %v2223 = vpop.f32.mrf.mxu0
        %v2224 = vadd.f32 0.0, %v2223
        %v2225 = vpop.f32.mrf.mxu0
        %2226 = vmatprep.mubr.bf16.mxu0 0
        %2227 = vmatmul.mubr.bf16.gmra.mxu0 %v2137
        %v2228 = vpop.f32.mrf.mxu0
        %v2229 = vadd.f32 0.0, %v2228
        %v2230 = vpop.f32.mrf.mxu0
        %v2231 = vpop.f32.mrf.mxu0
        %v2232 = vadd.f32 0.0, %v2231
        %v2233 = vpop.f32.mrf.mxu0
        %2234 = vdwg.mxu0
        %v2235 = vadd.f32 %v729, %v2221
        %v2236 = vadd.f32 %v730, %v2224
        %v2237 = vadd.f32 %v731, %v2229
        %v2238 = vadd.f32 %v732, %v2232
        %v2239 = vld [vmem:[%s702] sm:$0x1]
        %v2241 = vlaneseq
        %v2242 = vshrl.u32 %v2241, 7
        %v2243 = vsub.s32 0, %v2242
        %v2244 = vrot.slane %v2239, %v2243
        %v2246 = vadd.f32 %v2235, %v2244
        %v2247 = vadd.f32 %v2236, %v2244
        %v2248 = vadd.f32 %v2237, %v2244
        %v2249 = vadd.f32 %v2238, %v2244
        %v2250 = vld [vmem:[%s705] sm:$0x1]
        %v2251 = vld [vmem:[%s708] sm:$0x1]
        %2252 = vadd.xlane.f32.xlu0 %v2246
        %v2253 = vpop.xlane.xlu0 %2252
        %2254 = vadd.xlane.f32.xlu0 %v2247
        %v2255 = vpop.xlane.xlu0 %2254
        %2256 = vadd.xlane.f32.xlu0 %v2248
        %v2257 = vpop.xlane.xlu0 %2256
        %2258 = vadd.xlane.f32.xlu0 %v2249
        %v2259 = vpop.xlane.xlu0 %2258
        %v2260 = vmul.f32 %v2253, %v752
        %v2261 = vmul.f32 %v2255, %v752
        %v2262 = vmul.f32 %v2257, %v752
        %v2263 = vmul.f32 %v2259, %v752
        %v2264 = vsub.f32 %v2246, %v2260
        %v2265 = vsub.f32 %v2247, %v2261
        %v2266 = vsub.f32 %v2248, %v2262
        %v2267 = vsub.f32 %v2249, %v2263
        %v2268 = vmul.f32 %v2264, %v2264
        %v2269 = vmul.f32 %v2265, %v2265
        %v2270 = vmul.f32 %v2266, %v2266
        %v2271 = vmul.f32 %v2267, %v2267
        %2272 = vadd.xlane.f32.xlu0 %v2268
        %v2273 = vpop.xlane.xlu0 %2272
        %2274 = vadd.xlane.f32.xlu0 %v2269
        %v2275 = vpop.xlane.xlu0 %2274
        %2276 = vadd.xlane.f32.xlu0 %v2270
        %v2277 = vpop.xlane.xlu0 %2276
        %2278 = vadd.xlane.f32.xlu0 %v2271
        %v2279 = vpop.xlane.xlu0 %2278
        %v2280 = vmul.f32 %v2273, %v752
        %v2281 = vmul.f32 %v2275, %v752
        %v2282 = vmul.f32 %v2277, %v752
        %v2283 = vmul.f32 %v2279, %v752
        %v2284 = vadd.f32 %v2280, 1e-05
        %v2285 = vadd.f32 %v2281, 1e-05
        %v2286 = vadd.f32 %v2282, 1e-05
        %v2287 = vadd.f32 %v2283, 1e-05
        %v2288 = vrsqrt.pop %v2284
        %v2289 = vrsqrt.pop %v2285
        %v2290 = vrsqrt.pop %v2286
        %v2291 = vrsqrt.pop %v2287
        %v2292 = vmul.f32 %v2264, %v2288
        %v2293 = vmul.f32 %v2265, %v2289
        %v2294 = vmul.f32 %v2266, %v2290
        %v2295 = vmul.f32 %v2267, %v2291
        %v2297 = vlaneseq
        %v2298 = vshrl.u32 %v2297, 7
        %v2299 = vsub.s32 0, %v2298
        %v2300 = vrot.slane %v2250, %v2299
        %v2302 = vmul.f32 %v2292, %v2300
        %v2303 = vmul.f32 %v2293, %v2300
        %v2304 = vmul.f32 %v2294, %v2300
        %v2305 = vmul.f32 %v2295, %v2300
        %v2307 = vlaneseq
        %v2308 = vshrl.u32 %v2307, 7
        %v2309 = vsub.s32 0, %v2308
        %v2310 = vrot.slane %v2251, %v2309
        %v2312 = vadd.f32 %v2302, %v2310
        %v2313 = vadd.f32 %v2303, %v2310
        %v2314 = vadd.f32 %v2304, %v2310
        %v2315 = vadd.f32 %v2305, %v2310
        %v2316 = vpack.c.bf16 %v2313, %v2312
        %v2317 = vpack.c.bf16 %v2315, %v2314
        %v2318 = vld [vmem:[%s593] sm:$0xff]
        %v2319 = vld [vmem:[%s593 + $0x8] sm:$0xff]
        %v2320 = vld [vmem:[%s593 + $0x10] sm:$0xff]
        %v2321 = vld [vmem:[%s593 + $0x18] sm:$0xff]
        %v2322 = vld [vmem:[%s593 + $0x20] sm:$0xff]
        %v2323 = vld [vmem:[%s593 + $0x28] sm:$0xff]
        %v2324 = vld [vmem:[%s593 + $0x30] sm:$0xff]
        %v2325 = vld [vmem:[%s593 + $0x38] sm:$0xff]
        %v2326 = vld [vmem:[%s593 + $0x40] sm:$0xff]
        %v2327 = vld [vmem:[%s593 + $0x48] sm:$0xff]
        %v2328 = vld [vmem:[%s593 + $0x50] sm:$0xff]
        %v2329 = vld [vmem:[%s593 + $0x58] sm:$0xff]
        %v2330 = vld [vmem:[%s593 + $0x60] sm:$0xff]
        %v2331 = vld [vmem:[%s593 + $0x68] sm:$0xff]
        %v2332 = vld [vmem:[%s593 + $0x70] sm:$0xff]
        %v2333 = vld [vmem:[%s593 + $0x78] sm:$0xff]
        %v2334 = vld [vmem:[%s712] sm:$0x3]
        %v2336 = vlaneseq
        %v2337 = vshrl.u32 %v2336, 7
        %v2338 = vsub.s32 0, %v2337
        %v2339 = vrot.slane %v2334, %v2338
        %v2340 = vlaneseq
        %v2341 = vshrl.u32 %v2340, 7
        %v2342 = vsub.s32 1, %v2341
        %v2343 = vrot.slane %v2334, %v2342
        %v2362 = vunpack.c.l.b16 %v2318
        %v2363 = vunpack.c.h.b16 %v2318
        %v2364 = vunpack.c.l.b16 %v2319
        %v2365 = vunpack.c.h.b16 %v2319
        %v2366 = vunpack.c.l.b16 %v2320
        %v2367 = vunpack.c.h.b16 %v2320
        %v2368 = vunpack.c.l.b16 %v2321
        %v2369 = vunpack.c.h.b16 %v2321
        %v2370 = vunpack.c.l.b16 %v2322
        %v2371 = vunpack.c.h.b16 %v2322
        %v2372 = vunpack.c.l.b16 %v2323
        %v2373 = vunpack.c.h.b16 %v2323
        %v2374 = vunpack.c.l.b16 %v2324
        %v2375 = vunpack.c.h.b16 %v2324
        %v2376 = vunpack.c.l.b16 %v2325
        %v2377 = vunpack.c.h.b16 %v2325
        %v2378 = vunpack.c.l.b16 %v2326
        %v2379 = vunpack.c.h.b16 %v2326
        %v2380 = vunpack.c.l.b16 %v2327
        %v2381 = vunpack.c.h.b16 %v2327
        %v2382 = vunpack.c.l.b16 %v2328
        %v2383 = vunpack.c.h.b16 %v2328
        %v2384 = vunpack.c.l.b16 %v2329
        %v2385 = vunpack.c.h.b16 %v2329
        %v2386 = vunpack.c.l.b16 %v2330
        %v2387 = vunpack.c.h.b16 %v2330
        %v2388 = vunpack.c.l.b16 %v2331
        %v2389 = vunpack.c.h.b16 %v2331
        %v2390 = vunpack.c.l.b16 %v2332
        %v2391 = vunpack.c.h.b16 %v2332
        %v2392 = vunpack.c.l.b16 %v2333
        %v2393 = vunpack.c.h.b16 %v2333
        %v2394 = vpack.c.b16 %v2364, %v2362
        %v2395 = vpack.c.b16 %v2365, %v2363
        %v2396 = vpack.c.b16 %v2368, %v2366
        %v2397 = vpack.c.b16 %v2369, %v2367
        %v2398 = vpack.c.b16 %v2372, %v2370
        %v2399 = vpack.c.b16 %v2373, %v2371
        %v2400 = vpack.c.b16 %v2376, %v2374
        %v2401 = vpack.c.b16 %v2377, %v2375
        %v2402 = vpack.c.b16 %v2380, %v2378
        %v2403 = vpack.c.b16 %v2381, %v2379
        %v2404 = vpack.c.b16 %v2384, %v2382
        %v2405 = vpack.c.b16 %v2385, %v2383
        %v2406 = vpack.c.b16 %v2388, %v2386
        %v2407 = vpack.c.b16 %v2389, %v2387
        %v2408 = vpack.c.b16 %v2392, %v2390
        %v2409 = vpack.c.b16 %v2393, %v2391
        %2426 = vmatprep.subr.bf16.mxu0 %v2409
        %2427 = vmatpush1.bf16.msra.mxu0 %v2408
        %2428 = vmatprep.subr.bf16.mxu0 %v2407
        %2429 = vmatpush1.bf16.msra.mxu0 %v2406
        %2430 = vmatprep.subr.bf16.mxu0 %v2405
        %2431 = vmatpush1.bf16.msra.mxu0 %v2404
        %2432 = vmatprep.subr.bf16.mxu0 %v2403
        %2433 = vmatpush1.bf16.msra.mxu0 %v2402
        %2434 = vmatprep.subr.bf16.mxu0 %v2401
        %2435 = vmatpush1.bf16.msra.mxu0 %v2400
        %2436 = vmatprep.subr.bf16.mxu0 %v2399
        %2437 = vmatpush1.bf16.msra.mxu0 %v2398
        %2438 = vmatprep.subr.bf16.mxu0 %v2397
        %2439 = vmatpush1.bf16.msra.mxu0 %v2396
        %2440 = vmatprep.subr.bf16.mxu0 %v2395
        %2441 = vmatpush1.bf16.msra.mxu0 %v2394
        %2442 = vmatprep.subr.bf16.mxu0 0
        %2443 = vmatpush2.bf16.msra.mxu0 0
        %2444 = vmatprep.subr.bf16.mxu0 0
        %2445 = vmatpush2.bf16.msra.mxu0 0
        %2446 = vmatprep.subr.bf16.mxu0 0
        %2447 = vmatpush2.bf16.msra.mxu0 0
        %2448 = vmatprep.subr.bf16.mxu0 0
        %2449 = vmatpush2.bf16.msra.mxu0 0
        %2450 = vmatprep.subr.bf16.mxu0 0
        %2451 = vmatpush2.bf16.msra.mxu0 0
        %2452 = vmatprep.subr.bf16.mxu0 0
        %2453 = vmatpush2.bf16.msra.mxu0 0
        %2454 = vmatprep.subr.bf16.mxu0 0
        %2455 = vmatpush2.bf16.msra.mxu0 0
        %2456 = vmatprep.subr.bf16.mxu0 0
        %2457 = vmatpush2.bf16.msra.mxu0 0
        %2458 = vmatprep.mubr.bf16.mxu0 0
        %2459 = vmatmul.mubr.bf16.gmra.mxu0 %v2316
        %v2460 = vpop.f32.mrf.mxu0
        %v2461 = vadd.f32 %v2339, %v2460
        %v2462 = vpop.f32.mrf.mxu0
        %v2463 = vadd.f32 %v2343, %v2462
        %v2464 = vpop.f32.mrf.mxu0
        %v2465 = vadd.f32 %v2339, %v2464
        %v2466 = vpop.f32.mrf.mxu0
        %v2467 = vadd.f32 %v2343, %v2466
        %2468 = vmatprep.mubr.bf16.mxu0 0
        %2469 = vmatmul.mubr.bf16.gmra.mxu0 %v2317
        %v2470 = vpop.f32.mrf.mxu0
        %v2471 = vadd.f32 %v2339, %v2470
        %v2472 = vpop.f32.mrf.mxu0
        %v2473 = vadd.f32 %v2343, %v2472
        %v2474 = vpop.f32.mrf.mxu0
        %v2475 = vadd.f32 %v2339, %v2474
        %v2476 = vpop.f32.mrf.mxu0
        %v2477 = vadd.f32 %v2343, %v2476
        %2478 = vdwg.mxu0
        %v2479 = vmul.f32 %v2461, 1.702
        %v2480 = vmul.f32 %v2463, 1.702
        %v2481 = vmul.f32 %v2465, 1.702
        %v2482 = vmul.f32 %v2467, 1.702
        %v2483 = vmul.f32 %v2471, 1.702
        %v2484 = vmul.f32 %v2473, 1.702
        %v2485 = vmul.f32 %v2475, 1.702
        %v2486 = vmul.f32 %v2477, 1.702
        %v2487 = vxor.u32 %v2479, 2147483648
        %v2488 = vxor.u32 %v2480, 2147483648
        %v2489 = vxor.u32 %v2481, 2147483648
        %v2490 = vxor.u32 %v2482, 2147483648
        %v2491 = vxor.u32 %v2483, 2147483648
        %v2492 = vxor.u32 %v2484, 2147483648
        %v2493 = vxor.u32 %v2485, 2147483648
        %v2494 = vxor.u32 %v2486, 2147483648
        %v2495 = vmul.f32 %v2487, 1.442695
        %v2496 = vpow.pop %v2495
        %v2497 = vmul.f32 %v2488, 1.442695
        %v2498 = vpow.pop %v2497
        %v2499 = vmul.f32 %v2489, 1.442695
        %v2500 = vpow.pop %v2499
        %v2501 = vmul.f32 %v2490, 1.442695
        %v2502 = vpow.pop %v2501
        %v2503 = vmul.f32 %v2491, 1.442695
        %v2504 = vpow.pop %v2503
        %v2505 = vmul.f32 %v2492, 1.442695
        %v2506 = vpow.pop %v2505
        %v2507 = vmul.f32 %v2493, 1.442695
        %v2508 = vpow.pop %v2507
        %v2509 = vmul.f32 %v2494, 1.442695
        %v2510 = vpow.pop %v2509
        %v2511 = vadd.f32 %v2496, 1.0
        %v2512 = vadd.f32 %v2498, 1.0
        %v2513 = vadd.f32 %v2500, 1.0
        %v2514 = vadd.f32 %v2502, 1.0
        %v2515 = vadd.f32 %v2504, 1.0
        %v2516 = vadd.f32 %v2506, 1.0
        %v2517 = vadd.f32 %v2508, 1.0
        %v2518 = vadd.f32 %v2510, 1.0
        %v2519 = vrcp.pop %v2511
        %v2520 = vmul.f32 1.0, %v2519
        %v2521 = vrcp.pop %v2512
        %v2522 = vmul.f32 1.0, %v2521
        %v2523 = vrcp.pop %v2513
        %v2524 = vmul.f32 1.0, %v2523
        %v2525 = vrcp.pop %v2514
        %v2526 = vmul.f32 1.0, %v2525
        %v2527 = vrcp.pop %v2515
        %v2528 = vmul.f32 1.0, %v2527
        %v2529 = vrcp.pop %v2516
        %v2530 = vmul.f32 1.0, %v2529
        %v2531 = vrcp.pop %v2517
        %v2532 = vmul.f32 1.0, %v2531
        %v2533 = vrcp.pop %v2518
        %v2534 = vmul.f32 1.0, %v2533
        %v2535 = vmul.f32 %v2461, %v2520
        %v2536 = vmul.f32 %v2463, %v2522
        %v2537 = vmul.f32 %v2465, %v2524
        %v2538 = vmul.f32 %v2467, %v2526
        %v2539 = vmul.f32 %v2471, %v2528
        %v2540 = vmul.f32 %v2473, %v2530
        %v2541 = vmul.f32 %v2475, %v2532
        %v2542 = vmul.f32 %v2477, %v2534
        %v2543 = vpack.c.bf16 %v2537, %v2535
        %v2544 = vpack.c.bf16 %v2538, %v2536
        %v2545 = vpack.c.bf16 %v2541, %v2539
        %v2546 = vpack.c.bf16 %v2542, %v2540
        %v2547 = vld [vmem:[%s602] sm:$0xf]
        %v2548 = vld [vmem:[%s602 + $0x4] sm:$0xf]
        %v2549 = vld [vmem:[%s602 + $0x8] sm:$0xf]
        %v2550 = vld [vmem:[%s602 + $0xc] sm:$0xf]
        %v2551 = vld [vmem:[%s602 + $0x10] sm:$0xf]
        %v2552 = vld [vmem:[%s602 + $0x14] sm:$0xf]
        %v2553 = vld [vmem:[%s602 + $0x18] sm:$0xf]
        %v2554 = vld [vmem:[%s602 + $0x1c] sm:$0xf]
        %v2555 = vld [vmem:[%s602 + $0x20] sm:$0xf]
        %v2556 = vld [vmem:[%s602 + $0x24] sm:$0xf]
        %v2557 = vld [vmem:[%s602 + $0x28] sm:$0xf]
        %v2558 = vld [vmem:[%s602 + $0x2c] sm:$0xf]
        %v2559 = vld [vmem:[%s602 + $0x30] sm:$0xf]
        %v2560 = vld [vmem:[%s602 + $0x34] sm:$0xf]
        %v2561 = vld [vmem:[%s602 + $0x38] sm:$0xf]
        %v2562 = vld [vmem:[%s602 + $0x3c] sm:$0xf]
        %v2563 = vld [vmem:[%s602 + $0x40] sm:$0xf]
        %v2564 = vld [vmem:[%s602 + $0x44] sm:$0xf]
        %v2565 = vld [vmem:[%s602 + $0x48] sm:$0xf]
        %v2566 = vld [vmem:[%s602 + $0x4c] sm:$0xf]
        %v2567 = vld [vmem:[%s602 + $0x50] sm:$0xf]
        %v2568 = vld [vmem:[%s602 + $0x54] sm:$0xf]
        %v2569 = vld [vmem:[%s602 + $0x58] sm:$0xf]
        %v2570 = vld [vmem:[%s602 + $0x5c] sm:$0xf]
        %v2571 = vld [vmem:[%s602 + $0x60] sm:$0xf]
        %v2572 = vld [vmem:[%s602 + $0x64] sm:$0xf]
        %v2573 = vld [vmem:[%s602 + $0x68] sm:$0xf]
        %v2574 = vld [vmem:[%s602 + $0x6c] sm:$0xf]
        %v2575 = vld [vmem:[%s602 + $0x70] sm:$0xf]
        %v2576 = vld [vmem:[%s602 + $0x74] sm:$0xf]
        %v2577 = vld [vmem:[%s602 + $0x78] sm:$0xf]
        %v2578 = vld [vmem:[%s602 + $0x7c] sm:$0xf]
        %v2611 = vunpack.c.l.b16 %v2547
        %v2612 = vunpack.c.l.b16 %v2548
        %v2613 = vunpack.c.l.b16 %v2549
        %v2614 = vunpack.c.l.b16 %v2550
        %v2615 = vunpack.c.l.b16 %v2551
        %v2616 = vunpack.c.l.b16 %v2552
        %v2617 = vunpack.c.l.b16 %v2553
        %v2618 = vunpack.c.l.b16 %v2554
        %v2619 = vunpack.c.l.b16 %v2555
        %v2620 = vunpack.c.l.b16 %v2556
        %v2621 = vunpack.c.l.b16 %v2557
        %v2622 = vunpack.c.l.b16 %v2558
        %v2623 = vunpack.c.l.b16 %v2559
        %v2624 = vunpack.c.l.b16 %v2560
        %v2625 = vunpack.c.l.b16 %v2561
        %v2626 = vunpack.c.l.b16 %v2562
        %v2627 = vunpack.c.l.b16 %v2563
        %v2628 = vunpack.c.l.b16 %v2564
        %v2629 = vunpack.c.l.b16 %v2565
        %v2630 = vunpack.c.l.b16 %v2566
        %v2631 = vunpack.c.l.b16 %v2567
        %v2632 = vunpack.c.l.b16 %v2568
        %v2633 = vunpack.c.l.b16 %v2569
        %v2634 = vunpack.c.l.b16 %v2570
        %v2635 = vunpack.c.l.b16 %v2571
        %v2636 = vunpack.c.l.b16 %v2572
        %v2637 = vunpack.c.l.b16 %v2573
        %v2638 = vunpack.c.l.b16 %v2574
        %v2639 = vunpack.c.l.b16 %v2575
        %v2640 = vunpack.c.l.b16 %v2576
        %v2641 = vunpack.c.l.b16 %v2577
        %v2642 = vunpack.c.l.b16 %v2578
        %v2643 = vpack.c.b16 %v2612, %v2611
        %v2644 = vpack.c.b16 %v2614, %v2613
        %v2645 = vpack.c.b16 %v2616, %v2615
        %v2646 = vpack.c.b16 %v2618, %v2617
        %v2647 = vpack.c.b16 %v2620, %v2619
        %v2648 = vpack.c.b16 %v2622, %v2621
        %v2649 = vpack.c.b16 %v2624, %v2623
        %v2650 = vpack.c.b16 %v2626, %v2625
        %v2651 = vpack.c.b16 %v2628, %v2627
        %v2652 = vpack.c.b16 %v2630, %v2629
        %v2653 = vpack.c.b16 %v2632, %v2631
        %v2654 = vpack.c.b16 %v2634, %v2633
        %v2655 = vpack.c.b16 %v2636, %v2635
        %v2656 = vpack.c.b16 %v2638, %v2637
        %v2657 = vpack.c.b16 %v2640, %v2639
        %v2658 = vpack.c.b16 %v2642, %v2641
        %2675 = vmatprep.subr.bf16.mxu0 0
        %2676 = vmatpush1.bf16.msra.mxu0 %v2650
        %2677 = vmatprep.subr.bf16.mxu0 0
        %2678 = vmatpush1.bf16.msra.mxu0 %v2649
        %2679 = vmatprep.subr.bf16.mxu0 0
        %2680 = vmatpush1.bf16.msra.mxu0 %v2648
        %2681 = vmatprep.subr.bf16.mxu0 0
        %2682 = vmatpush1.bf16.msra.mxu0 %v2647
        %2683 = vmatprep.subr.bf16.mxu0 0
        %2684 = vmatpush1.bf16.msra.mxu0 %v2646
        %2685 = vmatprep.subr.bf16.mxu0 0
        %2686 = vmatpush1.bf16.msra.mxu0 %v2645
        %2687 = vmatprep.subr.bf16.mxu0 0
        %2688 = vmatpush1.bf16.msra.mxu0 %v2644
        %2689 = vmatprep.subr.bf16.mxu0 0
        %2690 = vmatpush1.bf16.msra.mxu0 %v2643
        %2691 = vmatprep.subr.bf16.mxu0 0
        %2692 = vmatpush2.bf16.msra.mxu0 %v2658
        %2693 = vmatprep.subr.bf16.mxu0 0
        %2694 = vmatpush2.bf16.msra.mxu0 %v2657
        %2695 = vmatprep.subr.bf16.mxu0 0
        %2696 = vmatpush2.bf16.msra.mxu0 %v2656
        %2697 = vmatprep.subr.bf16.mxu0 0
        %2698 = vmatpush2.bf16.msra.mxu0 %v2655
        %2699 = vmatprep.subr.bf16.mxu0 0
        %2700 = vmatpush2.bf16.msra.mxu0 %v2654
        %2701 = vmatprep.subr.bf16.mxu0 0
        %2702 = vmatpush2.bf16.msra.mxu0 %v2653
        %2703 = vmatprep.subr.bf16.mxu0 0
        %2704 = vmatpush2.bf16.msra.mxu0 %v2652
        %2705 = vmatprep.subr.bf16.mxu0 0
        %2706 = vmatpush2.bf16.msra.mxu0 %v2651
        %2707 = vmatprep.mubr.bf16.mxu0 %v2544
        %2708 = vmatmul.mubr.bf16.gmra.mxu0 %v2543
        %v2709 = vpop.f32.mrf.mxu0
        %v2710 = vadd.f32 0.0, %v2709
        %v2711 = vpop.f32.mrf.mxu0
        %v2712 = vpop.f32.mrf.mxu0
        %v2713 = vadd.f32 0.0, %v2712
        %v2714 = vpop.f32.mrf.mxu0
        %2715 = vmatprep.mubr.bf16.mxu0 %v2546
        %2716 = vmatmul.mubr.bf16.gmra.mxu0 %v2545
        %v2717 = vpop.f32.mrf.mxu0
        %v2718 = vadd.f32 0.0, %v2717
        %v2719 = vpop.f32.mrf.mxu0
        %v2720 = vpop.f32.mrf.mxu0
        %v2721 = vadd.f32 0.0, %v2720
        %v2722 = vpop.f32.mrf.mxu0
        %2723 = vdwg.mxu0
        %v2724 = vadd.f32 %v2246, %v2710
        %v2725 = vadd.f32 %v2247, %v2713
        %v2726 = vadd.f32 %v2248, %v2718
        %v2727 = vadd.f32 %v2249, %v2721
        %v2728 = vld [vmem:[%s715] sm:$0x1]
        %v2730 = vlaneseq
        %v2731 = vshrl.u32 %v2730, 7
        %v2732 = vsub.s32 0, %v2731
        %v2733 = vrot.slane %v2728, %v2732
        %v2735 = vadd.f32 %v2724, %v2733
        %v2736 = vadd.f32 %v2725, %v2733
        %v2737 = vadd.f32 %v2726, %v2733
        %v2738 = vadd.f32 %v2727, %v2733
        %2739 = vst [vmem:[#allocation2] sm:$0xff] %v2735
        %2740 = vst [vmem:[#allocation2 + $0x8] sm:$0xff] %v2736
        %2741 = vst [vmem:[#allocation2 + $0x10] sm:$0xff] %v2737
        %2742 = vst [vmem:[#allocation2 + $0x18] sm:$0xff] %v2738
        %p2743 = scmp.eq.s32.totalorder %s33, 1
        // Predicated region
        $region97: #{frozen_clip_t5_forward.2} parent=79 // pred_check
          %p2744 = pneg %p2743
        $region98: #{frozen_clip_t5_forward.2} parent=79 // pred_check_branch
          %2746 = sbr.rel (%p2744) target = $region100
        $region99: #{frozen_clip_t5_forward.2} parent=79 // pred_region
          %v2747 = vld [vmem:[%s13] sm:$0x1]
          %v2748 = vld [vmem:[%s14] sm:$0x1]
          %2749 = vadd.xlane.f32.xlu0 %v2735
          %v2750 = vpop.xlane.xlu0 %2749
          %2751 = vadd.xlane.f32.xlu0 %v2736
          %v2752 = vpop.xlane.xlu0 %2751
          %2753 = vadd.xlane.f32.xlu0 %v2737
          %v2754 = vpop.xlane.xlu0 %2753
          %2755 = vadd.xlane.f32.xlu0 %v2738
          %v2756 = vpop.xlane.xlu0 %2755
          %v2757 = vmul.f32 %v2750, %v752
          %v2758 = vmul.f32 %v2752, %v752
          %v2759 = vmul.f32 %v2754, %v752
          %v2760 = vmul.f32 %v2756, %v752
          %v2761 = vsub.f32 %v2735, %v2757
          %v2762 = vsub.f32 %v2736, %v2758
          %v2763 = vsub.f32 %v2737, %v2759
          %v2764 = vsub.f32 %v2738, %v2760
          %v2765 = vmul.f32 %v2761, %v2761
          %v2766 = vmul.f32 %v2762, %v2762
          %v2767 = vmul.f32 %v2763, %v2763
          %v2768 = vmul.f32 %v2764, %v2764
          %2769 = vadd.xlane.f32.xlu0 %v2765
          %v2770 = vpop.xlane.xlu0 %2769
          %2771 = vadd.xlane.f32.xlu0 %v2766
          %v2772 = vpop.xlane.xlu0 %2771
          %2773 = vadd.xlane.f32.xlu0 %v2767
          %v2774 = vpop.xlane.xlu0 %2773
          %2775 = vadd.xlane.f32.xlu0 %v2768
          %v2776 = vpop.xlane.xlu0 %2775
          %v2777 = vmul.f32 %v2770, %v752
          %v2778 = vmul.f32 %v2772, %v752
          %v2779 = vmul.f32 %v2774, %v752
          %v2780 = vmul.f32 %v2776, %v752
          %v2781 = vadd.f32 %v2777, 1e-05
          %v2782 = vadd.f32 %v2778, 1e-05
          %v2783 = vadd.f32 %v2779, 1e-05
          %v2784 = vadd.f32 %v2780, 1e-05
          %v2785 = vrsqrt.pop %v2781
          %v2786 = vrsqrt.pop %v2782
          %v2787 = vrsqrt.pop %v2783
          %v2788 = vrsqrt.pop %v2784
          %v2789 = vmul.f32 %v2761, %v2785
          %v2790 = vmul.f32 %v2762, %v2786
          %v2791 = vmul.f32 %v2763, %v2787
          %v2792 = vmul.f32 %v2764, %v2788
          %v2794 = vlaneseq
          %v2795 = vshrl.u32 %v2794, 7
          %v2796 = vsub.s32 0, %v2795
          %v2797 = vrot.slane %v2747, %v2796
          %v2799 = vmul.f32 %v2789, %v2797
          %v2800 = vmul.f32 %v2790, %v2797
          %v2801 = vmul.f32 %v2791, %v2797
          %v2802 = vmul.f32 %v2792, %v2797
          %v2804 = vlaneseq
          %v2805 = vshrl.u32 %v2804, 7
          %v2806 = vsub.s32 0, %v2805
          %v2807 = vrot.slane %v2748, %v2806
          %v2809 = vadd.f32 %v2799, %v2807
          %v2810 = vadd.f32 %v2800, %v2807
          %v2811 = vadd.f32 %v2801, %v2807
          %v2812 = vadd.f32 %v2802, %v2807
          %2813 = vst [vmem:[#allocation9] sm:$0xff] %v2809
          %2814 = vst [vmem:[#allocation9 + $0x8] sm:$0xff] %v2810
          %2815 = vst [vmem:[#allocation9 + $0x10] sm:$0xff] %v2811
          %2816 = vst [vmem:[#allocation9 + $0x18] sm:$0xff] %v2812
        $region100: #{frozen_clip_t5_forward.2} parent=79 // pred_fallthru
          _
        // Predicated region
        $region101: #{frozen_clip_t5_forward.2} parent=79 // pred_check
          %p2817 = pneg %p421
        $region102: #{frozen_clip_t5_forward.2} parent=79 // pred_check_branch
          %2819 = sbr.rel (%p2817) target = $region104
        $region103: #{frozen_clip_t5_forward.2} parent=79 // pred_region
          %s2821 = ssub.s32 512, 512
          %2822 = vsyncadd [#allocation5], %s2821
          %s2823 = sshll.u32 [#allocation9], 4
          %s2824 = int_to_ptr.vmem [resolvable:$true] %s2823
          %2829 = dma.vmem_to_hbm [thread:$0]  %s2824, 512, %s15, [#allocation5], 128, 128, 8
        $region104: #{frozen_clip_t5_forward.2} parent=79 // pred_fallthru
          _
        // Predicated region
        $region105: #{frozen_clip_t5_forward.2} parent=79 // pred_check
          %p2830 = pneg %p421
        $region106: #{frozen_clip_t5_forward.2} parent=79 // pred_check_branch
          %2832 = sbr.rel (%p2830) target = $region108
        $region107: #{frozen_clip_t5_forward.2} parent=79 // pred_region
          %2833 = dma.done [#allocation5], 512
        $region108: #{frozen_clip_t5_forward.2} parent=79 // pred_fallthru
          _
      $region80: #{frozen_clip_t5_forward.2} parent=5 // pred_fallthru
        _
      %p2834 = scmp.le.s32.totalorder 2, %s28
      // Predicated region
      $region109: #{frozen_clip_t5_forward.2} parent=5 // pred_check
        %p2835 = pneg %p2834
      $region110: #{frozen_clip_t5_forward.2} parent=5 // pred_check_branch
        %2837 = sbr.rel (%p2835) target = $region112
      $region111: #{frozen_clip_t5_forward.2} parent=5 // pred_region
        %s2838 = ssub.s32 %s28, 2
      $region112: #{frozen_clip_t5_forward.2} parent=5 // pred_fallthru
        _
    $region6: #{frozen_clip_t5_forward.2} parent=1 // loop_footer
      %s32 = sadd.s32 1, %s28
    $region7: #{frozen_clip_t5_forward.2} parent=1 // loop_footer_branch
      %27 = sbr.rel target = $region3
    $region8: #{frozen_clip_t5_forward.2} parent=1 // loop_exit
      _
    %2839 = vsyncpa [#allocation4], 1
    %s2840 = scalar_lea.sflag [#allocation4], 1
    %2841 = vsyncpa %s2840, 1
    %2842 = vsyncpa [#allocation7], 1
    %s2843 = scalar_lea.sflag [#allocation7], 1
    %2844 = vsyncpa %s2843, 1
    %2845 = vsyncpa [#allocation5], 1
    %s2846 = scalar_lea.sflag [#allocation5], 1
    %2847 = vsyncpa %s2846, 1

// kernel: frozen_clip_t5_forward.3
$region0: #{frozen_clip_t5_forward.3}
  #allocation0 [shape = 'u32[]', space=smem, size = 0x4, offset = 0x4, fixed_abs, tag = 'smem constant byte address 0x4 - core index']
  #allocation1 [shape = 'u32[144,128]{1,0:T(1,128)}', space=vmem, size = 0x12000, scoped, tag = 'internal scratch']
  #allocation2 [shape = 'f32[32,128]{1,0:T(8,128)}', space=vmem, size = 0x4000, scoped, tag = 'scratch operand']
  %s0 = inlined_call_operand.vmem [shape: f32[32,128], index: 0, kind: input, shape index: {}]
  %s1 = inlined_call_operand.vmem [shape: f32[4,16,16], index: 1, kind: input, shape index: {}]
  %s2 = inlined_call_operand.vmem [shape: f32[2,1,128], index: 2, kind: input, shape index: {}]
  %s3 = inlined_call_operand.vmem [shape: bf16[2,128,384], index: 3, kind: input, shape index: {}]
  %s4 = inlined_call_operand.hbm [shape: bf16[2,128,128], index: 4, kind: input, shape index: {}]
  %s5 = inlined_call_operand.vmem [shape: f32[2,1,128], index: 5, kind: input, shape index: {}]
  %s6 = inlined_call_operand.vmem [shape: bf16[2,128,512], index: 6, kind: input, shape index: {}]
  %s7 = inlined_call_operand.vmem [shape: bf16[2,256,128], index: 7, kind: input, shape index: {}]
  %s8 = inlined_call_operand.vmem [shape: f32[1,128], index: 8, kind: input, shape index: {}]
  %s9 = inlined_call_operand.hbm [shape: f32[32,128], index: 9, kind: output, shape index: {}]
  %s10 = sld [smem:[#allocation0]]
  $region81: #{frozen_clip_t5_forward.3} parent=0
    _
  %s12 = ssub.s32 1, %s10
  %s13 = scalar_select 0, %s12, %s10
  $region1: #{frozen_clip_t5_forward.3} parent=0
    #allocation3 [shape = 'u8[65536]{0}', space=vmem, size = 0x10000, scoped, tag = 'input window, operand 4']
    #allocation4 [shape = 's32[2]{0}', space=sflag, size = 0x8, scoped, tag = 'scoped memory for frozen_clip_t5_forward.3']
    #allocation5 [shape = 's32[2]{0}', space=sflag, size = 0x8, scoped, tag = 'scoped memory for frozen_clip_t5_forward.3']
    #allocation6 [shape = 'u8[16384]{0}', space=vmem, size = 0x4000, scoped, tag = 'output window, operand 0, single buffered']
    %14 = vsyncpa [#allocation4], 0
    %s15 = scalar_lea.sflag [#allocation4], 1
    %16 = vsyncpa %s15, 0
    %17 = vsyncpa [#allocation5], 0
    loop: start=0, step=1, limit=4
    $region2: #{frozen_clip_t5_forward.3} parent=1 // loop_pre_header
      _
    $region3: #{frozen_clip_t5_forward.3} parent=1 // loop_header
      %s19 = sphi 0, %s23
      %p20 = scmp.ge.s32.totalorder %s19, 4
      %s27 = sphi 0, %s27
      %s29 = sphi 0, %s27
      %s30 = sphi 0, %s29
      %s44 = sphi 0, %s30
      %s48 = sphi 0, %s48
      %s50 = sphi 0, %s48
      %s51 = sphi 0, %s50
      %s65 = sphi 0, %s51
      %s71 = sphi 0, %s73
      %s74 = sphi 0, %s71
      %s75 = sphi 0, %s74
      %s91 = sphi 0, %s75
      %s97 = sphi 0, %s99
      %s100 = sphi 0, %s97
      %s101 = sphi 0, %s100
      %s117 = sphi 0, %s101
      %s123 = sphi 0, %s125
      %s126 = sphi 0, %s123
      %s127 = sphi 0, %s126
      %s143 = sphi 0, %s127
      %s149 = sphi 0, %s151
      %s152 = sphi 0, %s149
      %s153 = sphi 0, %s152
      %s169 = sphi 0, %s153
      %s175 = sphi 0, %s177
      %s178 = sphi 0, %s175
      %s179 = sphi 0, %s178
      %s195 = sphi 0, %s179
      %s201 = sphi 0, %s203
      %s204 = sphi 0, %s201
      %s205 = sphi 0, %s204
      %s221 = sphi 0, %s205
      %s225 = sphi 0, %s225
      %s227 = sphi 0, %s225
      %s228 = sphi 0, %s227
      %s242 = sphi 0, %s228
      %s246 = sphi 0, %s246
      %s248 = sphi 0, %s246
      %s249 = sphi 0, %s248
      %s263 = sphi 0, %s249
    $region4: #{frozen_clip_t5_forward.3} parent=1 // loop_header_branch
      %22 = sbr.rel (%p20) target = $region8
    $region5: #{frozen_clip_t5_forward.3} parent=1 // loop_body
      %s24 = ssub.s32 %s19, 1
      %s25 = ssub.s32 %s19, 2
      %s26 = sadd.s32 %s19, 1
      %s28 = sadd.s32 %s27, 1
      %p31 = scmp.eq.s32.totalorder %s19, 1
      %p32 = scmp.ne.s32.totalorder %s27, %s29
      %p33 = scmp.eq.s32.totalorder %s19, 0
      %p34 = por %p32, %p33
      %p35 = scmp.ne.s32.totalorder %s27, %s29
      %p36 = scmp.eq.s32.totalorder %s24, 1
      %p37 = por %p35, %p36
      %p38 = scmp.ne.s32.totalorder %s29, %s30
      %p39 = scmp.eq.s32.totalorder %s24, 0
      %p40 = por %p38, %p39
      %p41 = scmp.ne.s32.totalorder %s29, %s30
      %p42 = scmp.eq.s32.totalorder %s25, 1
      %p43 = por %p41, %p42
      %p45 = scmp.ne.s32.totalorder %s30, %s44
      %p46 = scmp.eq.s32.totalorder %s25, 0
      %p47 = por %p45, %p46
      %s49 = sadd.s32 %s48, 1
      %p52 = scmp.eq.s32.totalorder %s19, 1
      %p53 = scmp.ne.s32.totalorder %s48, %s50
      %p54 = scmp.eq.s32.totalorder %s19, 0
      %p55 = por %p53, %p54
      %p56 = scmp.ne.s32.totalorder %s48, %s50
      %p57 = scmp.eq.s32.totalorder %s24, 1
      %p58 = por %p56, %p57
      %p59 = scmp.ne.s32.totalorder %s50, %s51
      %p60 = scmp.eq.s32.totalorder %s24, 0
      %p61 = por %p59, %p60
      %p62 = scmp.ne.s32.totalorder %s50, %s51
      %p63 = scmp.eq.s32.totalorder %s25, 1
      %p64 = por %p62, %p63
      %p66 = scmp.ne.s32.totalorder %s51, %s65
      %p67 = scmp.eq.s32.totalorder %s25, 0
      %p68 = por %p66, %p67
      %s69 = ssub.s32 %s19, %s26
      %p70 = scmp.eq.s32.totalorder %s69, 0
      %s72 = sadd.s32 %s71, 1
      %s73 = scalar_select %p70, %s71, %s72
      %p76 = pneg %p70
      %p77 = scmp.eq.s32.totalorder %s19, 1
      %p78 = por %p76, %p77
      %p79 = scmp.ne.s32.totalorder %s71, %s74
      %p80 = scmp.eq.s32.totalorder %s19, 0
      %p81 = por %p79, %p80
      %p82 = scmp.ne.s32.totalorder %s71, %s74
      %p83 = scmp.eq.s32.totalorder %s24, 1
      %p84 = por %p82, %p83
      %p85 = scmp.ne.s32.totalorder %s74, %s75
      %p86 = scmp.eq.s32.totalorder %s24, 0
      %p87 = por %p85, %p86
      %p88 = scmp.ne.s32.totalorder %s74, %s75
      %p89 = scmp.eq.s32.totalorder %s25, 1
      %p90 = por %p88, %p89
      %p92 = scmp.ne.s32.totalorder %s75, %s91
      %p93 = scmp.eq.s32.totalorder %s25, 0
      %p94 = por %p92, %p93
      %s95 = ssub.s32 %s19, %s26
      %p96 = scmp.eq.s32.totalorder %s95, 0
      %s98 = sadd.s32 %s97, 1
      %s99 = scalar_select %p96, %s97, %s98
      %p102 = pneg %p96
      %p103 = scmp.eq.s32.totalorder %s19, 1
      %p104 = por %p102, %p103
      %p105 = scmp.ne.s32.totalorder %s97, %s100
      %p106 = scmp.eq.s32.totalorder %s19, 0
      %p107 = por %p105, %p106
      %p108 = scmp.ne.s32.totalorder %s97, %s100
      %p109 = scmp.eq.s32.totalorder %s24, 1
      %p110 = por %p108, %p109
      %p111 = scmp.ne.s32.totalorder %s100, %s101
      %p112 = scmp.eq.s32.totalorder %s24, 0
      %p113 = por %p111, %p112
      %p114 = scmp.ne.s32.totalorder %s100, %s101
      %p115 = scmp.eq.s32.totalorder %s25, 1
      %p116 = por %p114, %p115
      %p118 = scmp.ne.s32.totalorder %s101, %s117
      %p119 = scmp.eq.s32.totalorder %s25, 0
      %p120 = por %p118, %p119
      %s121 = ssub.s32 %s19, %s26
      %p122 = scmp.eq.s32.totalorder %s121, 0
      %s124 = sadd.s32 %s123, 1
      %s125 = scalar_select %p122, %s123, %s124
      %p128 = pneg %p122
      %p129 = scmp.eq.s32.totalorder %s19, 1
      %p130 = por %p128, %p129
      %p131 = scmp.ne.s32.totalorder %s123, %s126
      %p132 = scmp.eq.s32.totalorder %s19, 0
      %p133 = por %p131, %p132
      %p134 = scmp.ne.s32.totalorder %s123, %s126
      %p135 = scmp.eq.s32.totalorder %s24, 1
      %p136 = por %p134, %p135
      %p137 = scmp.ne.s32.totalorder %s126, %s127
      %p138 = scmp.eq.s32.totalorder %s24, 0
      %p139 = por %p137, %p138
      %p140 = scmp.ne.s32.totalorder %s126, %s127
      %p141 = scmp.eq.s32.totalorder %s25, 1
      %p142 = por %p140, %p141
      %p144 = scmp.ne.s32.totalorder %s127, %s143
      %p145 = scmp.eq.s32.totalorder %s25, 0
      %p146 = por %p144, %p145
      %s147 = ssub.s32 %s19, %s26
      %p148 = scmp.eq.s32.totalorder %s147, 0
      %s150 = sadd.s32 %s149, 1
      %s151 = scalar_select %p148, %s149, %s150
      %p154 = pneg %p148
      %p155 = scmp.eq.s32.totalorder %s19, 1
      %p156 = por %p154, %p155
      %p157 = scmp.ne.s32.totalorder %s149, %s152
      %p158 = scmp.eq.s32.totalorder %s19, 0
      %p159 = por %p157, %p158
      %p160 = scmp.ne.s32.totalorder %s149, %s152
      %p161 = scmp.eq.s32.totalorder %s24, 1
      %p162 = por %p160, %p161
      %p163 = scmp.ne.s32.totalorder %s152, %s153
      %p164 = scmp.eq.s32.totalorder %s24, 0
      %p165 = por %p163, %p164
      %p166 = scmp.ne.s32.totalorder %s152, %s153
      %p167 = scmp.eq.s32.totalorder %s25, 1
      %p168 = por %p166, %p167
      %p170 = scmp.ne.s32.totalorder %s153, %s169
      %p171 = scmp.eq.s32.totalorder %s25, 0
      %p172 = por %p170, %p171
      %s173 = ssub.s32 %s19, %s26
      %p174 = scmp.eq.s32.totalorder %s173, 0
      %s176 = sadd.s32 %s175, 1
      %s177 = scalar_select %p174, %s175, %s176
      %p180 = pneg %p174
      %p181 = scmp.eq.s32.totalorder %s19, 1
      %p182 = por %p180, %p181
      %p183 = scmp.ne.s32.totalorder %s175, %s178
      %p184 = scmp.eq.s32.totalorder %s19, 0
      %p185 = por %p183, %p184
      %p186 = scmp.ne.s32.totalorder %s175, %s178
      %p187 = scmp.eq.s32.totalorder %s24, 1
      %p188 = por %p186, %p187
      %p189 = scmp.ne.s32.totalorder %s178, %s179
      %p190 = scmp.eq.s32.totalorder %s24, 0
      %p191 = por %p189, %p190
      %p192 = scmp.ne.s32.totalorder %s178, %s179
      %p193 = scmp.eq.s32.totalorder %s25, 1
      %p194 = por %p192, %p193
      %p196 = scmp.ne.s32.totalorder %s179, %s195
      %p197 = scmp.eq.s32.totalorder %s25, 0
      %p198 = por %p196, %p197
      %s199 = ssub.s32 %s19, %s26
      %p200 = scmp.eq.s32.totalorder %s199, 0
      %s202 = sadd.s32 %s201, 1
      %s203 = scalar_select %p200, %s201, %s202
      %p206 = pneg %p200
      %p207 = scmp.eq.s32.totalorder %s19, 1
      %p208 = por %p206, %p207
      %p209 = scmp.ne.s32.totalorder %s201, %s204
      %p210 = scmp.eq.s32.totalorder %s19, 0
      %p211 = por %p209, %p210
      %p212 = scmp.ne.s32.totalorder %s201, %s204
      %p213 = scmp.eq.s32.totalorder %s24, 1
      %p214 = por %p212, %p213
      %p215 = scmp.ne.s32.totalorder %s204, %s205
      %p216 = scmp.eq.s32.totalorder %s24, 0
      %p217 = por %p215, %p216
      %p218 = scmp.ne.s32.totalorder %s204, %s205
      %p219 = scmp.eq.s32.totalorder %s25, 1
      %p220 = por %p218, %p219
      %p222 = scmp.ne.s32.totalorder %s205, %s221
      %p223 = scmp.eq.s32.totalorder %s25, 0
      %p224 = por %p222, %p223
      %s226 = sadd.s32 %s225, 1
      %p229 = scmp.eq.s32.totalorder %s19, 1
      %p230 = scmp.ne.s32.totalorder %s225, %s227
      %p231 = scmp.eq.s32.totalorder %s19, 0
      %p232 = por %p230, %p231
      %p233 = scmp.ne.s32.totalorder %s225, %s227
      %p234 = scmp.eq.s32.totalorder %s24, 1
      %p235 = por %p233, %p234
      %p236 = scmp.ne.s32.totalorder %s227, %s228
      %p237 = scmp.eq.s32.totalorder %s24, 0
      %p238 = por %p236, %p237
      %p239 = scmp.ne.s32.totalorder %s227, %s228
      %p240 = scmp.eq.s32.totalorder %s25, 1
      %p241 = por %p239, %p240
      %p243 = scmp.ne.s32.totalorder %s228, %s242
      %p244 = scmp.eq.s32.totalorder %s25, 0
      %p245 = por %p243, %p244
      %s247 = sadd.s32 %s246, 1
      %p250 = scmp.eq.s32.totalorder %s19, 1
      %p251 = scmp.ne.s32.totalorder %s246, %s248
      %p252 = scmp.eq.s32.totalorder %s19, 0
      %p253 = por %p251, %p252
      %p254 = scmp.ne.s32.totalorder %s246, %s248
      %p255 = scmp.eq.s32.totalorder %s24, 1
      %p256 = por %p254, %p255
      %p257 = scmp.ne.s32.totalorder %s248, %s249
      %p258 = scmp.eq.s32.totalorder %s24, 0
      %p259 = por %p257, %p258
      %p260 = scmp.ne.s32.totalorder %s248, %s249
      %p261 = scmp.eq.s32.totalorder %s25, 1
      %p262 = por %p260, %p261
      %p264 = scmp.ne.s32.totalorder %s249, %s263
      %p265 = scmp.eq.s32.totalorder %s25, 0
      %p266 = por %p264, %p265
      %p267 = scmp.le.s32.totalorder 1, %s19
      %p268 = scmp.lt.s32.totalorder %s19, 3
      %p269 = pnand %p267, %p268
      %p270 = pneg %p269
      // Predicated region
      $region9: #{frozen_clip_t5_forward.3} parent=5 // pred_check
        _
      $region10: #{frozen_clip_t5_forward.3} parent=5 // pred_check_branch
        %272 = sbr.rel (%p269) target = $region12
      $region11: #{frozen_clip_t5_forward.3} parent=5 // pred_region
        %s273 = ssub.s32 %s19, 1
        // Predicated region
        $region13: #{frozen_clip_t5_forward.3} parent=11 // pred_check
          %p274 = pneg %p40
        $region14: #{frozen_clip_t5_forward.3} parent=11 // pred_check_branch
          %276 = sbr.rel (%p274) target = $region16
        $region15: #{frozen_clip_t5_forward.3} parent=11 // pred_region
          _
        $region16: #{frozen_clip_t5_forward.3} parent=11 // pred_fallthru
          _
        // Predicated region
        $region17: #{frozen_clip_t5_forward.3} parent=11 // pred_check
          %p277 = pneg %p61
        $region18: #{frozen_clip_t5_forward.3} parent=11 // pred_check_branch
          %279 = sbr.rel (%p277) target = $region20
        $region19: #{frozen_clip_t5_forward.3} parent=11 // pred_region
          _
        $region20: #{frozen_clip_t5_forward.3} parent=11 // pred_fallthru
          _
        // Predicated region
        $region21: #{frozen_clip_t5_forward.3} parent=11 // pred_check
          %p280 = pneg %p238
        $region22: #{frozen_clip_t5_forward.3} parent=11 // pred_check_branch
          %282 = sbr.rel (%p280) target = $region24
        $region23: #{frozen_clip_t5_forward.3} parent=11 // pred_region
          _
        $region24: #{frozen_clip_t5_forward.3} parent=11 // pred_fallthru
          _
      $region12: #{frozen_clip_t5_forward.3} parent=5 // pred_fallthru
        _
      %p283 = scmp.lt.s32.totalorder %s19, 2
      // Predicated region
      $region25: #{frozen_clip_t5_forward.3} parent=5 // pred_check
        %p284 = pneg %p283
      $region26: #{frozen_clip_t5_forward.3} parent=5 // pred_check_branch
        %286 = sbr.rel (%p284) target = $region28
      $region27: #{frozen_clip_t5_forward.3} parent=5 // pred_region
        // Predicated region
        $region29: #{frozen_clip_t5_forward.3} parent=27 // pred_check
          %p287 = pneg %p81
        $region30: #{frozen_clip_t5_forward.3} parent=27 // pred_check_branch
          %289 = sbr.rel (%p287) target = $region32
        $region31: #{frozen_clip_t5_forward.3} parent=27 // pred_region
          %p290 = scmp.lt.s32.totalorder %s19, 1
          %s291 = scalar_select %p290, %s19, 1
          %s292 = scalar_lea.vmem %s2, %s291
        $region32: #{frozen_clip_t5_forward.3} parent=27 // pred_fallthru
          _
        // Predicated region
        $region33: #{frozen_clip_t5_forward.3} parent=27 // pred_check
          %p293 = pneg %p107
        $region34: #{frozen_clip_t5_forward.3} parent=27 // pred_check_branch
          %295 = sbr.rel (%p293) target = $region36
        $region35: #{frozen_clip_t5_forward.3} parent=27 // pred_region
          %p296 = scmp.lt.s32.totalorder %s19, 1
          %s297 = scalar_select %p296, %s19, 1
          %s298 = smul.addr %s297, 48
          %s299 = smul.addr %s298, 4
          %s300 = scalar_lea.vmem %s3, %s299
        $region36: #{frozen_clip_t5_forward.3} parent=27 // pred_fallthru
          _
        // Predicated region
        $region37: #{frozen_clip_t5_forward.3} parent=27 // pred_check
          %p301 = pneg %p133
        $region38: #{frozen_clip_t5_forward.3} parent=27 // pred_check_branch
          %303 = sbr.rel (%p301) target = $region40
        $region39: #{frozen_clip_t5_forward.3} parent=27 // pred_region
          %s304 = sand.u32 %s123, 1
          %s305 = scalar_lea.sflag [#allocation4], %s304
          %s306 = sand.u32 %s123, 1
          %s307 = smul.addr %s306, 64
          %s308 = scalar_lea.vmem [#allocation3], %s307
          %s310 = ssub.s32 1024, 1024
          %311 = vsyncadd %s305, %s310
          %s312 = smul.addr %s19, 16
          %s313 = smul.addr %s312, 64
          %s314 = scalar_lea.hbm %s4, %s313
          %s315 = sshll.u32 %s308, 4
          %s316 = int_to_ptr.vmem [resolvable:$true] %s315
          %321 = dma.hbm_to_vmem [thread:$0]  %s314, 1024, %s316, %s305, 64, 64, 4
        $region40: #{frozen_clip_t5_forward.3} parent=27 // pred_fallthru
          _
        // Predicated region
        $region41: #{frozen_clip_t5_forward.3} parent=27 // pred_check
          %p322 = pneg %p159
        $region42: #{frozen_clip_t5_forward.3} parent=27 // pred_check_branch
          %324 = sbr.rel (%p322) target = $region44
        $region43: #{frozen_clip_t5_forward.3} parent=27 // pred_region
          %p325 = scmp.lt.s32.totalorder %s19, 1
          %s326 = scalar_select %p325, %s19, 1
          %s327 = scalar_lea.vmem %s5, %s326
        $region44: #{frozen_clip_t5_forward.3} parent=27 // pred_fallthru
          _
        // Predicated region
        $region45: #{frozen_clip_t5_forward.3} parent=27 // pred_check
          %p328 = pneg %p185
        $region46: #{frozen_clip_t5_forward.3} parent=27 // pred_check_branch
          %330 = sbr.rel (%p328) target = $region48
        $region47: #{frozen_clip_t5_forward.3} parent=27 // pred_region
          %p331 = scmp.lt.s32.totalorder %s19, 1
          %s332 = scalar_select %p331, %s19, 1
          %s333 = smul.addr %s332, 64
          %s334 = smul.addr %s333, 4
          %s335 = scalar_lea.vmem %s6, %s334
        $region48: #{frozen_clip_t5_forward.3} parent=27 // pred_fallthru
          _
        // Predicated region
        $region49: #{frozen_clip_t5_forward.3} parent=27 // pred_check
          %p336 = pneg %p211
        $region50: #{frozen_clip_t5_forward.3} parent=27 // pred_check_branch
          %338 = sbr.rel (%p336) target = $region52
        $region51: #{frozen_clip_t5_forward.3} parent=27 // pred_region
          %p339 = scmp.lt.s32.totalorder %s19, 1
          %s340 = scalar_select %p339, %s19, 1
          %s341 = smul.addr %s340, 32
          %s342 = smul.addr %s341, 4
          %s343 = scalar_lea.vmem %s7, %s342
        $region52: #{frozen_clip_t5_forward.3} parent=27 // pred_fallthru
          _
      $region28: #{frozen_clip_t5_forward.3} parent=5 // pred_fallthru
        _
      %p344 = scmp.le.s32.totalorder 1, %s19
      %p345 = scmp.lt.s32.totalorder %s19, 3
      %p346 = pnand %p344, %p345
      %p347 = pneg %p346
      // Predicated region
      $region53: #{frozen_clip_t5_forward.3} parent=5 // pred_check
        _
      $region54: #{frozen_clip_t5_forward.3} parent=5 // pred_check_branch
        %349 = sbr.rel (%p346) target = $region56
      $region55: #{frozen_clip_t5_forward.3} parent=5 // pred_region
        %s350 = ssub.s32 %s19, 1
        %s351 = sand.u32 %s126, 1
        %s352 = scalar_lea.sflag [#allocation4], %s351
        %s353 = sand.u32 %s126, 1
        %s354 = smul.addr %s353, 64
        %s355 = scalar_lea.vmem [#allocation3], %s354
        // Predicated region
        $region57: #{frozen_clip_t5_forward.3} parent=55 // pred_check
          %p356 = pneg %p139
        $region58: #{frozen_clip_t5_forward.3} parent=55 // pred_check_branch
          %358 = sbr.rel (%p356) target = $region60
        $region59: #{frozen_clip_t5_forward.3} parent=55 // pred_region
          %359 = dma.done %s352, 1024
        $region60: #{frozen_clip_t5_forward.3} parent=55 // pred_fallthru
          _
        %p360 = pneg %p40
        %p361 = pneg %p37
        %p362 = pneg %p61
        %p363 = pneg %p58
        %p364 = scmp.lt.s32.totalorder %s24, 1
        %s365 = scalar_select %p364, %s24, 1
        %s366 = scalar_lea.vmem %s2, %s365
        %p367 = pneg %p87
        %p368 = pneg %p84
        %p369 = scmp.lt.s32.totalorder %s24, 1
        %s370 = scalar_select %p369, %s24, 1
        %s371 = smul.addr %s370, 48
        %s372 = smul.addr %s371, 4
        %s373 = scalar_lea.vmem %s3, %s372
        %p374 = pneg %p113
        %p375 = pneg %p110
        %s376 = sand.u32 %s126, 1
        %s377 = scalar_lea.sflag [#allocation4], %s376
        %s378 = sand.u32 %s126, 1
        %s379 = smul.addr %s378, 64
        %s380 = scalar_lea.vmem [#allocation3], %s379
        %p381 = pneg %p139
        %p382 = pneg %p136
        %p383 = scmp.lt.s32.totalorder %s24, 1
        %s384 = scalar_select %p383, %s24, 1
        %s385 = scalar_lea.vmem %s5, %s384
        %p386 = pneg %p165
        %p387 = pneg %p162
        %p388 = scmp.lt.s32.totalorder %s24, 1
        %s389 = scalar_select %p388, %s24, 1
        %s390 = smul.addr %s389, 64
        %s391 = smul.addr %s390, 4
        %s392 = scalar_lea.vmem %s6, %s391
        %p393 = pneg %p191
        %p394 = pneg %p188
        %p395 = scmp.lt.s32.totalorder %s24, 1
        %s396 = scalar_select %p395, %s24, 1
        %s397 = smul.addr %s396, 32
        %s398 = smul.addr %s397, 4
        %s399 = scalar_lea.vmem %s7, %s398
        %p400 = pneg %p217
        %p401 = pneg %p214
        %p402 = pneg %p238
        %p403 = pneg %p235
        %p404 = pneg %p259
        %p405 = pneg %p256
        %p406 = scmp.lt.s32.totalorder %s24, 1
        %s407 = scalar_select %p406, %s24, 1
        %s408 = scalar_lea.vmem %s2, %s407
        %p409 = scmp.lt.s32.totalorder %s24, 1
        %s410 = scalar_select %p409, %s24, 1
        %s411 = smul.addr %s410, 48
        %s412 = smul.addr %s411, 4
        %s413 = scalar_lea.vmem %s3, %s412
        %p414 = scmp.lt.s32.totalorder %s24, 1
        %s415 = scalar_select %p414, %s24, 1
        %s416 = scalar_lea.vmem %s5, %s415
        %p417 = scmp.lt.s32.totalorder %s24, 1
        %s418 = scalar_select %p417, %s24, 1
        %s419 = smul.addr %s418, 64
        %s420 = smul.addr %s419, 4
        %s421 = scalar_lea.vmem %s6, %s420
        %p422 = scmp.lt.s32.totalorder %s24, 1
        %s423 = scalar_select %p422, %s24, 1
        %s424 = smul.addr %s423, 32
        %s425 = smul.addr %s424, 4
        %s426 = scalar_lea.vmem %s7, %s425
        %p428 = scmp.eq.s32.totalorder %s24, 0
        // Predicated region
        $region61: #{frozen_clip_t5_forward.3} parent=55 // pred_check
          %p429 = pneg %p428
        $region62: #{frozen_clip_t5_forward.3} parent=55 // pred_check_branch
          %431 = sbr.rel (%p429) target = $region64
        $region63: #{frozen_clip_t5_forward.3} parent=55 // pred_region
          %v432 = vld [vmem:[%s0] sm:$0xff]
          %v433 = vld [vmem:[%s0 + $0x8] sm:$0xff]
          %v434 = vld [vmem:[%s0 + $0x10] sm:$0xff]
          %v435 = vld [vmem:[%s0 + $0x18] sm:$0xff]
          %436 = vst [vmem:[#allocation2] sm:$0xff] %v432
          %437 = vst [vmem:[#allocation2 + $0x8] sm:$0xff] %v433
          %438 = vst [vmem:[#allocation2 + $0x10] sm:$0xff] %v434
          %439 = vst [vmem:[#allocation2 + $0x18] sm:$0xff] %v435
        $region64: #{frozen_clip_t5_forward.3} parent=55 // pred_fallthru
          _
        %v440 = vld [vmem:[#allocation2] sm:$0xff]
        %v441 = vld [vmem:[#allocation2 + $0x8] sm:$0xff]
        %v442 = vld [vmem:[#allocation2 + $0x10] sm:$0xff]
        %v443 = vld [vmem:[#allocation2 + $0x18] sm:$0xff]
        %v444 = vld [vmem:[%s1] sm:$0xff]
        %v445 = vld [vmem:[%s1 + $0x8] sm:$0xff]
        %v446 = vld [vmem:[%s1 + $0x10] sm:$0xff]
        %v447 = vld [vmem:[%s1 + $0x18] sm:$0xff]
        %v448 = vld [vmem:[%s1 + $0x20] sm:$0xff]
        %v449 = vld [vmem:[%s1 + $0x28] sm:$0xff]
        %v450 = vld [vmem:[%s1 + $0x30] sm:$0xff]
        %v451 = vld [vmem:[%s1 + $0x38] sm:$0xff]
        %v452 = vld [vmem:[%s408] sm:$0x1]
        %v453 = vmul.f32 %v440, %v440
        %v454 = vmul.f32 %v441, %v441
        %v455 = vmul.f32 %v442, %v442
        %v456 = vmul.f32 %v443, %v443
        %457 = vadd.xlane.f32.xlu0 %v453
        %v458 = vpop.xlane.xlu0 %457
        %459 = vadd.xlane.f32.xlu0 %v454
        %v460 = vpop.xlane.xlu0 %459
        %461 = vadd.xlane.f32.xlu0 %v455
        %v462 = vpop.xlane.xlu0 %461
        %463 = vadd.xlane.f32.xlu0 %v456
        %v464 = vpop.xlane.xlu0 %463
        %v465 = vrcp.pop 128.0
        %v466 = vmul.f32 %v458, %v465
        %v467 = vmul.f32 %v460, %v465
        %v468 = vmul.f32 %v462, %v465
        %v469 = vmul.f32 %v464, %v465
        %v470 = vadd.f32 %v466, 1e-06
        %v471 = vadd.f32 %v467, 1e-06
        %v472 = vadd.f32 %v468, 1e-06
        %v473 = vadd.f32 %v469, 1e-06
        %v474 = vrsqrt.pop %v470
        %v475 = vrsqrt.pop %v471
        %v476 = vrsqrt.pop %v472
        %v477 = vrsqrt.pop %v473
        %v478 = vmul.f32 %v440, %v474
        %v479 = vmul.f32 %v441, %v475
        %v480 = vmul.f32 %v442, %v476
        %v481 = vmul.f32 %v443, %v477
        %v483 = vlaneseq
        %v484 = vshrl.u32 %v483, 7
        %v485 = vsub.s32 0, %v484
        %v486 = vrot.slane %v452, %v485
        %v488 = vmul.f32 %v478, %v486
        %v489 = vmul.f32 %v479, %v486
        %v490 = vmul.f32 %v480, %v486
        %v491 = vmul.f32 %v481, %v486
        %v492 = vpack.c.bf16 %v489, %v488
        %v493 = vpack.c.bf16 %v491, %v490
        %v494 = vld [vmem:[%s413] sm:$0xff]
        %v495 = vld [vmem:[%s413 + $0x8] sm:$0xf]
        %v496 = vld [vmem:[%s413 + $0xc] sm:$0xff]
        %v497 = vld [vmem:[%s413 + $0x14] sm:$0xf]
        %v498 = vld [vmem:[%s413 + $0x18] sm:$0xff]
        %v499 = vld [vmem:[%s413 + $0x20] sm:$0xf]
        %v500 = vld [vmem:[%s413 + $0x24] sm:$0xff]
        %v501 = vld [vmem:[%s413 + $0x2c] sm:$0xf]
        %v502 = vld [vmem:[%s413 + $0x30] sm:$0xff]
        %v503 = vld [vmem:[%s413 + $0x38] sm:$0xf]
        %v504 = vld [vmem:[%s413 + $0x3c] sm:$0xff]
        %v505 = vld [vmem:[%s413 + $0x44] sm:$0xf]
        %v506 = vld [vmem:[%s413 + $0x48] sm:$0xff]
        %v507 = vld [vmem:[%s413 + $0x50] sm:$0xf]
        %v508 = vld [vmem:[%s413 + $0x54] sm:$0xff]
        %v509 = vld [vmem:[%s413 + $0x5c] sm:$0xf]
        %v510 = vld [vmem:[%s413 + $0x60] sm:$0xff]
        %v511 = vld [vmem:[%s413 + $0x68] sm:$0xf]
        %v512 = vld [vmem:[%s413 + $0x6c] sm:$0xff]
        %v513 = vld [vmem:[%s413 + $0x74] sm:$0xf]
        %v514 = vld [vmem:[%s413 + $0x78] sm:$0xff]
        %v515 = vld [vmem:[%s413 + $0x80] sm:$0xf]
        %v516 = vld [vmem:[%s413 + $0x84] sm:$0xff]
        %v517 = vld [vmem:[%s413 + $0x8c] sm:$0xf]
        %v518 = vld [vmem:[%s413 + $0x90] sm:$0xff]
        %v519 = vld [vmem:[%s413 + $0x98] sm:$0xf]
        %v520 = vld [vmem:[%s413 + $0x9c] sm:$0xff]
        %v521 = vld [vmem:[%s413 + $0xa4] sm:$0xf]
        %v522 = vld [vmem:[%s413 + $0xa8] sm:$0xff]
        %v523 = vld [vmem:[%s413 + $0xb0] sm:$0xf]
        %v524 = vld [vmem:[%s413 + $0xb4] sm:$0xff]
        %v525 = vld [vmem:[%s413 + $0xbc] sm:$0xf]
        %v558 = vunpack.c.l.b16 %v494
        %v559 = vunpack.c.h.b16 %v494
        %v560 = vunpack.c.l.b16 %v495
        %v561 = vunpack.c.l.b16 %v496
        %v562 = vunpack.c.h.b16 %v496
        %v563 = vunpack.c.l.b16 %v497
        %v564 = vunpack.c.l.b16 %v498
        %v565 = vunpack.c.h.b16 %v498
        %v566 = vunpack.c.l.b16 %v499
        %v567 = vunpack.c.l.b16 %v500
        %v568 = vunpack.c.h.b16 %v500
        %v569 = vunpack.c.l.b16 %v501
        %v570 = vunpack.c.l.b16 %v502
        %v571 = vunpack.c.h.b16 %v502
        %v572 = vunpack.c.l.b16 %v503
        %v573 = vunpack.c.l.b16 %v504
        %v574 = vunpack.c.h.b16 %v504
        %v575 = vunpack.c.l.b16 %v505
        %v576 = vunpack.c.l.b16 %v506
        %v577 = vunpack.c.h.b16 %v506
        %v578 = vunpack.c.l.b16 %v507
        %v579 = vunpack.c.l.b16 %v508
        %v580 = vunpack.c.h.b16 %v508
        %v581 = vunpack.c.l.b16 %v509
        %v582 = vunpack.c.l.b16 %v510
        %v583 = vunpack.c.h.b16 %v510
        %v584 = vunpack.c.l.b16 %v511
        %v585 = vunpack.c.l.b16 %v512
        %v586 = vunpack.c.h.b16 %v512
        %v587 = vunpack.c.l.b16 %v513
        %v588 = vunpack.c.l.b16 %v514
        %v589 = vunpack.c.h.b16 %v514
        %v590 = vunpack.c.l.b16 %v515
        %v591 = vunpack.c.l.b16 %v516
        %v592 = vunpack.c.h.b16 %v516
        %v593 = vunpack.c.l.b16 %v517
        %v594 = vunpack.c.l.b16 %v518
        %v595 = vunpack.c.h.b16 %v518
        %v596 = vunpack.c.l.b16 %v519
        %v597 = vunpack.c.l.b16 %v520
        %v598 = vunpack.c.h.b16 %v520
        %v599 = vunpack.c.l.b16 %v521
        %v600 = vunpack.c.l.b16 %v522
        %v601 = vunpack.c.h.b16 %v522
        %v602 = vunpack.c.l.b16 %v523
        %v603 = vunpack.c.l.b16 %v524
        %v604 = vunpack.c.h.b16 %v524
        %v605 = vunpack.c.l.b16 %v525
        %v606 = vpack.c.b16 %v561, %v558
        %v607 = vpack.c.b16 %v562, %v559
        %v608 = vpack.c.b16 %v563, %v560
        %v609 = vpack.c.b16 %v567, %v564
        %v610 = vpack.c.b16 %v568, %v565
        %v611 = vpack.c.b16 %v569, %v566
        %v612 = vpack.c.b16 %v573, %v570
        %v613 = vpack.c.b16 %v574, %v571
        %v614 = vpack.c.b16 %v575, %v572
        %v615 = vpack.c.b16 %v579, %v576
        %v616 = vpack.c.b16 %v580, %v577
        %v617 = vpack.c.b16 %v581, %v578
        %v618 = vpack.c.b16 %v585, %v582
        %v619 = vpack.c.b16 %v586, %v583
        %v620 = vpack.c.b16 %v587, %v584
        %v621 = vpack.c.b16 %v591, %v588
        %v622 = vpack.c.b16 %v592, %v589
        %v623 = vpack.c.b16 %v593, %v590
        %v624 = vpack.c.b16 %v597, %v594
        %v625 = vpack.c.b16 %v598, %v595
        %v626 = vpack.c.b16 %v599, %v596
        %v627 = vpack.c.b16 %v603, %v600
        %v628 = vpack.c.b16 %v604, %v601
        %v629 = vpack.c.b16 %v605, %v602
        %654 = vmatprep.subr.bf16.mxu0 %v628
        %655 = vmatpush1.bf16.msra.mxu0 %v627
        %656 = vmatprep.subr.bf16.mxu0 %v625
        %657 = vmatpush1.bf16.msra.mxu0 %v624
        %658 = vmatprep.subr.bf16.mxu0 %v622
        %659 = vmatpush1.bf16.msra.mxu0 %v621
        %660 = vmatprep.subr.bf16.mxu0 %v619
        %661 = vmatpush1.bf16.msra.mxu0 %v618
        %662 = vmatprep.subr.bf16.mxu0 %v616
        %663 = vmatpush1.bf16.msra.mxu0 %v615
        %664 = vmatprep.subr.bf16.mxu0 %v613
        %665 = vmatpush1.bf16.msra.mxu0 %v612
        %666 = vmatprep.subr.bf16.mxu0 %v610
        %667 = vmatpush1.bf16.msra.mxu0 %v609
        %668 = vmatprep.subr.bf16.mxu0 %v607
        %669 = vmatpush1.bf16.msra.mxu0 %v606
        %670 = vmatprep.subr.bf16.mxu0 0
        %671 = vmatpush2.bf16.msra.mxu0 0
        %672 = vmatprep.subr.bf16.mxu0 0
        %673 = vmatpush2.bf16.msra.mxu0 0
        %674 = vmatprep.subr.bf16.mxu0 0
        %675 = vmatpush2.bf16.msra.mxu0 0
        %676 = vmatprep.subr.bf16.mxu0 0
        %677 = vmatpush2.bf16.msra.mxu0 0
        %678 = vmatprep.subr.bf16.mxu0 0
        %679 = vmatpush2.bf16.msra.mxu0 0
        %680 = vmatprep.subr.bf16.mxu0 0
        %681 = vmatpush2.bf16.msra.mxu0 0
        %682 = vmatprep.subr.bf16.mxu0 0
        %683 = vmatpush2.bf16.msra.mxu0 0
        %684 = vmatprep.subr.bf16.mxu0 0
        %685 = vmatpush2.bf16.msra.mxu0 0
        %686 = vmatprep.mubr.bf16.mxu0 0
        %687 = vmatmul.mubr.bf16.gmra.mxu0 %v492
        %v688 = vpop.f32.mrf.mxu0
        %v689 = vadd.f32 0.0, %v688
        %v690 = vpop.f32.mrf.mxu0
        %v691 = vadd.f32 0.0, %v690
        %v692 = vpop.f32.mrf.mxu0
        %v693 = vadd.f32 0.0, %v692
        %v694 = vpop.f32.mrf.mxu0
        %v695 = vadd.f32 0.0, %v694
        %696 = vmatprep.mubr.bf16.mxu0 0
        %697 = vmatmul.mubr.bf16.gmra.mxu0 %v493
        %v698 = vpop.f32.mrf.mxu0
        %v699 = vadd.f32 0.0, %v698
        %v700 = vpop.f32.mrf.mxu0
        %v701 = vadd.f32 0.0, %v700
        %v702 = vpop.f32.mrf.mxu0
        %v703 = vadd.f32 0.0, %v702
        %v704 = vpop.f32.mrf.mxu0
        %v705 = vadd.f32 0.0, %v704
        %706 = vdwg.mxu0
        %707 = vmatprep.subr.bf16.mxu0 0
        %708 = vmatpush1.bf16.msra.mxu0 %v629
        %709 = vmatprep.subr.bf16.mxu0 0
        %710 = vmatpush1.bf16.msra.mxu0 %v626
        %711 = vmatprep.subr.bf16.mxu0 0
        %712 = vmatpush1.bf16.msra.mxu0 %v623
        %713 = vmatprep.subr.bf16.mxu0 0
        %714 = vmatpush1.bf16.msra.mxu0 %v620
        %715 = vmatprep.subr.bf16.mxu0 0
        %716 = vmatpush1.bf16.msra.mxu0 %v617
        %717 = vmatprep.subr.bf16.mxu0 0
        %718 = vmatpush1.bf16.msra.mxu0 %v614
        %719 = vmatprep.subr.bf16.mxu0 0
        %720 = vmatpush1.bf16.msra.mxu0 %v611
        %721 = vmatprep.subr.bf16.mxu0 0
        %722 = vmatpush1.bf16.msra.mxu0 %v608
        %723 = vmatprep.subr.bf16.mxu0 0
        %724 = vmatpush2.bf16.msra.mxu0 0
        %725 = vmatprep.subr.bf16.mxu0 0
        %726 = vmatpush2.bf16.msra.mxu0 0
        %727 = vmatprep.subr.bf16.mxu0 0
        %728 = vmatpush2.bf16.msra.mxu0 0
        %729 = vmatprep.subr.bf16.mxu0 0
        %730 = vmatpush2.bf16.msra.mxu0 0
        %731 = vmatprep.subr.bf16.mxu0 0
        %732 = vmatpush2.bf16.msra.mxu0 0
        %733 = vmatprep.subr.bf16.mxu0 0
        %734 = vmatpush2.bf16.msra.mxu0 0
        %735 = vmatprep.subr.bf16.mxu0 0
        %736 = vmatpush2.bf16.msra.mxu0 0
        %737 = vmatprep.subr.bf16.mxu0 0
        %738 = vmatpush2.bf16.msra.mxu0 0
        %739 = vmatprep.mubr.bf16.mxu0 0
        %740 = vmatmul.mubr.bf16.gmra.mxu0 %v492
        %v741 = vpop.f32.mrf.mxu0
        %v742 = vadd.f32 0.0, %v741
        %v743 = vpop.f32.mrf.mxu0
        %v744 = vpop.f32.mrf.mxu0
        %v745 = vadd.f32 0.0, %v744
        %v746 = vpop.f32.mrf.mxu0
        %747 = vmatprep.mubr.bf16.mxu0 0
        %748 = vmatmul.mubr.bf16.gmra.mxu0 %v493
        %v749 = vpop.f32.mrf.mxu0
        %v750 = vadd.f32 0.0, %v749
        %v751 = vpop.f32.mrf.mxu0
        %v752 = vpop.f32.mrf.mxu0
        %v753 = vadd.f32 0.0, %v752
        %v754 = vpop.f32.mrf.mxu0
        %755 = vdwg.mxu0
        %v756 = vpack.c.bf16 %v693, %v689
        %v757 = vpack.c.bf16 %v695, %v691
        %v758 = vpack.c.bf16 %v745, %v742
        %v759 = vpack.c.bf16 %v703, %v699
        %v760 = vpack.c.bf16 %v705, %v701
        %v761 = vpack.c.bf16 %v753, %v750
        %v762 = vld [vmem:[%s355] sm:$0xf]
        %v763 = vld [vmem:[%s355 + $0x4] sm:$0xf]
        %v764 = vld [vmem:[%s355 + $0x8] sm:$0xf]
        %v765 = vld [vmem:[%s355 + $0xc] sm:$0xf]
        %v766 = vld [vmem:[%s355 + $0x10] sm:$0xf]
        %v767 = vld [vmem:[%s355 + $0x14] sm:$0xf]
        %v768 = vld [vmem:[%s355 + $0x18] sm:$0xf]
        %v769 = vld [vmem:[%s355 + $0x1c] sm:$0xf]
        %v770 = vld [vmem:[%s355 + $0x20] sm:$0xf]
        %v771 = vld [vmem:[%s355 + $0x24] sm:$0xf]
        %v772 = vld [vmem:[%s355 + $0x28] sm:$0xf]
        %v773 = vld [vmem:[%s355 + $0x2c] sm:$0xf]
        %v774 = vld [vmem:[%s355 + $0x30] sm:$0xf]
        %v775 = vld [vmem:[%s355 + $0x34] sm:$0xf]
        %v776 = vld [vmem:[%s355 + $0x38] sm:$0xf]
        %v777 = vld [vmem:[%s355 + $0x3c] sm:$0xf]
        %vm778 = vcmask 261120
        %v780 = vsel %vm778, %v756, 0
        %v783 = vsel %vm778, %v757, 0
        %785 = vmatprep.subr.bf16.mxu0 0
        %786 = vmatpush1.bf16.xpose.msra.mxu0 0
        %787 = vmatprep.subr.bf16.mxu0 0
        %788 = vmatpush1.bf16.xpose.msra.mxu0 0
        %789 = vmatprep.subr.bf16.mxu0 0
        %790 = vmatpush1.bf16.xpose.msra.mxu0 0
        %791 = vmatprep.subr.bf16.mxu0 0
        %792 = vmatpush1.bf16.xpose.msra.mxu0 0
        %793 = vmatprep.subr.bf16.mxu0 0
        %794 = vmatpush1.bf16.xpose.msra.mxu0 0
        %795 = vmatprep.subr.bf16.mxu0 0
        %796 = vmatpush1.bf16.xpose.msra.mxu0 0
        %797 = vmatprep.subr.bf16.mxu0 0
        %798 = vmatpush1.bf16.xpose.msra.mxu0 0
        %799 = vmatprep.subr.bf16.mxu0 0
        %800 = vmatpush1.bf16.xpose.msra.mxu0 %v783
        %801 = vmatprep.subr.bf16.mxu0 0
        %802 = vmatpush2.bf16.xpose.msra.mxu0 0
        %803 = vmatprep.subr.bf16.mxu0 0
        %804 = vmatpush2.bf16.xpose.msra.mxu0 0
        %805 = vmatprep.subr.bf16.mxu0 0
        %806 = vmatpush2.bf16.xpose.msra.mxu0 0
        %807 = vmatprep.subr.bf16.mxu0 0
        %808 = vmatpush2.bf16.xpose.msra.mxu0 0
        %809 = vmatprep.subr.bf16.mxu0 0
        %810 = vmatpush2.bf16.xpose.msra.mxu0 0
        %811 = vmatprep.subr.bf16.mxu0 0
        %812 = vmatpush2.bf16.xpose.msra.mxu0 0
        %813 = vmatprep.subr.bf16.mxu0 0
        %814 = vmatpush2.bf16.xpose.msra.mxu0 0
        %815 = vmatprep.subr.bf16.mxu0 0
        %816 = vmatpush2.bf16.xpose.msra.mxu0 0
        %817 = vmatprep.mubr.bf16.mxu0 0
        %818 = vmatmul.mubr.bf16.gmra.mxu0 %v780
        %v819 = vpop.f32.mrf.mxu0
        %v820 = vadd.f32 %v444, %v819
        %v821 = vpop.f32.mrf.mxu0
        %v822 = vpop.f32.mrf.mxu0
        %v823 = vadd.f32 %v445, %v822
        %v824 = vpop.f32.mrf.mxu0
        %825 = vdwg.mxu0
        %v827 = vsel %vm778, %v759, 0
        %v830 = vsel %vm778, %v760, 0
        %832 = vmatprep.subr.bf16.mxu0 0
        %833 = vmatpush1.bf16.xpose.msra.mxu0 0
        %834 = vmatprep.subr.bf16.mxu0 0
        %835 = vmatpush1.bf16.xpose.msra.mxu0 0
        %836 = vmatprep.subr.bf16.mxu0 0
        %837 = vmatpush1.bf16.xpose.msra.mxu0 0
        %838 = vmatprep.subr.bf16.mxu0 0
        %839 = vmatpush1.bf16.xpose.msra.mxu0 0
        %840 = vmatprep.subr.bf16.mxu0 0
        %841 = vmatpush1.bf16.xpose.msra.mxu0 0
        %842 = vmatprep.subr.bf16.mxu0 0
        %843 = vmatpush1.bf16.xpose.msra.mxu0 0
        %844 = vmatprep.subr.bf16.mxu0 0
        %845 = vmatpush1.bf16.xpose.msra.mxu0 0
        %846 = vmatprep.subr.bf16.mxu0 0
        %847 = vmatpush1.bf16.xpose.msra.mxu0 %v830
        %848 = vmatprep.subr.bf16.mxu0 0
        %849 = vmatpush2.bf16.xpose.msra.mxu0 0
        %850 = vmatprep.subr.bf16.mxu0 0
        %851 = vmatpush2.bf16.xpose.msra.mxu0 0
        %852 = vmatprep.subr.bf16.mxu0 0
        %853 = vmatpush2.bf16.xpose.msra.mxu0 0
        %854 = vmatprep.subr.bf16.mxu0 0
        %855 = vmatpush2.bf16.xpose.msra.mxu0 0
        %856 = vmatprep.subr.bf16.mxu0 0
        %857 = vmatpush2.bf16.xpose.msra.mxu0 0
        %858 = vmatprep.subr.bf16.mxu0 0
        %859 = vmatpush2.bf16.xpose.msra.mxu0 0
        %860 = vmatprep.subr.bf16.mxu0 0
        %861 = vmatpush2.bf16.xpose.msra.mxu0 0
        %862 = vmatprep.subr.bf16.mxu0 0
        %863 = vmatpush2.bf16.xpose.msra.mxu0 0
        %864 = vmatprep.mubr.bf16.mxu0 0
        %865 = vmatmul.mubr.bf16.gmra.mxu0 %v827
        %v866 = vpop.f32.mrf.mxu0
        %v867 = vadd.f32 %v444, %v866
        %v868 = vpop.f32.mrf.mxu0
        %v869 = vpop.f32.mrf.mxu0
        %v870 = vadd.f32 %v445, %v869
        %v871 = vpop.f32.mrf.mxu0
        %872 = vdwg.mxu0
        %vm873 = vcmask 130048
        %v874 = vsel %vm873, %v820, -inf
        %875 = vmax.xlane.f32.xlu0 %v874
        %v876 = vpop.xlane.xlu0 %875
        %v877 = vsel %vm873, %v823, -inf
        %878 = vmax.xlane.f32.xlu0 %v877
        %v879 = vpop.xlane.xlu0 %878
        %v880 = vsel %vm873, %v867, -inf
        %881 = vmax.xlane.f32.xlu0 %v880
        %v882 = vpop.xlane.xlu0 %881
        %v883 = vsel %vm873, %v870, -inf
        %884 = vmax.xlane.f32.xlu0 %v883
        %v885 = vpop.xlane.xlu0 %884
        %v886 = vsub.f32 %v820, %v876
        %v887 = vsub.f32 %v823, %v879
        %v888 = vsub.f32 %v867, %v882
        %v889 = vsub.f32 %v870, %v885
        %v890 = vmul.f32 %v886, 1.442695
        %v891 = vpow.pop %v890
        %v892 = vmul.f32 %v887, 1.442695
        %v893 = vpow.pop %v892
        %v894 = vmul.f32 %v888, 1.442695
        %v895 = vpow.pop %v894
        %v896 = vmul.f32 %v889, 1.442695
        %v897 = vpow.pop %v896
        %v898 = vsel %vm873, %v891, 0.0
        %899 = vadd.xlane.f32.xlu0 %v898
        %v900 = vpop.xlane.xlu0 %899
        %v901 = vsel %vm873, %v893, 0.0
        %902 = vadd.xlane.f32.xlu0 %v901
        %v903 = vpop.xlane.xlu0 %902
        %v904 = vsel %vm873, %v895, 0.0
        %905 = vadd.xlane.f32.xlu0 %v904
        %v906 = vpop.xlane.xlu0 %905
        %v907 = vsel %vm873, %v897, 0.0
        %908 = vadd.xlane.f32.xlu0 %v907
        %v909 = vpop.xlane.xlu0 %908
        %v910 = vrcp.pop %v900
        %v911 = vmul.f32 %v891, %v910
        %v912 = vrcp.pop %v903
        %v913 = vmul.f32 %v893, %v912
        %v914 = vrcp.pop %v906
        %v915 = vmul.f32 %v895, %v914
        %v916 = vrcp.pop %v909
        %v917 = vmul.f32 %v897, %v916
        %v918 = vpack.c.bf16 %v913, %v911
        %v919 = vpack.c.bf16 %v917, %v915
        %v921 = vsel %vm873, %v918, 0
        %923 = vmatprep.subr.bf16.mxu0 0
        %924 = vmatpush1.bf16.msra.mxu0 0
        %925 = vmatprep.subr.bf16.mxu0 0
        %926 = vmatpush1.bf16.msra.mxu0 0
        %927 = vmatprep.subr.bf16.mxu0 0
        %928 = vmatpush1.bf16.msra.mxu0 0
        %929 = vmatprep.subr.bf16.mxu0 0
        %930 = vmatpush1.bf16.msra.mxu0 0
        %931 = vmatprep.subr.bf16.mxu0 0
        %932 = vmatpush1.bf16.msra.mxu0 0
        %933 = vmatprep.subr.bf16.mxu0 0
        %934 = vmatpush1.bf16.msra.mxu0 0
        %935 = vmatprep.subr.bf16.mxu0 0
        %936 = vmatpush1.bf16.msra.mxu0 0
        %937 = vmatprep.subr.bf16.mxu0 0
        %938 = vmatpush1.bf16.msra.mxu0 %v758
        %939 = vmatprep.subr.bf16.mxu0 0
        %940 = vmatpush2.bf16.msra.mxu0 0
        %941 = vmatprep.subr.bf16.mxu0 0
        %942 = vmatpush2.bf16.msra.mxu0 0
        %943 = vmatprep.subr.bf16.mxu0 0
        %944 = vmatpush2.bf16.msra.mxu0 0
        %945 = vmatprep.subr.bf16.mxu0 0
        %946 = vmatpush2.bf16.msra.mxu0 0
        %947 = vmatprep.subr.bf16.mxu0 0
        %948 = vmatpush2.bf16.msra.mxu0 0
        %949 = vmatprep.subr.bf16.mxu0 0
        %950 = vmatpush2.bf16.msra.mxu0 0
        %951 = vmatprep.subr.bf16.mxu0 0
        %952 = vmatpush2.bf16.msra.mxu0 0
        %953 = vmatprep.subr.bf16.mxu0 0
        %954 = vmatpush2.bf16.msra.mxu0 0
        %955 = vmatprep.mubr.bf16.mxu0 0
        %956 = vmatmul.mubr.bf16.gmra.mxu0 %v921
        %v957 = vpop.f32.mrf.mxu0
        %v958 = vadd.f32 0.0, %v957
        %v959 = vpop.f32.mrf.mxu0
        %v960 = vpop.f32.mrf.mxu0
        %v961 = vadd.f32 0.0, %v960
        %v962 = vpop.f32.mrf.mxu0
        %963 = vdwg.mxu0
        %v965 = vsel %vm873, %v919, 0
        %967 = vmatprep.subr.bf16.mxu0 0
        %968 = vmatpush1.bf16.msra.mxu0 0
        %969 = vmatprep.subr.bf16.mxu0 0
        %970 = vmatpush1.bf16.msra.mxu0 0
        %971 = vmatprep.subr.bf16.mxu0 0
        %972 = vmatpush1.bf16.msra.mxu0 0
        %973 = vmatprep.subr.bf16.mxu0 0
        %974 = vmatpush1.bf16.msra.mxu0 0
        %975 = vmatprep.subr.bf16.mxu0 0
        %976 = vmatpush1.bf16.msra.mxu0 0
        %977 = vmatprep.subr.bf16.mxu0 0
        %978 = vmatpush1.bf16.msra.mxu0 0
        %979 = vmatprep.subr.bf16.mxu0 0
        %980 = vmatpush1.bf16.msra.mxu0 0
        %981 = vmatprep.subr.bf16.mxu0 0
        %982 = vmatpush1.bf16.msra.mxu0 %v761
        %983 = vmatprep.subr.bf16.mxu0 0
        %984 = vmatpush2.bf16.msra.mxu0 0
        %985 = vmatprep.subr.bf16.mxu0 0
        %986 = vmatpush2.bf16.msra.mxu0 0
        %987 = vmatprep.subr.bf16.mxu0 0
        %988 = vmatpush2.bf16.msra.mxu0 0
        %989 = vmatprep.subr.bf16.mxu0 0
        %990 = vmatpush2.bf16.msra.mxu0 0
        %991 = vmatprep.subr.bf16.mxu0 0
        %992 = vmatpush2.bf16.msra.mxu0 0
        %993 = vmatprep.subr.bf16.mxu0 0
        %994 = vmatpush2.bf16.msra.mxu0 0
        %995 = vmatprep.subr.bf16.mxu0 0
        %996 = vmatpush2.bf16.msra.mxu0 0
        %997 = vmatprep.subr.bf16.mxu0 0
        %998 = vmatpush2.bf16.msra.mxu0 0
        %999 = vmatprep.mubr.bf16.mxu0 0
        %1000 = vmatmul.mubr.bf16.gmra.mxu0 %v965
        %v1001 = vpop.f32.mrf.mxu0
        %v1002 = vadd.f32 0.0, %v1001
        %v1003 = vpop.f32.mrf.mxu0
        %v1004 = vpop.f32.mrf.mxu0
        %v1005 = vadd.f32 0.0, %v1004
        %v1006 = vpop.f32.mrf.mxu0
        %1007 = vdwg.mxu0
        %1009 = vrot.lane.b32.xlu0 %v756, 96
        %v1010 = vpop.permute.xlu0 %1009
        %1012 = vrot.lane.b32.xlu0 %v757, 96
        %v1013 = vpop.permute.xlu0 %1012
        %v1015 = vsel %vm778, %v1010, 0
        %v1018 = vsel %vm778, %v1013, 0
        %1020 = vmatprep.subr.bf16.mxu0 0
        %1021 = vmatpush1.bf16.xpose.msra.mxu0 0
        %1022 = vmatprep.subr.bf16.mxu0 0
        %1023 = vmatpush1.bf16.xpose.msra.mxu0 0
        %1024 = vmatprep.subr.bf16.mxu0 0
        %1025 = vmatpush1.bf16.xpose.msra.mxu0 0
        %1026 = vmatprep.subr.bf16.mxu0 0
        %1027 = vmatpush1.bf16.xpose.msra.mxu0 0
        %1028 = vmatprep.subr.bf16.mxu0 0
        %1029 = vmatpush1.bf16.xpose.msra.mxu0 0
        %1030 = vmatprep.subr.bf16.mxu0 0
        %1031 = vmatpush1.bf16.xpose.msra.mxu0 0
        %1032 = vmatprep.subr.bf16.mxu0 0
        %1033 = vmatpush1.bf16.xpose.msra.mxu0 0
        %1034 = vmatprep.subr.bf16.mxu0 0
        %1035 = vmatpush1.bf16.xpose.msra.mxu0 %v1018
        %1036 = vmatprep.subr.bf16.mxu0 0
        %1037 = vmatpush2.bf16.xpose.msra.mxu0 0
        %1038 = vmatprep.subr.bf16.mxu0 0
        %1039 = vmatpush2.bf16.xpose.msra.mxu0 0
        %1040 = vmatprep.subr.bf16.mxu0 0
        %1041 = vmatpush2.bf16.xpose.msra.mxu0 0
        %1042 = vmatprep.subr.bf16.mxu0 0
        %1043 = vmatpush2.bf16.xpose.msra.mxu0 0
        %1044 = vmatprep.subr.bf16.mxu0 0
        %1045 = vmatpush2.bf16.xpose.msra.mxu0 0
        %1046 = vmatprep.subr.bf16.mxu0 0
        %1047 = vmatpush2.bf16.xpose.msra.mxu0 0
        %1048 = vmatprep.subr.bf16.mxu0 0
        %1049 = vmatpush2.bf16.xpose.msra.mxu0 0
        %1050 = vmatprep.subr.bf16.mxu0 0
        %1051 = vmatpush2.bf16.xpose.msra.mxu0 0
        %1052 = vmatprep.mubr.bf16.mxu0 0
        %1053 = vmatmul.mubr.bf16.gmra.mxu0 %v1015
        %v1054 = vpop.f32.mrf.mxu0
        %v1055 = vadd.f32 %v446, %v1054
        %v1056 = vpop.f32.mrf.mxu0
        %v1057 = vpop.f32.mrf.mxu0
        %v1058 = vadd.f32 %v447, %v1057
        %v1059 = vpop.f32.mrf.mxu0
        %1060 = vdwg.mxu0
        %1062 = vrot.lane.b32.xlu0 %v759, 96
        %v1063 = vpop.permute.xlu0 %1062
        %1065 = vrot.lane.b32.xlu0 %v760, 96
        %v1066 = vpop.permute.xlu0 %1065
        %v1068 = vsel %vm778, %v1063, 0
        %v1071 = vsel %vm778, %v1066, 0
        %1073 = vmatprep.subr.bf16.mxu0 0
        %1074 = vmatpush1.bf16.xpose.msra.mxu0 0
        %1075 = vmatprep.subr.bf16.mxu0 0
        %1076 = vmatpush1.bf16.xpose.msra.mxu0 0
        %1077 = vmatprep.subr.bf16.mxu0 0
        %1078 = vmatpush1.bf16.xpose.msra.mxu0 0
        %1079 = vmatprep.subr.bf16.mxu0 0
        %1080 = vmatpush1.bf16.xpose.msra.mxu0 0
        %1081 = vmatprep.subr.bf16.mxu0 0
        %1082 = vmatpush1.bf16.xpose.msra.mxu0 0
        %1083 = vmatprep.subr.bf16.mxu0 0
        %1084 = vmatpush1.bf16.xpose.msra.mxu0 0
        %1085 = vmatprep.subr.bf16.mxu0 0
        %1086 = vmatpush1.bf16.xpose.msra.mxu0 0
        %1087 = vmatprep.subr.bf16.mxu0 0
        %1088 = vmatpush1.bf16.xpose.msra.mxu0 %v1071
        %1089 = vmatprep.subr.bf16.mxu0 0
        %1090 = vmatpush2.bf16.xpose.msra.mxu0 0
        %1091 = vmatprep.subr.bf16.mxu0 0
        %1092 = vmatpush2.bf16.xpose.msra.mxu0 0
        %1093 = vmatprep.subr.bf16.mxu0 0
        %1094 = vmatpush2.bf16.xpose.msra.mxu0 0
        %1095 = vmatprep.subr.bf16.mxu0 0
        %1096 = vmatpush2.bf16.xpose.msra.mxu0 0
        %1097 = vmatprep.subr.bf16.mxu0 0
        %1098 = vmatpush2.bf16.xpose.msra.mxu0 0
        %1099 = vmatprep.subr.bf16.mxu0 0
        %1100 = vmatpush2.bf16.xpose.msra.mxu0 0
        %1101 = vmatprep.subr.bf16.mxu0 0
        %1102 = vmatpush2.bf16.xpose.msra.mxu0 0
        %1103 = vmatprep.subr.bf16.mxu0 0
        %1104 = vmatpush2.bf16.xpose.msra.mxu0 0
        %1105 = vmatprep.mubr.bf16.mxu0 0
        %1106 = vmatmul.mubr.bf16.gmra.mxu0 %v1068
        %v1107 = vpop.f32.mrf.mxu0
        %v1108 = vadd.f32 %v446, %v1107
        %v1109 = vpop.f32.mrf.mxu0
        %v1110 = vpop.f32.mrf.mxu0
        %v1111 = vadd.f32 %v447, %v1110
        %v1112 = vpop.f32.mrf.mxu0
        %1113 = vdwg.mxu0
        %v1114 = vsel %vm873, %v1055, -inf
        %1115 = vmax.xlane.f32.xlu0 %v1114
        %v1116 = vpop.xlane.xlu0 %1115
        %v1117 = vsel %vm873, %v1058, -inf
        %1118 = vmax.xlane.f32.xlu0 %v1117
        %v1119 = vpop.xlane.xlu0 %1118
        %v1120 = vsel %vm873, %v1108, -inf
        %1121 = vmax.xlane.f32.xlu0 %v1120
        %v1122 = vpop.xlane.xlu0 %1121
        %v1123 = vsel %vm873, %v1111, -inf
        %1124 = vmax.xlane.f32.xlu0 %v1123
        %v1125 = vpop.xlane.xlu0 %1124
        %v1126 = vsub.f32 %v1055, %v1116
        %v1127 = vsub.f32 %v1058, %v1119
        %v1128 = vsub.f32 %v1108, %v1122
        %v1129 = vsub.f32 %v1111, %v1125
        %v1130 = vmul.f32 %v1126, 1.442695
        %v1131 = vpow.pop %v1130
        %v1132 = vmul.f32 %v1127, 1.442695
        %v1133 = vpow.pop %v1132
        %v1134 = vmul.f32 %v1128, 1.442695
        %v1135 = vpow.pop %v1134
        %v1136 = vmul.f32 %v1129, 1.442695
        %v1137 = vpow.pop %v1136
        %v1138 = vsel %vm873, %v1131, 0.0
        %1139 = vadd.xlane.f32.xlu0 %v1138
        %v1140 = vpop.xlane.xlu0 %1139
        %v1141 = vsel %vm873, %v1133, 0.0
        %1142 = vadd.xlane.f32.xlu0 %v1141
        %v1143 = vpop.xlane.xlu0 %1142
        %v1144 = vsel %vm873, %v1135, 0.0
        %1145 = vadd.xlane.f32.xlu0 %v1144
        %v1146 = vpop.xlane.xlu0 %1145
        %v1147 = vsel %vm873, %v1137, 0.0
        %1148 = vadd.xlane.f32.xlu0 %v1147
        %v1149 = vpop.xlane.xlu0 %1148
        %v1150 = vrcp.pop %v1140
        %v1151 = vmul.f32 %v1131, %v1150
        %v1152 = vrcp.pop %v1143
        %v1153 = vmul.f32 %v1133, %v1152
        %v1154 = vrcp.pop %v1146
        %v1155 = vmul.f32 %v1135, %v1154
        %v1156 = vrcp.pop %v1149
        %v1157 = vmul.f32 %v1137, %v1156
        %v1158 = vpack.c.bf16 %v1153, %v1151
        %v1159 = vpack.c.bf16 %v1157, %v1155
        %1161 = vrot.lane.b32.xlu0 %v758, 96
        %v1162 = vpop.permute.xlu0 %1161
        %v1165 = vsel %vm873, %v1158, 0
        %1167 = vmatprep.subr.bf16.mxu0 0
        %1168 = vmatpush1.bf16.msra.mxu0 0
        %1169 = vmatprep.subr.bf16.mxu0 0
        %1170 = vmatpush1.bf16.msra.mxu0 0
        %1171 = vmatprep.subr.bf16.mxu0 0
        %1172 = vmatpush1.bf16.msra.mxu0 0
        %1173 = vmatprep.subr.bf16.mxu0 0
        %1174 = vmatpush1.bf16.msra.mxu0 0
        %1175 = vmatprep.subr.bf16.mxu0 0
        %1176 = vmatpush1.bf16.msra.mxu0 0
        %1177 = vmatprep.subr.bf16.mxu0 0
        %1178 = vmatpush1.bf16.msra.mxu0 0
        %1179 = vmatprep.subr.bf16.mxu0 0
        %1180 = vmatpush1.bf16.msra.mxu0 0
        %1181 = vmatprep.subr.bf16.mxu0 0
        %1182 = vmatpush1.bf16.msra.mxu0 %v1162
        %1183 = vmatprep.subr.bf16.mxu0 0
        %1184 = vmatpush2.bf16.msra.mxu0 0
        %1185 = vmatprep.subr.bf16.mxu0 0
        %1186 = vmatpush2.bf16.msra.mxu0 0
        %1187 = vmatprep.subr.bf16.mxu0 0
        %1188 = vmatpush2.bf16.msra.mxu0 0
        %1189 = vmatprep.subr.bf16.mxu0 0
        %1190 = vmatpush2.bf16.msra.mxu0 0
        %1191 = vmatprep.subr.bf16.mxu0 0
        %1192 = vmatpush2.bf16.msra.mxu0 0
        %1193 = vmatprep.subr.bf16.mxu0 0
        %1194 = vmatpush2.bf16.msra.mxu0 0
        %1195 = vmatprep.subr.bf16.mxu0 0
        %1196 = vmatpush2.bf16.msra.mxu0 0
        %1197 = vmatprep.subr.bf16.mxu0 0
        %1198 = vmatpush2.bf16.msra.mxu0 0
        %1199 = vmatprep.mubr.bf16.mxu0 0
        %1200 = vmatmul.mubr.bf16.gmra.mxu0 %v1165
        %v1201 = vpop.f32.mrf.mxu0
        %v1202 = vadd.f32 0.0, %v1201
        %v1203 = vpop.f32.mrf.mxu0
        %v1204 = vpop.f32.mrf.mxu0
        %v1205 = vadd.f32 0.0, %v1204
        %v1206 = vpop.f32.mrf.mxu0
        %1207 = vdwg.mxu0
        %1209 = vrot.lane.b32.xlu0 %v761, 96
        %v1210 = vpop.permute.xlu0 %1209
        %v1213 = vsel %vm873, %v1159, 0
        %1215 = vmatprep.subr.bf16.mxu0 0
        %1216 = vmatpush1.bf16.msra.mxu0 0
        %1217 = vmatprep.subr.bf16.mxu0 0
        %1218 = vmatpush1.bf16.msra.mxu0 0
        %1219 = vmatprep.subr.bf16.mxu0 0
        %1220 = vmatpush1.bf16.msra.mxu0 0
        %1221 = vmatprep.subr.bf16.mxu0 0
        %1222 = vmatpush1.bf16.msra.mxu0 0
        %1223 = vmatprep.subr.bf16.mxu0 0
        %1224 = vmatpush1.bf16.msra.mxu0 0
        %1225 = vmatprep.subr.bf16.mxu0 0
        %1226 = vmatpush1.bf16.msra.mxu0 0
        %1227 = vmatprep.subr.bf16.mxu0 0
        %1228 = vmatpush1.bf16.msra.mxu0 0
        %1229 = vmatprep.subr.bf16.mxu0 0
        %1230 = vmatpush1.bf16.msra.mxu0 %v1210
        %1231 = vmatprep.subr.bf16.mxu0 0
        %1232 = vmatpush2.bf16.msra.mxu0 0
        %1233 = vmatprep.subr.bf16.mxu0 0
        %1234 = vmatpush2.bf16.msra.mxu0 0
        %1235 = vmatprep.subr.bf16.mxu0 0
        %1236 = vmatpush2.bf16.msra.mxu0 0
        %1237 = vmatprep.subr.bf16.mxu0 0
        %1238 = vmatpush2.bf16.msra.mxu0 0
        %1239 = vmatprep.subr.bf16.mxu0 0
        %1240 = vmatpush2.bf16.msra.mxu0 0
        %1241 = vmatprep.subr.bf16.mxu0 0
        %1242 = vmatpush2.bf16.msra.mxu0 0
        %1243 = vmatprep.subr.bf16.mxu0 0
        %1244 = vmatpush2.bf16.msra.mxu0 0
        %1245 = vmatprep.subr.bf16.mxu0 0
        %1246 = vmatpush2.bf16.msra.mxu0 0
        %1247 = vmatprep.mubr.bf16.mxu0 0
        %1248 = vmatmul.mubr.bf16.gmra.mxu0 %v1213
        %v1249 = vpop.f32.mrf.mxu0
        %v1250 = vadd.f32 0.0, %v1249
        %v1251 = vpop.f32.mrf.mxu0
        %v1252 = vpop.f32.mrf.mxu0
        %v1253 = vadd.f32 0.0, %v1252
        %v1254 = vpop.f32.mrf.mxu0
        %1255 = vdwg.mxu0
        %1256 = vrot.lane.b32.xlu0 %v756, 64
        %v1257 = vpop.permute.xlu0 %1256
        %1258 = vrot.lane.b32.xlu0 %v757, 64
        %v1259 = vpop.permute.xlu0 %1258
        %v1261 = vsel %vm778, %v1257, 0
        %v1264 = vsel %vm778, %v1259, 0
        %1266 = vmatprep.subr.bf16.mxu0 0
        %1267 = vmatpush1.bf16.xpose.msra.mxu0 0
        %1268 = vmatprep.subr.bf16.mxu0 0
        %1269 = vmatpush1.bf16.xpose.msra.mxu0 0
        %1270 = vmatprep.subr.bf16.mxu0 0
        %1271 = vmatpush1.bf16.xpose.msra.mxu0 0
        %1272 = vmatprep.subr.bf16.mxu0 0
        %1273 = vmatpush1.bf16.xpose.msra.mxu0 0
        %1274 = vmatprep.subr.bf16.mxu0 0
        %1275 = vmatpush1.bf16.xpose.msra.mxu0 0
        %1276 = vmatprep.subr.bf16.mxu0 0
        %1277 = vmatpush1.bf16.xpose.msra.mxu0 0
        %1278 = vmatprep.subr.bf16.mxu0 0
        %1279 = vmatpush1.bf16.xpose.msra.mxu0 0
        %1280 = vmatprep.subr.bf16.mxu0 0
        %1281 = vmatpush1.bf16.xpose.msra.mxu0 %v1264
        %1282 = vmatprep.subr.bf16.mxu0 0
        %1283 = vmatpush2.bf16.xpose.msra.mxu0 0
        %1284 = vmatprep.subr.bf16.mxu0 0
        %1285 = vmatpush2.bf16.xpose.msra.mxu0 0
        %1286 = vmatprep.subr.bf16.mxu0 0
        %1287 = vmatpush2.bf16.xpose.msra.mxu0 0
        %1288 = vmatprep.subr.bf16.mxu0 0
        %1289 = vmatpush2.bf16.xpose.msra.mxu0 0
        %1290 = vmatprep.subr.bf16.mxu0 0
        %1291 = vmatpush2.bf16.xpose.msra.mxu0 0
        %1292 = vmatprep.subr.bf16.mxu0 0
        %1293 = vmatpush2.bf16.xpose.msra.mxu0 0
        %1294 = vmatprep.subr.bf16.mxu0 0
        %1295 = vmatpush2.bf16.xpose.msra.mxu0 0
        %1296 = vmatprep.subr.bf16.mxu0 0
        %1297 = vmatpush2.bf16.xpose.msra.mxu0 0
        %1298 = vmatprep.mubr.bf16.mxu0 0
        %1299 = vmatmul.mubr.bf16.gmra.mxu0 %v1261
        %v1300 = vpop.f32.mrf.mxu0
        %v1301 = vadd.f32 %v448, %v1300
        %v1302 = vpop.f32.mrf.mxu0
        %v1303 = vpop.f32.mrf.mxu0
        %v1304 = vadd.f32 %v449, %v1303
        %v1305 = vpop.f32.mrf.mxu0
        %1306 = vdwg.mxu0
        %1307 = vrot.lane.b32.xlu0 %v759, 64
        %v1308 = vpop.permute.xlu0 %1307
        %1309 = vrot.lane.b32.xlu0 %v760, 64
        %v1310 = vpop.permute.xlu0 %1309
        %v1312 = vsel %vm778, %v1308, 0
        %v1315 = vsel %vm778, %v1310, 0
        %1317 = vmatprep.subr.bf16.mxu0 0
        %1318 = vmatpush1.bf16.xpose.msra.mxu0 0
        %1319 = vmatprep.subr.bf16.mxu0 0
        %1320 = vmatpush1.bf16.xpose.msra.mxu0 0
        %1321 = vmatprep.subr.bf16.mxu0 0
        %1322 = vmatpush1.bf16.xpose.msra.mxu0 0
        %1323 = vmatprep.subr.bf16.mxu0 0
        %1324 = vmatpush1.bf16.xpose.msra.mxu0 0
        %1325 = vmatprep.subr.bf16.mxu0 0
        %1326 = vmatpush1.bf16.xpose.msra.mxu0 0
        %1327 = vmatprep.subr.bf16.mxu0 0
        %1328 = vmatpush1.bf16.xpose.msra.mxu0 0
        %1329 = vmatprep.subr.bf16.mxu0 0
        %1330 = vmatpush1.bf16.xpose.msra.mxu0 0
        %1331 = vmatprep.subr.bf16.mxu0 0
        %1332 = vmatpush1.bf16.xpose.msra.mxu0 %v1315
        %1333 = vmatprep.subr.bf16.mxu0 0
        %1334 = vmatpush2.bf16.xpose.msra.mxu0 0
        %1335 = vmatprep.subr.bf16.mxu0 0
        %1336 = vmatpush2.bf16.xpose.msra.mxu0 0
        %1337 = vmatprep.subr.bf16.mxu0 0
        %1338 = vmatpush2.bf16.xpose.msra.mxu0 0
        %1339 = vmatprep.subr.bf16.mxu0 0
        %1340 = vmatpush2.bf16.xpose.msra.mxu0 0
        %1341 = vmatprep.subr.bf16.mxu0 0
        %1342 = vmatpush2.bf16.xpose.msra.mxu0 0
        %1343 = vmatprep.subr.bf16.mxu0 0
        %1344 = vmatpush2.bf16.xpose.msra.mxu0 0
        %1345 = vmatprep.subr.bf16.mxu0 0
        %1346 = vmatpush2.bf16.xpose.msra.mxu0 0
        %1347 = vmatprep.subr.bf16.mxu0 0
        %1348 = vmatpush2.bf16.xpose.msra.mxu0 0
        %1349 = vmatprep.mubr.bf16.mxu0 0
        %1350 = vmatmul.mubr.bf16.gmra.mxu0 %v1312
        %v1351 = vpop.f32.mrf.mxu0
        %v1352 = vadd.f32 %v448, %v1351
        %v1353 = vpop.f32.mrf.mxu0
        %v1354 = vpop.f32.mrf.mxu0
        %v1355 = vadd.f32 %v449, %v1354
        %v1356 = vpop.f32.mrf.mxu0
        %1357 = vdwg.mxu0
        %v1358 = vsel %vm873, %v1301, -inf
        %1359 = vmax.xlane.f32.xlu0 %v1358
        %v1360 = vpop.xlane.xlu0 %1359
        %v1361 = vsel %vm873, %v1304, -inf
        %1362 = vmax.xlane.f32.xlu0 %v1361
        %v1363 = vpop.xlane.xlu0 %1362
        %v1364 = vsel %vm873, %v1352, -inf
        %1365 = vmax.xlane.f32.xlu0 %v1364
        %v1366 = vpop.xlane.xlu0 %1365
        %v1367 = vsel %vm873, %v1355, -inf
        %1368 = vmax.xlane.f32.xlu0 %v1367
        %v1369 = vpop.xlane.xlu0 %1368
        %v1370 = vsub.f32 %v1301, %v1360
        %v1371 = vsub.f32 %v1304, %v1363
        %v1372 = vsub.f32 %v1352, %v1366
        %v1373 = vsub.f32 %v1355, %v1369
        %v1374 = vmul.f32 %v1370, 1.442695
        %v1375 = vpow.pop %v1374
        %v1376 = vmul.f32 %v1371, 1.442695
        %v1377 = vpow.pop %v1376
        %v1378 = vmul.f32 %v1372, 1.442695
        %v1379 = vpow.pop %v1378
        %v1380 = vmul.f32 %v1373, 1.442695
        %v1381 = vpow.pop %v1380
        %v1382 = vsel %vm873, %v1375, 0.0
        %1383 = vadd.xlane.f32.xlu0 %v1382
        %v1384 = vpop.xlane.xlu0 %1383
        %v1385 = vsel %vm873, %v1377, 0.0
        %1386 = vadd.xlane.f32.xlu0 %v1385
        %v1387 = vpop.xlane.xlu0 %1386
        %v1388 = vsel %vm873, %v1379, 0.0
        %1389 = vadd.xlane.f32.xlu0 %v1388
        %v1390 = vpop.xlane.xlu0 %1389
        %v1391 = vsel %vm873, %v1381, 0.0
        %1392 = vadd.xlane.f32.xlu0 %v1391
        %v1393 = vpop.xlane.xlu0 %1392
        %v1394 = vrcp.pop %v1384
        %v1395 = vmul.f32 %v1375, %v1394
        %v1396 = vrcp.pop %v1387
        %v1397 = vmul.f32 %v1377, %v1396
        %v1398 = vrcp.pop %v1390
        %v1399 = vmul.f32 %v1379, %v1398
        %v1400 = vrcp.pop %v1393
        %v1401 = vmul.f32 %v1381, %v1400
        %v1402 = vpack.c.bf16 %v1397, %v1395
        %v1403 = vpack.c.bf16 %v1401, %v1399
        %1404 = vrot.lane.b32.xlu0 %v758, 64
        %v1405 = vpop.permute.xlu0 %1404
        %v1408 = vsel %vm873, %v1402, 0
        %1410 = vmatprep.subr.bf16.mxu0 0
        %1411 = vmatpush1.bf16.msra.mxu0 0
        %1412 = vmatprep.subr.bf16.mxu0 0
        %1413 = vmatpush1.bf16.msra.mxu0 0
        %1414 = vmatprep.subr.bf16.mxu0 0
        %1415 = vmatpush1.bf16.msra.mxu0 0
        %1416 = vmatprep.subr.bf16.mxu0 0
        %1417 = vmatpush1.bf16.msra.mxu0 0
        %1418 = vmatprep.subr.bf16.mxu0 0
        %1419 = vmatpush1.bf16.msra.mxu0 0
        %1420 = vmatprep.subr.bf16.mxu0 0
        %1421 = vmatpush1.bf16.msra.mxu0 0
        %1422 = vmatprep.subr.bf16.mxu0 0
        %1423 = vmatpush1.bf16.msra.mxu0 0
        %1424 = vmatprep.subr.bf16.mxu0 0
        %1425 = vmatpush1.bf16.msra.mxu0 %v1405
        %1426 = vmatprep.subr.bf16.mxu0 0
        %1427 = vmatpush2.bf16.msra.mxu0 0
        %1428 = vmatprep.subr.bf16.mxu0 0
        %1429 = vmatpush2.bf16.msra.mxu0 0
        %1430 = vmatprep.subr.bf16.mxu0 0
        %1431 = vmatpush2.bf16.msra.mxu0 0
        %1432 = vmatprep.subr.bf16.mxu0 0
        %1433 = vmatpush2.bf16.msra.mxu0 0
        %1434 = vmatprep.subr.bf16.mxu0 0
        %1435 = vmatpush2.bf16.msra.mxu0 0
        %1436 = vmatprep.subr.bf16.mxu0 0
        %1437 = vmatpush2.bf16.msra.mxu0 0
        %1438 = vmatprep.subr.bf16.mxu0 0
        %1439 = vmatpush2.bf16.msra.mxu0 0
        %1440 = vmatprep.subr.bf16.mxu0 0
        %1441 = vmatpush2.bf16.msra.mxu0 0
        %1442 = vmatprep.mubr.bf16.mxu0 0
        %1443 = vmatmul.mubr.bf16.gmra.mxu0 %v1408
        %v1444 = vpop.f32.mrf.mxu0
        %v1445 = vadd.f32 0.0, %v1444
        %v1446 = vpop.f32.mrf.mxu0
        %v1447 = vpop.f32.mrf.mxu0
        %v1448 = vadd.f32 0.0, %v1447
        %v1449 = vpop.f32.mrf.mxu0
        %1450 = vdwg.mxu0
        %1451 = vrot.lane.b32.xlu0 %v761, 64
        %v1452 = vpop.permute.xlu0 %1451
        %v1455 = vsel %vm873, %v1403, 0
        %1457 = vmatprep.subr.bf16.mxu0 0
        %1458 = vmatpush1.bf16.msra.mxu0 0
        %1459 = vmatprep.subr.bf16.mxu0 0
        %1460 = vmatpush1.bf16.msra.mxu0 0
        %1461 = vmatprep.subr.bf16.mxu0 0
        %1462 = vmatpush1.bf16.msra.mxu0 0
        %1463 = vmatprep.subr.bf16.mxu0 0
        %1464 = vmatpush1.bf16.msra.mxu0 0
        %1465 = vmatprep.subr.bf16.mxu0 0
        %1466 = vmatpush1.bf16.msra.mxu0 0
        %1467 = vmatprep.subr.bf16.mxu0 0
        %1468 = vmatpush1.bf16.msra.mxu0 0
        %1469 = vmatprep.subr.bf16.mxu0 0
        %1470 = vmatpush1.bf16.msra.mxu0 0
        %1471 = vmatprep.subr.bf16.mxu0 0
        %1472 = vmatpush1.bf16.msra.mxu0 %v1452
        %1473 = vmatprep.subr.bf16.mxu0 0
        %1474 = vmatpush2.bf16.msra.mxu0 0
        %1475 = vmatprep.subr.bf16.mxu0 0
        %1476 = vmatpush2.bf16.msra.mxu0 0
        %1477 = vmatprep.subr.bf16.mxu0 0
        %1478 = vmatpush2.bf16.msra.mxu0 0
        %1479 = vmatprep.subr.bf16.mxu0 0
        %1480 = vmatpush2.bf16.msra.mxu0 0
        %1481 = vmatprep.subr.bf16.mxu0 0
        %1482 = vmatpush2.bf16.msra.mxu0 0
        %1483 = vmatprep.subr.bf16.mxu0 0
        %1484 = vmatpush2.bf16.msra.mxu0 0
        %1485 = vmatprep.subr.bf16.mxu0 0
        %1486 = vmatpush2.bf16.msra.mxu0 0
        %1487 = vmatprep.subr.bf16.mxu0 0
        %1488 = vmatpush2.bf16.msra.mxu0 0
        %1489 = vmatprep.mubr.bf16.mxu0 0
        %1490 = vmatmul.mubr.bf16.gmra.mxu0 %v1455
        %v1491 = vpop.f32.mrf.mxu0
        %v1492 = vadd.f32 0.0, %v1491
        %v1493 = vpop.f32.mrf.mxu0
        %v1494 = vpop.f32.mrf.mxu0
        %v1495 = vadd.f32 0.0, %v1494
        %v1496 = vpop.f32.mrf.mxu0
        %1497 = vdwg.mxu0
        %1498 = vrot.lane.b32.xlu0 %v756, 32
        %v1499 = vpop.permute.xlu0 %1498
        %1500 = vrot.lane.b32.xlu0 %v757, 32
        %v1501 = vpop.permute.xlu0 %1500
        %v1503 = vsel %vm778, %v1499, 0
        %v1506 = vsel %vm778, %v1501, 0
        %1508 = vmatprep.subr.bf16.mxu0 0
        %1509 = vmatpush1.bf16.xpose.msra.mxu0 0
        %1510 = vmatprep.subr.bf16.mxu0 0
        %1511 = vmatpush1.bf16.xpose.msra.mxu0 0
        %1512 = vmatprep.subr.bf16.mxu0 0
        %1513 = vmatpush1.bf16.xpose.msra.mxu0 0
        %1514 = vmatprep.subr.bf16.mxu0 0
        %1515 = vmatpush1.bf16.xpose.msra.mxu0 0
        %1516 = vmatprep.subr.bf16.mxu0 0
        %1517 = vmatpush1.bf16.xpose.msra.mxu0 0
        %1518 = vmatprep.subr.bf16.mxu0 0
        %1519 = vmatpush1.bf16.xpose.msra.mxu0 0
        %1520 = vmatprep.subr.bf16.mxu0 0
        %1521 = vmatpush1.bf16.xpose.msra.mxu0 0
        %1522 = vmatprep.subr.bf16.mxu0 0
        %1523 = vmatpush1.bf16.xpose.msra.mxu0 %v1506
        %1524 = vmatprep.subr.bf16.mxu0 0
        %1525 = vmatpush2.bf16.xpose.msra.mxu0 0
        %1526 = vmatprep.subr.bf16.mxu0 0
        %1527 = vmatpush2.bf16.xpose.msra.mxu0 0
        %1528 = vmatprep.subr.bf16.mxu0 0
        %1529 = vmatpush2.bf16.xpose.msra.mxu0 0
        %1530 = vmatprep.subr.bf16.mxu0 0
        %1531 = vmatpush2.bf16.xpose.msra.mxu0 0
        %1532 = vmatprep.subr.bf16.mxu0 0
        %1533 = vmatpush2.bf16.xpose.msra.mxu0 0
        %1534 = vmatprep.subr.bf16.mxu0 0
        %1535 = vmatpush2.bf16.xpose.msra.mxu0 0
        %1536 = vmatprep.subr.bf16.mxu0 0
        %1537 = vmatpush2.bf16.xpose.msra.mxu0 0
        %1538 = vmatprep.subr.bf16.mxu0 0
        %1539 = vmatpush2.bf16.xpose.msra.mxu0 0
        %1540 = vmatprep.mubr.bf16.mxu0 0
        %1541 = vmatmul.mubr.bf16.gmra.mxu0 %v1503
        %v1542 = vpop.f32.mrf.mxu0
        %v1543 = vadd.f32 %v450, %v1542
        %v1544 = vpop.f32.mrf.mxu0
        %v1545 = vpop.f32.mrf.mxu0
        %v1546 = vadd.f32 %v451, %v1545
        %v1547 = vpop.f32.mrf.mxu0
        %1548 = vdwg.mxu0
        %1549 = vrot.lane.b32.xlu0 %v759, 32
        %v1550 = vpop.permute.xlu0 %1549
        %1551 = vrot.lane.b32.xlu0 %v760, 32
        %v1552 = vpop.permute.xlu0 %1551
        %v1554 = vsel %vm778, %v1550, 0
        %v1557 = vsel %vm778, %v1552, 0
        %1559 = vmatprep.subr.bf16.mxu0 0
        %1560 = vmatpush1.bf16.xpose.msra.mxu0 0
        %1561 = vmatprep.subr.bf16.mxu0 0
        %1562 = vmatpush1.bf16.xpose.msra.mxu0 0
        %1563 = vmatprep.subr.bf16.mxu0 0
        %1564 = vmatpush1.bf16.xpose.msra.mxu0 0
        %1565 = vmatprep.subr.bf16.mxu0 0
        %1566 = vmatpush1.bf16.xpose.msra.mxu0 0
        %1567 = vmatprep.subr.bf16.mxu0 0
        %1568 = vmatpush1.bf16.xpose.msra.mxu0 0
        %1569 = vmatprep.subr.bf16.mxu0 0
        %1570 = vmatpush1.bf16.xpose.msra.mxu0 0
        %1571 = vmatprep.subr.bf16.mxu0 0
        %1572 = vmatpush1.bf16.xpose.msra.mxu0 0
        %1573 = vmatprep.subr.bf16.mxu0 0
        %1574 = vmatpush1.bf16.xpose.msra.mxu0 %v1557
        %1575 = vmatprep.subr.bf16.mxu0 0
        %1576 = vmatpush2.bf16.xpose.msra.mxu0 0
        %1577 = vmatprep.subr.bf16.mxu0 0
        %1578 = vmatpush2.bf16.xpose.msra.mxu0 0
        %1579 = vmatprep.subr.bf16.mxu0 0
        %1580 = vmatpush2.bf16.xpose.msra.mxu0 0
        %1581 = vmatprep.subr.bf16.mxu0 0
        %1582 = vmatpush2.bf16.xpose.msra.mxu0 0
        %1583 = vmatprep.subr.bf16.mxu0 0
        %1584 = vmatpush2.bf16.xpose.msra.mxu0 0
        %1585 = vmatprep.subr.bf16.mxu0 0
        %1586 = vmatpush2.bf16.xpose.msra.mxu0 0
        %1587 = vmatprep.subr.bf16.mxu0 0
        %1588 = vmatpush2.bf16.xpose.msra.mxu0 0
        %1589 = vmatprep.subr.bf16.mxu0 0
        %1590 = vmatpush2.bf16.xpose.msra.mxu0 0
        %1591 = vmatprep.mubr.bf16.mxu0 0
        %1592 = vmatmul.mubr.bf16.gmra.mxu0 %v1554
        %v1593 = vpop.f32.mrf.mxu0
        %v1594 = vadd.f32 %v450, %v1593
        %v1595 = vpop.f32.mrf.mxu0
        %v1596 = vpop.f32.mrf.mxu0
        %v1597 = vadd.f32 %v451, %v1596
        %v1598 = vpop.f32.mrf.mxu0
        %1599 = vdwg.mxu0
        %v1600 = vsel %vm873, %v1543, -inf
        %1601 = vmax.xlane.f32.xlu0 %v1600
        %v1602 = vpop.xlane.xlu0 %1601
        %v1603 = vsel %vm873, %v1546, -inf
        %1604 = vmax.xlane.f32.xlu0 %v1603
        %v1605 = vpop.xlane.xlu0 %1604
        %v1606 = vsel %vm873, %v1594, -inf
        %1607 = vmax.xlane.f32.xlu0 %v1606
        %v1608 = vpop.xlane.xlu0 %1607
        %v1609 = vsel %vm873, %v1597, -inf
        %1610 = vmax.xlane.f32.xlu0 %v1609
        %v1611 = vpop.xlane.xlu0 %1610
        %v1612 = vsub.f32 %v1543, %v1602
        %v1613 = vsub.f32 %v1546, %v1605
        %v1614 = vsub.f32 %v1594, %v1608
        %v1615 = vsub.f32 %v1597, %v1611
        %v1616 = vmul.f32 %v1612, 1.442695
        %v1617 = vpow.pop %v1616
        %v1618 = vmul.f32 %v1613, 1.442695
        %v1619 = vpow.pop %v1618
        %v1620 = vmul.f32 %v1614, 1.442695
        %v1621 = vpow.pop %v1620
        %v1622 = vmul.f32 %v1615, 1.442695
        %v1623 = vpow.pop %v1622
        %v1624 = vsel %vm873, %v1617, 0.0
        %1625 = vadd.xlane.f32.xlu0 %v1624
        %v1626 = vpop.xlane.xlu0 %1625
        %v1627 = vsel %vm873, %v1619, 0.0
        %1628 = vadd.xlane.f32.xlu0 %v1627
        %v1629 = vpop.xlane.xlu0 %1628
        %v1630 = vsel %vm873, %v1621, 0.0
        %1631 = vadd.xlane.f32.xlu0 %v1630
        %v1632 = vpop.xlane.xlu0 %1631
        %v1633 = vsel %vm873, %v1623, 0.0
        %1634 = vadd.xlane.f32.xlu0 %v1633
        %v1635 = vpop.xlane.xlu0 %1634
        %v1636 = vrcp.pop %v1626
        %v1637 = vmul.f32 %v1617, %v1636
        %v1638 = vrcp.pop %v1629
        %v1639 = vmul.f32 %v1619, %v1638
        %v1640 = vrcp.pop %v1632
        %v1641 = vmul.f32 %v1621, %v1640
        %v1642 = vrcp.pop %v1635
        %v1643 = vmul.f32 %v1623, %v1642
        %v1644 = vpack.c.bf16 %v1639, %v1637
        %v1645 = vpack.c.bf16 %v1643, %v1641
        %1646 = vrot.lane.b32.xlu0 %v758, 32
        %v1647 = vpop.permute.xlu0 %1646
        %v1650 = vsel %vm873, %v1644, 0
        %1652 = vmatprep.subr.bf16.mxu0 0
        %1653 = vmatpush1.bf16.msra.mxu0 0
        %1654 = vmatprep.subr.bf16.mxu0 0
        %1655 = vmatpush1.bf16.msra.mxu0 0
        %1656 = vmatprep.subr.bf16.mxu0 0
        %1657 = vmatpush1.bf16.msra.mxu0 0
        %1658 = vmatprep.subr.bf16.mxu0 0
        %1659 = vmatpush1.bf16.msra.mxu0 0
        %1660 = vmatprep.subr.bf16.mxu0 0
        %1661 = vmatpush1.bf16.msra.mxu0 0
        %1662 = vmatprep.subr.bf16.mxu0 0
        %1663 = vmatpush1.bf16.msra.mxu0 0
        %1664 = vmatprep.subr.bf16.mxu0 0
        %1665 = vmatpush1.bf16.msra.mxu0 0
        %1666 = vmatprep.subr.bf16.mxu0 0
        %1667 = vmatpush1.bf16.msra.mxu0 %v1647
        %1668 = vmatprep.subr.bf16.mxu0 0
        %1669 = vmatpush2.bf16.msra.mxu0 0
        %1670 = vmatprep.subr.bf16.mxu0 0
        %1671 = vmatpush2.bf16.msra.mxu0 0
        %1672 = vmatprep.subr.bf16.mxu0 0
        %1673 = vmatpush2.bf16.msra.mxu0 0
        %1674 = vmatprep.subr.bf16.mxu0 0
        %1675 = vmatpush2.bf16.msra.mxu0 0
        %1676 = vmatprep.subr.bf16.mxu0 0
        %1677 = vmatpush2.bf16.msra.mxu0 0
        %1678 = vmatprep.subr.bf16.mxu0 0
        %1679 = vmatpush2.bf16.msra.mxu0 0
        %1680 = vmatprep.subr.bf16.mxu0 0
        %1681 = vmatpush2.bf16.msra.mxu0 0
        %1682 = vmatprep.subr.bf16.mxu0 0
        %1683 = vmatpush2.bf16.msra.mxu0 0
        %1684 = vmatprep.mubr.bf16.mxu0 0
        %1685 = vmatmul.mubr.bf16.gmra.mxu0 %v1650
        %v1686 = vpop.f32.mrf.mxu0
        %v1687 = vadd.f32 0.0, %v1686
        %v1688 = vpop.f32.mrf.mxu0
        %v1689 = vpop.f32.mrf.mxu0
        %v1690 = vadd.f32 0.0, %v1689
        %v1691 = vpop.f32.mrf.mxu0
        %1692 = vdwg.mxu0
        %1693 = vrot.lane.b32.xlu0 %v761, 32
        %v1694 = vpop.permute.xlu0 %1693
        %v1697 = vsel %vm873, %v1645, 0
        %1699 = vmatprep.subr.bf16.mxu0 0
        %1700 = vmatpush1.bf16.msra.mxu0 0
        %1701 = vmatprep.subr.bf16.mxu0 0
        %1702 = vmatpush1.bf16.msra.mxu0 0
        %1703 = vmatprep.subr.bf16.mxu0 0
        %1704 = vmatpush1.bf16.msra.mxu0 0
        %1705 = vmatprep.subr.bf16.mxu0 0
        %1706 = vmatpush1.bf16.msra.mxu0 0
        %1707 = vmatprep.subr.bf16.mxu0 0
        %1708 = vmatpush1.bf16.msra.mxu0 0
        %1709 = vmatprep.subr.bf16.mxu0 0
        %1710 = vmatpush1.bf16.msra.mxu0 0
        %1711 = vmatprep.subr.bf16.mxu0 0
        %1712 = vmatpush1.bf16.msra.mxu0 0
        %1713 = vmatprep.subr.bf16.mxu0 0
        %1714 = vmatpush1.bf16.msra.mxu0 %v1694
        %1715 = vmatprep.subr.bf16.mxu0 0
        %1716 = vmatpush2.bf16.msra.mxu0 0
        %1717 = vmatprep.subr.bf16.mxu0 0
        %1718 = vmatpush2.bf16.msra.mxu0 0
        %1719 = vmatprep.subr.bf16.mxu0 0
        %1720 = vmatpush2.bf16.msra.mxu0 0
        %1721 = vmatprep.subr.bf16.mxu0 0
        %1722 = vmatpush2.bf16.msra.mxu0 0
        %1723 = vmatprep.subr.bf16.mxu0 0
        %1724 = vmatpush2.bf16.msra.mxu0 0
        %1725 = vmatprep.subr.bf16.mxu0 0
        %1726 = vmatpush2.bf16.msra.mxu0 0
        %1727 = vmatprep.subr.bf16.mxu0 0
        %1728 = vmatpush2.bf16.msra.mxu0 0
        %1729 = vmatprep.subr.bf16.mxu0 0
        %1730 = vmatpush2.bf16.msra.mxu0 0
        %1731 = vmatprep.mubr.bf16.mxu0 0
        %1732 = vmatmul.mubr.bf16.gmra.mxu0 %v1697
        %v1733 = vpop.f32.mrf.mxu0
        %v1734 = vadd.f32 0.0, %v1733
        %v1735 = vpop.f32.mrf.mxu0
        %v1736 = vpop.f32.mrf.mxu0
        %v1737 = vadd.f32 0.0, %v1736
        %v1738 = vpop.f32.mrf.mxu0
        %1739 = vdwg.mxu0
        %1744 = vrot.lane.b32.xlu0 %v1202, 32
        %v1745 = vpop.permute.xlu0 %1744
        %1746 = vrot.lane.b32.xlu0 %v1205, 32
        %v1747 = vpop.permute.xlu0 %1746
        %1748 = vrot.lane.b32.xlu0 %v1250, 32
        %v1749 = vpop.permute.xlu0 %1748
        %1750 = vrot.lane.b32.xlu0 %v1253, 32
        %v1751 = vpop.permute.xlu0 %1750
        %1760 = vrot.lane.b32.xlu0 %v1445, 64
        %v1761 = vpop.permute.xlu0 %1760
        %1762 = vrot.lane.b32.xlu0 %v1448, 64
        %v1763 = vpop.permute.xlu0 %1762
        %1764 = vrot.lane.b32.xlu0 %v1492, 64
        %v1765 = vpop.permute.xlu0 %1764
        %1766 = vrot.lane.b32.xlu0 %v1495, 64
        %v1767 = vpop.permute.xlu0 %1766
        %1776 = vrot.lane.b32.xlu0 %v1687, 96
        %v1777 = vpop.permute.xlu0 %1776
        %1778 = vrot.lane.b32.xlu0 %v1690, 96
        %v1779 = vpop.permute.xlu0 %1778
        %1780 = vrot.lane.b32.xlu0 %v1734, 96
        %v1781 = vpop.permute.xlu0 %1780
        %1782 = vrot.lane.b32.xlu0 %v1737, 96
        %v1783 = vpop.permute.xlu0 %1782
        %v1788 = vsel %vm778, %v958, %v1745
        %v1789 = vsel %vm778, %v961, %v1747
        %v1790 = vsel %vm778, %v1002, %v1749
        %v1791 = vsel %vm778, %v1005, %v1751
        %vm1792 = vcmask 523264
        %v1793 = vsel %vm1792, %v1788, %v1761
        %v1794 = vsel %vm1792, %v1789, %v1763
        %v1795 = vsel %vm1792, %v1790, %v1765
        %v1796 = vsel %vm1792, %v1791, %v1767
        %vm1797 = vcmask 785408
        %v1798 = vsel %vm1797, %v1793, %v1777
        %v1799 = vsel %vm1797, %v1794, %v1779
        %v1800 = vsel %vm1797, %v1795, %v1781
        %v1801 = vsel %vm1797, %v1796, %v1783
        %v1802 = vpack.c.bf16 %v1799, %v1798
        %v1803 = vpack.c.bf16 %v1801, %v1800
        %v1820 = vunpack.c.l.b16 %v762
        %v1821 = vunpack.c.l.b16 %v763
        %v1822 = vunpack.c.l.b16 %v764
        %v1823 = vunpack.c.l.b16 %v765
        %v1824 = vunpack.c.l.b16 %v766
        %v1825 = vunpack.c.l.b16 %v767
        %v1826 = vunpack.c.l.b16 %v768
        %v1827 = vunpack.c.l.b16 %v769
        %v1828 = vunpack.c.l.b16 %v770
        %v1829 = vunpack.c.l.b16 %v771
        %v1830 = vunpack.c.l.b16 %v772
        %v1831 = vunpack.c.l.b16 %v773
        %v1832 = vunpack.c.l.b16 %v774
        %v1833 = vunpack.c.l.b16 %v775
        %v1834 = vunpack.c.l.b16 %v776
        %v1835 = vunpack.c.l.b16 %v777
        %v1836 = vpack.c.b16 %v1821, %v1820
        %v1837 = vpack.c.b16 %v1823, %v1822
        %v1838 = vpack.c.b16 %v1825, %v1824
        %v1839 = vpack.c.b16 %v1827, %v1826
        %v1840 = vpack.c.b16 %v1829, %v1828
        %v1841 = vpack.c.b16 %v1831, %v1830
        %v1842 = vpack.c.b16 %v1833, %v1832
        %v1843 = vpack.c.b16 %v1835, %v1834
        %1852 = vmatprep.subr.bf16.mxu0 0
        %1853 = vmatpush1.bf16.msra.mxu0 %v1843
        %1854 = vmatprep.subr.bf16.mxu0 0
        %1855 = vmatpush1.bf16.msra.mxu0 %v1842
        %1856 = vmatprep.subr.bf16.mxu0 0
        %1857 = vmatpush1.bf16.msra.mxu0 %v1841
        %1858 = vmatprep.subr.bf16.mxu0 0
        %1859 = vmatpush1.bf16.msra.mxu0 %v1840
        %1860 = vmatprep.subr.bf16.mxu0 0
        %1861 = vmatpush1.bf16.msra.mxu0 %v1839
        %1862 = vmatprep.subr.bf16.mxu0 0
        %1863 = vmatpush1.bf16.msra.mxu0 %v1838
        %1864 = vmatprep.subr.bf16.mxu0 0
        %1865 = vmatpush1.bf16.msra.mxu0 %v1837
        %1866 = vmatprep.subr.bf16.mxu0 0
        %1867 = vmatpush1.bf16.msra.mxu0 %v1836
        %1868 = vmatprep.subr.bf16.mxu0 0
        %1869 = vmatpush2.bf16.msra.mxu0 0
        %1870 = vmatprep.subr.bf16.mxu0 0
        %1871 = vmatpush2.bf16.msra.mxu0 0
        %1872 = vmatprep.subr.bf16.mxu0 0
        %1873 = vmatpush2.bf16.msra.mxu0 0
        %1874 = vmatprep.subr.bf16.mxu0 0
        %1875 = vmatpush2.bf16.msra.mxu0 0
        %1876 = vmatprep.subr.bf16.mxu0 0
        %1877 = vmatpush2.bf16.msra.mxu0 0
        %1878 = vmatprep.subr.bf16.mxu0 0
        %1879 = vmatpush2.bf16.msra.mxu0 0
        %1880 = vmatprep.subr.bf16.mxu0 0
        %1881 = vmatpush2.bf16.msra.mxu0 0
        %1882 = vmatprep.subr.bf16.mxu0 0
        %1883 = vmatpush2.bf16.msra.mxu0 0
        %1884 = vmatprep.mubr.bf16.mxu0 0
        %1885 = vmatmul.mubr.bf16.gmra.mxu0 %v1802
        %v1886 = vpop.f32.mrf.mxu0
        %v1887 = vadd.f32 0.0, %v1886
        %v1888 = vpop.f32.mrf.mxu0
        %v1889 = vpop.f32.mrf.mxu0
        %v1890 = vadd.f32 0.0, %v1889
        %v1891 = vpop.f32.mrf.mxu0
        %1892 = vmatprep.mubr.bf16.mxu0 0
        %1893 = vmatmul.mubr.bf16.gmra.mxu0 %v1803
        %v1894 = vpop.f32.mrf.mxu0
        %v1895 = vadd.f32 0.0, %v1894
        %v1896 = vpop.f32.mrf.mxu0
        %v1897 = vpop.f32.mrf.mxu0
        %v1898 = vadd.f32 0.0, %v1897
        %v1899 = vpop.f32.mrf.mxu0
        %1900 = vdwg.mxu0
        %v1901 = vadd.f32 %v440, %v1887
        %v1902 = vadd.f32 %v441, %v1890
        %v1903 = vadd.f32 %v442, %v1895
        %v1904 = vadd.f32 %v443, %v1898
        %v1905 = vld [vmem:[%s416] sm:$0x1]
        %v1906 = vmul.f32 %v1901, %v1901
        %v1907 = vmul.f32 %v1902, %v1902
        %v1908 = vmul.f32 %v1903, %v1903
        %v1909 = vmul.f32 %v1904, %v1904
        %1910 = vadd.xlane.f32.xlu0 %v1906
        %v1911 = vpop.xlane.xlu0 %1910
        %1912 = vadd.xlane.f32.xlu0 %v1907
        %v1913 = vpop.xlane.xlu0 %1912
        %1914 = vadd.xlane.f32.xlu0 %v1908
        %v1915 = vpop.xlane.xlu0 %1914
        %1916 = vadd.xlane.f32.xlu0 %v1909
        %v1917 = vpop.xlane.xlu0 %1916
        %v1918 = vmul.f32 %v1911, %v465
        %v1919 = vmul.f32 %v1913, %v465
        %v1920 = vmul.f32 %v1915, %v465
        %v1921 = vmul.f32 %v1917, %v465
        %v1922 = vadd.f32 %v1918, 1e-06
        %v1923 = vadd.f32 %v1919, 1e-06
        %v1924 = vadd.f32 %v1920, 1e-06
        %v1925 = vadd.f32 %v1921, 1e-06
        %v1926 = vrsqrt.pop %v1922
        %v1927 = vrsqrt.pop %v1923
        %v1928 = vrsqrt.pop %v1924
        %v1929 = vrsqrt.pop %v1925
        %v1930 = vmul.f32 %v1901, %v1926
        %v1931 = vmul.f32 %v1902, %v1927
        %v1932 = vmul.f32 %v1903, %v1928
        %v1933 = vmul.f32 %v1904, %v1929
        %v1935 = vlaneseq
        %v1936 = vshrl.u32 %v1935, 7
        %v1937 = vsub.s32 0, %v1936
        %v1938 = vrot.slane %v1905, %v1937
        %v1940 = vmul.f32 %v1930, %v1938
        %v1941 = vmul.f32 %v1931, %v1938
        %v1942 = vmul.f32 %v1932, %v1938
        %v1943 = vmul.f32 %v1933, %v1938
        %v1944 = vpack.c.bf16 %v1941, %v1940
        %v1945 = vpack.c.bf16 %v1943, %v1942
        %v1946 = vld [vmem:[%s421] sm:$0xff]
        %v1947 = vld [vmem:[%s421 + $0x8] sm:$0xff]
        %v1948 = vld [vmem:[%s421 + $0x10] sm:$0xff]
        %v1949 = vld [vmem:[%s421 + $0x18] sm:$0xff]
        %v1950 = vld [vmem:[%s421 + $0x20] sm:$0xff]
        %v1951 = vld [vmem:[%s421 + $0x28] sm:$0xff]
        %v1952 = vld [vmem:[%s421 + $0x30] sm:$0xff]
        %v1953 = vld [vmem:[%s421 + $0x38] sm:$0xff]
        %v1954 = vld [vmem:[%s421 + $0x40] sm:$0xff]
        %v1955 = vld [vmem:[%s421 + $0x48] sm:$0xff]
        %v1956 = vld [vmem:[%s421 + $0x50] sm:$0xff]
        %v1957 = vld [vmem:[%s421 + $0x58] sm:$0xff]
        %v1958 = vld [vmem:[%s421 + $0x60] sm:$0xff]
        %v1959 = vld [vmem:[%s421 + $0x68] sm:$0xff]
        %v1960 = vld [vmem:[%s421 + $0x70] sm:$0xff]
        %v1961 = vld [vmem:[%s421 + $0x78] sm:$0xff]
        %v1962 = vld [vmem:[%s421 + $0x80] sm:$0xff]
        %v1963 = vld [vmem:[%s421 + $0x88] sm:$0xff]
        %v1964 = vld [vmem:[%s421 + $0x90] sm:$0xff]
        %v1965 = vld [vmem:[%s421 + $0x98] sm:$0xff]
        %v1966 = vld [vmem:[%s421 + $0xa0] sm:$0xff]
        %v1967 = vld [vmem:[%s421 + $0xa8] sm:$0xff]
        %v1968 = vld [vmem:[%s421 + $0xb0] sm:$0xff]
        %v1969 = vld [vmem:[%s421 + $0xb8] sm:$0xff]
        %v1970 = vld [vmem:[%s421 + $0xc0] sm:$0xff]
        %v1971 = vld [vmem:[%s421 + $0xc8] sm:$0xff]
        %v1972 = vld [vmem:[%s421 + $0xd0] sm:$0xff]
        %v1973 = vld [vmem:[%s421 + $0xd8] sm:$0xff]
        %v1974 = vld [vmem:[%s421 + $0xe0] sm:$0xff]
        %v1975 = vld [vmem:[%s421 + $0xe8] sm:$0xff]
        %v1976 = vld [vmem:[%s421 + $0xf0] sm:$0xff]
        %v1977 = vld [vmem:[%s421 + $0xf8] sm:$0xff]
        %v2010 = vunpack.c.l.b16 %v1946
        %v2011 = vunpack.c.h.b16 %v1946
        %v2012 = vunpack.c.l.b16 %v1947
        %v2013 = vunpack.c.h.b16 %v1947
        %v2014 = vunpack.c.l.b16 %v1948
        %v2015 = vunpack.c.h.b16 %v1948
        %v2016 = vunpack.c.l.b16 %v1949
        %v2017 = vunpack.c.h.b16 %v1949
        %v2018 = vunpack.c.l.b16 %v1950
        %v2019 = vunpack.c.h.b16 %v1950
        %v2020 = vunpack.c.l.b16 %v1951
        %v2021 = vunpack.c.h.b16 %v1951
        %v2022 = vunpack.c.l.b16 %v1952
        %v2023 = vunpack.c.h.b16 %v1952
        %v2024 = vunpack.c.l.b16 %v1953
        %v2025 = vunpack.c.h.b16 %v1953
        %v2026 = vunpack.c.l.b16 %v1954
        %v2027 = vunpack.c.h.b16 %v1954
        %v2028 = vunpack.c.l.b16 %v1955
        %v2029 = vunpack.c.h.b16 %v1955
        %v2030 = vunpack.c.l.b16 %v1956
        %v2031 = vunpack.c.h.b16 %v1956
        %v2032 = vunpack.c.l.b16 %v1957
        %v2033 = vunpack.c.h.b16 %v1957
        %v2034 = vunpack.c.l.b16 %v1958
        %v2035 = vunpack.c.h.b16 %v1958
        %v2036 = vunpack.c.l.b16 %v1959
        %v2037 = vunpack.c.h.b16 %v1959
        %v2038 = vunpack.c.l.b16 %v1960
        %v2039 = vunpack.c.h.b16 %v1960
        %v2040 = vunpack.c.l.b16 %v1961
        %v2041 = vunpack.c.h.b16 %v1961
        %v2042 = vunpack.c.l.b16 %v1962
        %v2043 = vunpack.c.h.b16 %v1962
        %v2044 = vunpack.c.l.b16 %v1963
        %v2045 = vunpack.c.h.b16 %v1963
        %v2046 = vunpack.c.l.b16 %v1964
        %v2047 = vunpack.c.h.b16 %v1964
        %v2048 = vunpack.c.l.b16 %v1965
        %v2049 = vunpack.c.h.b16 %v1965
        %v2050 = vunpack.c.l.b16 %v1966
        %v2051 = vunpack.c.h.b16 %v1966
        %v2052 = vunpack.c.l.b16 %v1967
        %v2053 = vunpack.c.h.b16 %v1967
        %v2054 = vunpack.c.l.b16 %v1968
        %v2055 = vunpack.c.h.b16 %v1968
        %v2056 = vunpack.c.l.b16 %v1969
        %v2057 = vunpack.c.h.b16 %v1969
        %v2058 = vunpack.c.l.b16 %v1970
        %v2059 = vunpack.c.h.b16 %v1970
        %v2060 = vunpack.c.l.b16 %v1971
        %v2061 = vunpack.c.h.b16 %v1971
        %v2062 = vunpack.c.l.b16 %v1972
        %v2063 = vunpack.c.h.b16 %v1972
        %v2064 = vunpack.c.l.b16 %v1973
        %v2065 = vunpack.c.h.b16 %v1973
        %v2066 = vunpack.c.l.b16 %v1974
        %v2067 = vunpack.c.h.b16 %v1974
        %v2068 = vunpack.c.l.b16 %v1975
        %v2069 = vunpack.c.h.b16 %v1975
        %v2070 = vunpack.c.l.b16 %v1976
        %v2071 = vunpack.c.h.b16 %v1976
        %v2072 = vunpack.c.l.b16 %v1977
        %v2073 = vunpack.c.h.b16 %v1977
        %v2074 = vpack.c.b16 %v2014, %v2010
        %v2075 = vpack.c.b16 %v2015, %v2011
        %v2076 = vpack.c.b16 %v2016, %v2012
        %v2077 = vpack.c.b16 %v2017, %v2013
        %v2078 = vpack.c.b16 %v2022, %v2018
        %v2079 = vpack.c.b16 %v2023, %v2019
        %v2080 = vpack.c.b16 %v2024, %v2020
        %v2081 = vpack.c.b16 %v2025, %v2021
        %v2082 = vpack.c.b16 %v2030, %v2026
        %v2083 = vpack.c.b16 %v2031, %v2027
        %v2084 = vpack.c.b16 %v2032, %v2028
        %v2085 = vpack.c.b16 %v2033, %v2029
        %v2086 = vpack.c.b16 %v2038, %v2034
        %v2087 = vpack.c.b16 %v2039, %v2035
        %v2088 = vpack.c.b16 %v2040, %v2036
        %v2089 = vpack.c.b16 %v2041, %v2037
        %v2090 = vpack.c.b16 %v2046, %v2042
        %v2091 = vpack.c.b16 %v2047, %v2043
        %v2092 = vpack.c.b16 %v2048, %v2044
        %v2093 = vpack.c.b16 %v2049, %v2045
        %v2094 = vpack.c.b16 %v2054, %v2050
        %v2095 = vpack.c.b16 %v2055, %v2051
        %v2096 = vpack.c.b16 %v2056, %v2052
        %v2097 = vpack.c.b16 %v2057, %v2053
        %v2098 = vpack.c.b16 %v2062, %v2058
        %v2099 = vpack.c.b16 %v2063, %v2059
        %v2100 = vpack.c.b16 %v2064, %v2060
        %v2101 = vpack.c.b16 %v2065, %v2061
        %v2102 = vpack.c.b16 %v2070, %v2066
        %v2103 = vpack.c.b16 %v2071, %v2067
        %v2104 = vpack.c.b16 %v2072, %v2068
        %v2105 = vpack.c.b16 %v2073, %v2069
        %2138 = vmatprep.subr.bf16.mxu0 %v2103
        %2139 = vmatpush1.bf16.msra.mxu0 %v2102
        %2140 = vmatprep.subr.bf16.mxu0 %v2099
        %2141 = vmatpush1.bf16.msra.mxu0 %v2098
        %2142 = vmatprep.subr.bf16.mxu0 %v2095
        %2143 = vmatpush1.bf16.msra.mxu0 %v2094
        %2144 = vmatprep.subr.bf16.mxu0 %v2091
        %2145 = vmatpush1.bf16.msra.mxu0 %v2090
        %2146 = vmatprep.subr.bf16.mxu0 %v2087
        %2147 = vmatpush1.bf16.msra.mxu0 %v2086
        %2148 = vmatprep.subr.bf16.mxu0 %v2083
        %2149 = vmatpush1.bf16.msra.mxu0 %v2082
        %2150 = vmatprep.subr.bf16.mxu0 %v2079
        %2151 = vmatpush1.bf16.msra.mxu0 %v2078
        %2152 = vmatprep.subr.bf16.mxu0 %v2075
        %2153 = vmatpush1.bf16.msra.mxu0 %v2074
        %2154 = vmatprep.subr.bf16.mxu0 0
        %2155 = vmatpush2.bf16.msra.mxu0 0
        %2156 = vmatprep.subr.bf16.mxu0 0
        %2157 = vmatpush2.bf16.msra.mxu0 0
        %2158 = vmatprep.subr.bf16.mxu0 0
        %2159 = vmatpush2.bf16.msra.mxu0 0
        %2160 = vmatprep.subr.bf16.mxu0 0
        %2161 = vmatpush2.bf16.msra.mxu0 0
        %2162 = vmatprep.subr.bf16.mxu0 0
        %2163 = vmatpush2.bf16.msra.mxu0 0
        %2164 = vmatprep.subr.bf16.mxu0 0
        %2165 = vmatpush2.bf16.msra.mxu0 0
        %2166 = vmatprep.subr.bf16.mxu0 0
        %2167 = vmatpush2.bf16.msra.mxu0 0
        %2168 = vmatprep.subr.bf16.mxu0 0
        %2169 = vmatpush2.bf16.msra.mxu0 0
        %2170 = vmatprep.mubr.bf16.mxu0 0
        %2171 = vmatmul.mubr.bf16.gmra.mxu0 %v1944
        %v2172 = vpop.f32.mrf.mxu0
        %v2173 = vadd.f32 0.0, %v2172
        %v2174 = vpop.f32.mrf.mxu0
        %v2175 = vadd.f32 0.0, %v2174
        %v2176 = vpop.f32.mrf.mxu0
        %v2177 = vadd.f32 0.0, %v2176
        %v2178 = vpop.f32.mrf.mxu0
        %v2179 = vadd.f32 0.0, %v2178
        %2180 = vmatprep.mubr.bf16.mxu0 0
        %2181 = vmatmul.mubr.bf16.gmra.mxu0 %v1945
        %v2182 = vpop.f32.mrf.mxu0
        %v2183 = vadd.f32 0.0, %v2182
        %v2184 = vpop.f32.mrf.mxu0
        %v2185 = vadd.f32 0.0, %v2184
        %v2186 = vpop.f32.mrf.mxu0
        %v2187 = vadd.f32 0.0, %v2186
        %v2188 = vpop.f32.mrf.mxu0
        %v2189 = vadd.f32 0.0, %v2188
        %2190 = vdwg.mxu0
        %2191 = vmatprep.subr.bf16.mxu0 %v2105
        %2192 = vmatpush1.bf16.msra.mxu0 %v2104
        %2193 = vmatprep.subr.bf16.mxu0 %v2101
        %2194 = vmatpush1.bf16.msra.mxu0 %v2100
        %2195 = vmatprep.subr.bf16.mxu0 %v2097
        %2196 = vmatpush1.bf16.msra.mxu0 %v2096
        %2197 = vmatprep.subr.bf16.mxu0 %v2093
        %2198 = vmatpush1.bf16.msra.mxu0 %v2092
        %2199 = vmatprep.subr.bf16.mxu0 %v2089
        %2200 = vmatpush1.bf16.msra.mxu0 %v2088
        %2201 = vmatprep.subr.bf16.mxu0 %v2085
        %2202 = vmatpush1.bf16.msra.mxu0 %v2084
        %2203 = vmatprep.subr.bf16.mxu0 %v2081
        %2204 = vmatpush1.bf16.msra.mxu0 %v2080
        %2205 = vmatprep.subr.bf16.mxu0 %v2077
        %2206 = vmatpush1.bf16.msra.mxu0 %v2076
        %2207 = vmatprep.subr.bf16.mxu0 0
        %2208 = vmatpush2.bf16.msra.mxu0 0
        %2209 = vmatprep.subr.bf16.mxu0 0
        %2210 = vmatpush2.bf16.msra.mxu0 0
        %2211 = vmatprep.subr.bf16.mxu0 0
        %2212 = vmatpush2.bf16.msra.mxu0 0
        %2213 = vmatprep.subr.bf16.mxu0 0
        %2214 = vmatpush2.bf16.msra.mxu0 0
        %2215 = vmatprep.subr.bf16.mxu0 0
        %2216 = vmatpush2.bf16.msra.mxu0 0
        %2217 = vmatprep.subr.bf16.mxu0 0
        %2218 = vmatpush2.bf16.msra.mxu0 0
        %2219 = vmatprep.subr.bf16.mxu0 0
        %2220 = vmatpush2.bf16.msra.mxu0 0
        %2221 = vmatprep.subr.bf16.mxu0 0
        %2222 = vmatpush2.bf16.msra.mxu0 0
        %2223 = vmatprep.mubr.bf16.mxu0 0
        %2224 = vmatmul.mubr.bf16.gmra.mxu0 %v1944
        %v2225 = vpop.f32.mrf.mxu0
        %v2226 = vadd.f32 0.0, %v2225
        %v2227 = vpop.f32.mrf.mxu0
        %v2228 = vadd.f32 0.0, %v2227
        %v2229 = vpop.f32.mrf.mxu0
        %v2230 = vadd.f32 0.0, %v2229
        %v2231 = vpop.f32.mrf.mxu0
        %v2232 = vadd.f32 0.0, %v2231
        %2233 = vmatprep.mubr.bf16.mxu0 0
        %2234 = vmatmul.mubr.bf16.gmra.mxu0 %v1945
        %v2235 = vpop.f32.mrf.mxu0
        %v2236 = vadd.f32 0.0, %v2235
        %v2237 = vpop.f32.mrf.mxu0
        %v2238 = vadd.f32 0.0, %v2237
        %v2239 = vpop.f32.mrf.mxu0
        %v2240 = vadd.f32 0.0, %v2239
        %v2241 = vpop.f32.mrf.mxu0
        %v2242 = vadd.f32 0.0, %v2241
        %2243 = vdwg.mxu0
        %v2244 = vmul.f32 %v2173, %v2173
        %v2245 = vmul.f32 %v2175, %v2175
        %v2246 = vmul.f32 %v2177, %v2177
        %v2247 = vmul.f32 %v2179, %v2179
        %v2248 = vmul.f32 %v2183, %v2183
        %v2249 = vmul.f32 %v2185, %v2185
        %v2250 = vmul.f32 %v2187, %v2187
        %v2251 = vmul.f32 %v2189, %v2189
        %v2252 = vmul.f32 %v2173, %v2244
        %v2253 = vmul.f32 %v2175, %v2245
        %v2254 = vmul.f32 %v2177, %v2246
        %v2255 = vmul.f32 %v2179, %v2247
        %v2256 = vmul.f32 %v2183, %v2248
        %v2257 = vmul.f32 %v2185, %v2249
        %v2258 = vmul.f32 %v2187, %v2250
        %v2259 = vmul.f32 %v2189, %v2251
        %v2260 = vmul.f32 %v2252, 0.044715
        %v2261 = vmul.f32 %v2253, 0.044715
        %v2262 = vmul.f32 %v2254, 0.044715
        %v2263 = vmul.f32 %v2255, 0.044715
        %v2264 = vmul.f32 %v2256, 0.044715
        %v2265 = vmul.f32 %v2257, 0.044715
        %v2266 = vmul.f32 %v2258, 0.044715
        %v2267 = vmul.f32 %v2259, 0.044715
        %v2268 = vadd.f32 %v2173, %v2260
        %v2269 = vadd.f32 %v2175, %v2261
        %v2270 = vadd.f32 %v2177, %v2262
        %v2271 = vadd.f32 %v2179, %v2263
        %v2272 = vadd.f32 %v2183, %v2264
        %v2273 = vadd.f32 %v2185, %v2265
        %v2274 = vadd.f32 %v2187, %v2266
        %v2275 = vadd.f32 %v2189, %v2267
        %v2276 = vmul.f32 %v2268, 0.7978846
        %v2277 = vmul.f32 %v2269, 0.7978846
        %v2278 = vmul.f32 %v2270, 0.7978846
        %v2279 = vmul.f32 %v2271, 0.7978846
        %v2280 = vmul.f32 %v2272, 0.7978846
        %v2281 = vmul.f32 %v2273, 0.7978846
        %v2282 = vmul.f32 %v2274, 0.7978846
        %v2283 = vmul.f32 %v2275, 0.7978846
        %v2284 = vtanh.pop %v2276
        %v2285 = vtanh.pop %v2277
        %v2286 = vtanh.pop %v2278
        %v2287 = vtanh.pop %v2279
        %v2288 = vtanh.pop %v2280
        %v2289 = vtanh.pop %v2281
        %v2290 = vtanh.pop %v2282
        %v2291 = vtanh.pop %v2283
        %v2292 = vadd.f32 %v2284, 1.0
        %v2293 = vadd.f32 %v2285, 1.0
        %v2294 = vadd.f32 %v2286, 1.0
        %v2295 = vadd.f32 %v2287, 1.0
        %v2296 = vadd.f32 %v2288, 1.0
        %v2297 = vadd.f32 %v2289, 1.0
        %v2298 = vadd.f32 %v2290, 1.0
        %v2299 = vadd.f32 %v2291, 1.0
        %v2300 = vmul.f32 %v2292, 0.5
        %v2301 = vmul.f32 %v2293, 0.5
        %v2302 = vmul.f32 %v2294, 0.5
        %v2303 = vmul.f32 %v2295, 0.5
        %v2304 = vmul.f32 %v2296, 0.5
        %v2305 = vmul.f32 %v2297, 0.5
        %v2306 = vmul.f32 %v2298, 0.5
        %v2307 = vmul.f32 %v2299, 0.5
        %v2308 = vmul.f32 %v2173, %v2300
        %v2309 = vmul.f32 %v2175, %v2301
        %v2310 = vmul.f32 %v2177, %v2302
        %v2311 = vmul.f32 %v2179, %v2303
        %v2312 = vmul.f32 %v2183, %v2304
        %v2313 = vmul.f32 %v2185, %v2305
        %v2314 = vmul.f32 %v2187, %v2306
        %v2315 = vmul.f32 %v2189, %v2307
        %v2316 = vmul.f32 %v2308, %v2226
        %v2317 = vmul.f32 %v2309, %v2228
        %v2318 = vmul.f32 %v2310, %v2230
        %v2319 = vmul.f32 %v2311, %v2232
        %v2320 = vmul.f32 %v2312, %v2236
        %v2321 = vmul.f32 %v2313, %v2238
        %v2322 = vmul.f32 %v2314, %v2240
        %v2323 = vmul.f32 %v2315, %v2242
        %v2324 = vpack.c.bf16 %v2318, %v2316
        %v2325 = vpack.c.bf16 %v2319, %v2317
        %v2326 = vpack.c.bf16 %v2322, %v2320
        %v2327 = vpack.c.bf16 %v2323, %v2321
        %v2328 = vld [vmem:[%s426] sm:$0xf]
        %v2329 = vld [vmem:[%s426 + $0x4] sm:$0xf]
        %v2330 = vld [vmem:[%s426 + $0x8] sm:$0xf]
        %v2331 = vld [vmem:[%s426 + $0xc] sm:$0xf]
        %v2332 = vld [vmem:[%s426 + $0x10] sm:$0xf]
        %v2333 = vld [vmem:[%s426 + $0x14] sm:$0xf]
        %v2334 = vld [vmem:[%s426 + $0x18] sm:$0xf]
        %v2335 = vld [vmem:[%s426 + $0x1c] sm:$0xf]
        %v2336 = vld [vmem:[%s426 + $0x20] sm:$0xf]
        %v2337 = vld [vmem:[%s426 + $0x24] sm:$0xf]
        %v2338 = vld [vmem:[%s426 + $0x28] sm:$0xf]
        %v2339 = vld [vmem:[%s426 + $0x2c] sm:$0xf]
        %v2340 = vld [vmem:[%s426 + $0x30] sm:$0xf]
        %v2341 = vld [vmem:[%s426 + $0x34] sm:$0xf]
        %v2342 = vld [vmem:[%s426 + $0x38] sm:$0xf]
        %v2343 = vld [vmem:[%s426 + $0x3c] sm:$0xf]
        %v2344 = vld [vmem:[%s426 + $0x40] sm:$0xf]
        %v2345 = vld [vmem:[%s426 + $0x44] sm:$0xf]
        %v2346 = vld [vmem:[%s426 + $0x48] sm:$0xf]
        %v2347 = vld [vmem:[%s426 + $0x4c] sm:$0xf]
        %v2348 = vld [vmem:[%s426 + $0x50] sm:$0xf]
        %v2349 = vld [vmem:[%s426 + $0x54] sm:$0xf]
        %v2350 = vld [vmem:[%s426 + $0x58] sm:$0xf]
        %v2351 = vld [vmem:[%s426 + $0x5c] sm:$0xf]
        %v2352 = vld [vmem:[%s426 + $0x60] sm:$0xf]
        %v2353 = vld [vmem:[%s426 + $0x64] sm:$0xf]
        %v2354 = vld [vmem:[%s426 + $0x68] sm:$0xf]
        %v2355 = vld [vmem:[%s426 + $0x6c] sm:$0xf]
        %v2356 = vld [vmem:[%s426 + $0x70] sm:$0xf]
        %v2357 = vld [vmem:[%s426 + $0x74] sm:$0xf]
        %v2358 = vld [vmem:[%s426 + $0x78] sm:$0xf]
        %v2359 = vld [vmem:[%s426 + $0x7c] sm:$0xf]
        %v2392 = vunpack.c.l.b16 %v2328
        %v2393 = vunpack.c.l.b16 %v2329
        %v2394 = vunpack.c.l.b16 %v2330
        %v2395 = vunpack.c.l.b16 %v2331
        %v2396 = vunpack.c.l.b16 %v2332
        %v2397 = vunpack.c.l.b16 %v2333
        %v2398 = vunpack.c.l.b16 %v2334
        %v2399 = vunpack.c.l.b16 %v2335
        %v2400 = vunpack.c.l.b16 %v2336
        %v2401 = vunpack.c.l.b16 %v2337
        %v2402 = vunpack.c.l.b16 %v2338
        %v2403 = vunpack.c.l.b16 %v2339
        %v2404 = vunpack.c.l.b16 %v2340
        %v2405 = vunpack.c.l.b16 %v2341
        %v2406 = vunpack.c.l.b16 %v2342
        %v2407 = vunpack.c.l.b16 %v2343
        %v2408 = vunpack.c.l.b16 %v2344
        %v2409 = vunpack.c.l.b16 %v2345
        %v2410 = vunpack.c.l.b16 %v2346
        %v2411 = vunpack.c.l.b16 %v2347
        %v2412 = vunpack.c.l.b16 %v2348
        %v2413 = vunpack.c.l.b16 %v2349
        %v2414 = vunpack.c.l.b16 %v2350
        %v2415 = vunpack.c.l.b16 %v2351
        %v2416 = vunpack.c.l.b16 %v2352
        %v2417 = vunpack.c.l.b16 %v2353
        %v2418 = vunpack.c.l.b16 %v2354
        %v2419 = vunpack.c.l.b16 %v2355
        %v2420 = vunpack.c.l.b16 %v2356
        %v2421 = vunpack.c.l.b16 %v2357
        %v2422 = vunpack.c.l.b16 %v2358
        %v2423 = vunpack.c.l.b16 %v2359
        %v2424 = vpack.c.b16 %v2393, %v2392
        %v2425 = vpack.c.b16 %v2395, %v2394
        %v2426 = vpack.c.b16 %v2397, %v2396
        %v2427 = vpack.c.b16 %v2399, %v2398
        %v2428 = vpack.c.b16 %v2401, %v2400
        %v2429 = vpack.c.b16 %v2403, %v2402
        %v2430 = vpack.c.b16 %v2405, %v2404
        %v2431 = vpack.c.b16 %v2407, %v2406
        %v2432 = vpack.c.b16 %v2409, %v2408
        %v2433 = vpack.c.b16 %v2411, %v2410
        %v2434 = vpack.c.b16 %v2413, %v2412
        %v2435 = vpack.c.b16 %v2415, %v2414
        %v2436 = vpack.c.b16 %v2417, %v2416
        %v2437 = vpack.c.b16 %v2419, %v2418
        %v2438 = vpack.c.b16 %v2421, %v2420
        %v2439 = vpack.c.b16 %v2423, %v2422
        %2456 = vmatprep.subr.bf16.mxu0 0
        %2457 = vmatpush1.bf16.msra.mxu0 %v2431
        %2458 = vmatprep.subr.bf16.mxu0 0
        %2459 = vmatpush1.bf16.msra.mxu0 %v2430
        %2460 = vmatprep.subr.bf16.mxu0 0
        %2461 = vmatpush1.bf16.msra.mxu0 %v2429
        %2462 = vmatprep.subr.bf16.mxu0 0
        %2463 = vmatpush1.bf16.msra.mxu0 %v2428
        %2464 = vmatprep.subr.bf16.mxu0 0
        %2465 = vmatpush1.bf16.msra.mxu0 %v2427
        %2466 = vmatprep.subr.bf16.mxu0 0
        %2467 = vmatpush1.bf16.msra.mxu0 %v2426
        %2468 = vmatprep.subr.bf16.mxu0 0
        %2469 = vmatpush1.bf16.msra.mxu0 %v2425
        %2470 = vmatprep.subr.bf16.mxu0 0
        %2471 = vmatpush1.bf16.msra.mxu0 %v2424
        %2472 = vmatprep.subr.bf16.mxu0 0
        %2473 = vmatpush2.bf16.msra.mxu0 %v2439
        %2474 = vmatprep.subr.bf16.mxu0 0
        %2475 = vmatpush2.bf16.msra.mxu0 %v2438
        %2476 = vmatprep.subr.bf16.mxu0 0
        %2477 = vmatpush2.bf16.msra.mxu0 %v2437
        %2478 = vmatprep.subr.bf16.mxu0 0
        %2479 = vmatpush2.bf16.msra.mxu0 %v2436
        %2480 = vmatprep.subr.bf16.mxu0 0
        %2481 = vmatpush2.bf16.msra.mxu0 %v2435
        %2482 = vmatprep.subr.bf16.mxu0 0
        %2483 = vmatpush2.bf16.msra.mxu0 %v2434
        %2484 = vmatprep.subr.bf16.mxu0 0
        %2485 = vmatpush2.bf16.msra.mxu0 %v2433
        %2486 = vmatprep.subr.bf16.mxu0 0
        %2487 = vmatpush2.bf16.msra.mxu0 %v2432
        %2488 = vmatprep.mubr.bf16.mxu0 %v2325
        %2489 = vmatmul.mubr.bf16.gmra.mxu0 %v2324
        %v2490 = vpop.f32.mrf.mxu0
        %v2491 = vadd.f32 0.0, %v2490
        %v2492 = vpop.f32.mrf.mxu0
        %v2493 = vpop.f32.mrf.mxu0
        %v2494 = vadd.f32 0.0, %v2493
        %v2495 = vpop.f32.mrf.mxu0
        %2496 = vmatprep.mubr.bf16.mxu0 %v2327
        %2497 = vmatmul.mubr.bf16.gmra.mxu0 %v2326
        %v2498 = vpop.f32.mrf.mxu0
        %v2499 = vadd.f32 0.0, %v2498
        %v2500 = vpop.f32.mrf.mxu0
        %v2501 = vpop.f32.mrf.mxu0
        %v2502 = vadd.f32 0.0, %v2501
        %v2503 = vpop.f32.mrf.mxu0
        %2504 = vdwg.mxu0
        %v2505 = vadd.f32 %v1901, %v2491
        %v2506 = vadd.f32 %v1902, %v2494
        %v2507 = vadd.f32 %v1903, %v2499
        %v2508 = vadd.f32 %v1904, %v2502
        %2509 = vst [vmem:[#allocation2] sm:$0xff] %v2505
        %2510 = vst [vmem:[#allocation2 + $0x8] sm:$0xff] %v2506
        %2511 = vst [vmem:[#allocation2 + $0x10] sm:$0xff] %v2507
        %2512 = vst [vmem:[#allocation2 + $0x18] sm:$0xff] %v2508
        %p2513 = scmp.eq.s32.totalorder %s24, 1
        // Predicated region
        $region65: #{frozen_clip_t5_forward.3} parent=55 // pred_check
          %p2514 = pneg %p2513
        $region66: #{frozen_clip_t5_forward.3} parent=55 // pred_check_branch
          %2516 = sbr.rel (%p2514) target = $region68
        $region67: #{frozen_clip_t5_forward.3} parent=55 // pred_region
          %v2517 = vld [vmem:[%s8] sm:$0x1]
          %v2518 = vmul.f32 %v2505, %v2505
          %v2519 = vmul.f32 %v2506, %v2506
          %v2520 = vmul.f32 %v2507, %v2507
          %v2521 = vmul.f32 %v2508, %v2508
          %2522 = vadd.xlane.f32.xlu0 %v2518
          %v2523 = vpop.xlane.xlu0 %2522
          %2524 = vadd.xlane.f32.xlu0 %v2519
          %v2525 = vpop.xlane.xlu0 %2524
          %2526 = vadd.xlane.f32.xlu0 %v2520
          %v2527 = vpop.xlane.xlu0 %2526
          %2528 = vadd.xlane.f32.xlu0 %v2521
          %v2529 = vpop.xlane.xlu0 %2528
          %v2530 = vmul.f32 %v2523, %v465
          %v2531 = vmul.f32 %v2525, %v465
          %v2532 = vmul.f32 %v2527, %v465
          %v2533 = vmul.f32 %v2529, %v465
          %v2534 = vadd.f32 %v2530, 1e-06
          %v2535 = vadd.f32 %v2531, 1e-06
          %v2536 = vadd.f32 %v2532, 1e-06
          %v2537 = vadd.f32 %v2533, 1e-06
          %v2538 = vrsqrt.pop %v2534
          %v2539 = vrsqrt.pop %v2535
          %v2540 = vrsqrt.pop %v2536
          %v2541 = vrsqrt.pop %v2537
          %v2542 = vmul.f32 %v2505, %v2538
          %v2543 = vmul.f32 %v2506, %v2539
          %v2544 = vmul.f32 %v2507, %v2540
          %v2545 = vmul.f32 %v2508, %v2541
          %v2547 = vlaneseq
          %v2548 = vshrl.u32 %v2547, 7
          %v2549 = vsub.s32 0, %v2548
          %v2550 = vrot.slane %v2517, %v2549
          %v2552 = vmul.f32 %v2542, %v2550
          %v2553 = vmul.f32 %v2543, %v2550
          %v2554 = vmul.f32 %v2544, %v2550
          %v2555 = vmul.f32 %v2545, %v2550
          %2556 = vst [vmem:[#allocation6] sm:$0xff] %v2552
          %2557 = vst [vmem:[#allocation6 + $0x8] sm:$0xff] %v2553
          %2558 = vst [vmem:[#allocation6 + $0x10] sm:$0xff] %v2554
          %2559 = vst [vmem:[#allocation6 + $0x18] sm:$0xff] %v2555
        $region68: #{frozen_clip_t5_forward.3} parent=55 // pred_fallthru
          _
        // Predicated region
        $region69: #{frozen_clip_t5_forward.3} parent=55 // pred_check
          %p2560 = pneg %p256
        $region70: #{frozen_clip_t5_forward.3} parent=55 // pred_check_branch
          %2562 = sbr.rel (%p2560) target = $region72
        $region71: #{frozen_clip_t5_forward.3} parent=55 // pred_region
          %s2564 = ssub.s32 512, 512
          %2565 = vsyncadd [#allocation5], %s2564
          %s2566 = sshll.u32 [#allocation6], 4
          %s2567 = int_to_ptr.vmem [resolvable:$true] %s2566
          %2572 = dma.vmem_to_hbm [thread:$0]  %s2567, 512, %s9, [#allocation5], 128, 128, 8
        $region72: #{frozen_clip_t5_forward.3} parent=55 // pred_fallthru
          _
        // Predicated region
        $region73: #{frozen_clip_t5_forward.3} parent=55 // pred_check
          %p2573 = pneg %p256
        $region74: #{frozen_clip_t5_forward.3} parent=55 // pred_check_branch
          %2575 = sbr.rel (%p2573) target = $region76
        $region75: #{frozen_clip_t5_forward.3} parent=55 // pred_region
          %2576 = dma.done [#allocation5], 512
        $region76: #{frozen_clip_t5_forward.3} parent=55 // pred_fallthru
          _
      $region56: #{frozen_clip_t5_forward.3} parent=5 // pred_fallthru
        _
      %p2577 = scmp.le.s32.totalorder 2, %s19
      // Predicated region
      $region77: #{frozen_clip_t5_forward.3} parent=5 // pred_check
        %p2578 = pneg %p2577
      $region78: #{frozen_clip_t5_forward.3} parent=5 // pred_check_branch
        %2580 = sbr.rel (%p2578) target = $region80
      $region79: #{frozen_clip_t5_forward.3} parent=5 // pred_region
        %s2581 = ssub.s32 %s19, 2
      $region80: #{frozen_clip_t5_forward.3} parent=5 // pred_fallthru
        _
    $region6: #{frozen_clip_t5_forward.3} parent=1 // loop_footer
      %s23 = sadd.s32 1, %s19
    $region7: #{frozen_clip_t5_forward.3} parent=1 // loop_footer_branch
      %18 = sbr.rel target = $region3
    $region8: #{frozen_clip_t5_forward.3} parent=1 // loop_exit
      _
    %2582 = vsyncpa [#allocation4], 1
    %s2583 = scalar_lea.sflag [#allocation4], 1
    %2584 = vsyncpa %s2583, 1
    %2585 = vsyncpa [#allocation5], 1
    %s2586 = scalar_lea.sflag [#allocation5], 1
    %2587 = vsyncpa %s2586, 1

</llo_original>
